<compile_context>
chip_gen: v7x
topology: tpu7x:2x2x1
jax: 0.10.0
libtpu: 0.0.40
codegen_flags: <defaults>
</compile_context>

<pallas_src>
import jax
import jax.numpy as jnp
import numpy as np
from jax import lax
from jax.experimental import pallas as pl
from jax.experimental.pallas import tpu as pltpu

# Hyper-parameters (match TreeLSTM.__init__ at small sizes)
LEX = 20            # node_lexicon_size
E = 16              # node_embedding_dimension
H = 32              # lstm_dimension
L = 2               # lstm_layers
MAX_SEQ = 8         # max supported (num_children + 2) per node
MAX_CHILDREN = MAX_SEQ - 2
MAX_NODES = 64      # max tree nodes per kernel call
G = 4 * H           # gate width, PyTorch order (i, f, g, o)


# ----------------------------- Pallas kernel -------------------------------
def _tree_lstm_kernel(nnodes_ref, labels_ref, nchild_ref, child_ref,
                      emb_ref,
                      wih0f, whh0f, b0f, wih0b, whh0b, b0b,
                      wih1f, whh1f, b1f, wih1b, whh1b, b1b,
                      wfc_ref, bfc_ref,
                      out_ref,
                      seq_buf):
    f32 = jnp.float32
    # lane mask: tanh for the g-gate lanes [2H, 3H), sigmoid elsewhere.
    lane = lax.broadcasted_iota(jnp.int32, (1, G), 1)
    g_mask = (lane >= 2 * H) & (lane < 3 * H)

    def lstm_cell(xp, h, c, w_hh, valid):
        # xp: (1, 4H) hoisted input projection (x @ W_ih + b_ih + b_hh)
        gates = xp + jnp.dot(h, w_hh, preferred_element_type=f32)   # (1, 4H)
        sig = jax.nn.sigmoid(gates)          # full-vector EUP op
        tah = jnp.tanh(gates)                # full-vector EUP op
        act = jnp.where(g_mask, tah, sig)    # g-gate lanes use tanh
        i_g = act[:, 0 * H:1 * H]
        f_g = act[:, 1 * H:2 * H]
        g_g = act[:, 2 * H:3 * H]
        o_g = act[:, 3 * H:4 * H]
        c_new = f_g * c + i_g * g_g
        h_new = o_g * jnp.tanh(c_new)
        h = jnp.where(valid, h_new, h)       # freeze state on padded steps
        c = jnp.where(valid, c_new, c)
        return h, c

    def bidir_layer(x_seq, wihf, whhf, bf, wihb, whhb, bb, seq_len,
                    need_outputs):
        # x_seq: (MAX_SEQ, D_in) value.  Hoisted input projection: one MXU
        # pass per direction instead of one per timestep.
        xpf = jnp.dot(x_seq, wihf[...], preferred_element_type=f32) + bf[...]
        xpb = jnp.dot(x_seq, wihb[...], preferred_element_type=f32) + bb[...]
        w_hhf = whhf[...]
        w_hhb = whhb[...]
        zero = jnp.zeros((1, H), f32)

        # forward: static ascending t, updates masked for t >= seq_len, so the
        # final h is frozen at the t = seq_len - 1 value.
        h, c = zero, zero
        outs_f = []
        for t in range(MAX_SEQ):
            h, c = lstm_cell(xpf[t:t + 1, :], h, c, w_hhf, t < seq_len)
            outs_f.append(h)
        h_fwd = h

        # backward: static descending t; padded steps (t >= seq_len) come
        # first and are masked, so h/c are still zero at t = seq_len - 1.
        h, c = zero, zero
        outs_b = [None] * MAX_SEQ
        for t in range(MAX_SEQ - 1, -1, -1):
            h, c = lstm_cell(xpb[t:t + 1, :], h, c, w_hhb, t < seq_len)
            outs_b[t] = h
        h_bwd = h

        out = None
        if need_outputs:
            out = jnp.concatenate(
                [jnp.concatenate(outs_f, axis=0),
                 jnp.concatenate(outs_b, axis=0)], axis=1)   # (MAX_SEQ, 2H)
        return out, h_fwd, h_bwd

    def node_body(n, carry):
        label = labels_ref[n]
        n_children = nchild_ref[n]
        seq_len = n_children + 2

        # assemble this node's sequence [emb, child encodings..., emb]
        emb_row = emb_ref[pl.ds(label, 1), :]                  # (1, E)
        seq_buf[...] = jnp.zeros_like(seq_buf)
        seq_buf[0:1, :] = emb_row
        for k in range(MAX_CHILDREN):
            cidx = child_ref[n * MAX_CHILDREN + k]
            child_enc = out_ref[pl.ds(cidx, 1), :]             # (1, E)
            seq_buf[k + 1:k + 2, :] = jnp.where(k < n_children, child_enc, 0.0)
        seq_buf[pl.ds(n_children + 1, 1), :] = emb_row
        x0 = seq_buf[...]                                      # (MAX_SEQ, E)

        # 2-layer bidirectional LSTM; only layer 0 needs per-step outputs.
        l0_out, _, _ = bidir_layer(x0, wih0f, whh0f, b0f,
                                   wih0b, whh0b, b0b, seq_len, True)
        _, h_f, h_b = bidir_layer(l0_out, wih1f, whh1f, b1f,
                                  wih1b, whh1b, b1b, seq_len, False)

        enc = jnp.concatenate([h_f, h_b], axis=1)              # (1, 2H)
        out_row = jnp.tanh(
            jnp.dot(enc, wfc_ref[...], preferred_element_type=f32)
            + bfc_ref[...])                                    # (1, E)
        out_ref[pl.ds(n, 1), :] = out_row                      # node encoding
        return carry

    lax.fori_loop(0, nnodes_ref[0], node_body, 0)


def _make_tree_fn():
    n_smem = 4                      # num_nodes, labels, n_children, child_idx
    n_vmem = 1 + 12 + 2             # embedding + 12 LSTM params + (W_fc, b_fc)
    call = pl.pallas_call(
        _tree_lstm_kernel,
        out_shape=jax.ShapeDtypeStruct((MAX_NODES, E), jnp.float32),
        in_specs=([pl.BlockSpec(memory_space=pltpu.MemorySpace.SMEM)] * n_smem
                  + [pl.BlockSpec(memory_space=pltpu.MemorySpace.VMEM)] * n_vmem),
        out_specs=pl.BlockSpec(memory_space=pltpu.MemorySpace.VMEM),
        scratch_shapes=[pltpu.VMEM((MAX_SEQ, E), jnp.float32)],   # seq assembly
    )

    @jax.jit
    def tree_fn(nnodes, labels, nchild, child_idx, emb, flat_params):
        return call(nnodes, labels, nchild, child_idx, emb, *flat_params)

    return tree_fn


# ------------------------------ parameters ---------------------------------
def init_params(key):
    ks = iter(jax.random.split(key, 32))
    bound = 1.0 / np.sqrt(H)
    emb = jax.random.normal(next(ks), (LEX, E), jnp.float32) * 0.1
    emb = emb.at[0].set(0.0)                     # padding_idx=0
    lstm = []                                    # lstm[l][dir] = (w_ih, w_hh, b)
    for l in range(L):
        d_in = E if l == 0 else 2 * H
        layer = []
        for _d in range(2):
            w_ih = jax.random.uniform(next(ks), (d_in, G), jnp.float32, -bound, bound)
            w_hh = jax.random.uniform(next(ks), (H, G), jnp.float32, -bound, bound)
            b_ih = jax.random.uniform(next(ks), (G,), jnp.float32, -bound, bound)
            b_hh = jax.random.uniform(next(ks), (G,), jnp.float32, -bound, bound)
            layer.append((w_ih, w_hh, (b_ih + b_hh)[None, :]))
        lstm.append(layer)
    fcb = 1.0 / np.sqrt(2 * H)
    w_fc = jax.random.uniform(next(ks), (2 * H, E), jnp.float32, -fcb, fcb)
    b_fc = jax.random.uniform(next(ks), (1, E), jnp.float32, -fcb, fcb)
    return emb, lstm, (w_fc, b_fc)


def flatten_params(lstm, fc):
    flat = []
    for l in range(L):
        for d in range(2):
            flat.extend(lstm[l][d])
    flat.extend(fc)
    return tuple(flat)


# ------------------------------ tree glue -----------------------------------
class Tree:
    def __init__(self, label, children=()):
        self._label = int(label)
        self._children = list(children)

    def label(self):
        return self._label

    def __iter__(self):
        return iter(self._children)

    def __len__(self):
        return len(self._children)


def flatten_tree(tree):
    """Post-order flatten: children get lower indices than their parent."""
    labels, nchild, child_rows = [], [], []

    def rec(t):
        cids = [rec(c) for c in t]
        assert len(cids) <= MAX_CHILDREN
        idx = len(labels)
        labels.append(t.label())
        nchild.append(len(cids))
        child_rows.append(cids + [0] * (MAX_CHILDREN - len(cids)))
        return idx

    root = rec(tree)
    return labels, nchild, child_rows, root


def tree_forward_kernel(tree, emb, flat_params, tree_fn):
    labels, nchild, child_rows, root = flatten_tree(tree)
    n = len(labels)
    assert n <= MAX_NODES
    labels_a = np.zeros((MAX_NODES,), np.int32)
    labels_a[:n] = labels
    nchild_a = np.zeros((MAX_NODES,), np.int32)
    nchild_a[:n] = nchild
    child_a = np.zeros((MAX_NODES, MAX_CHILDREN), np.int32)
    child_a[:n] = np.asarray(child_rows, np.int32)
    enc_table = tree_fn(jnp.array([n], jnp.int32),
                        jnp.asarray(labels_a),
                        jnp.asarray(nchild_a),
                        jnp.asarray(child_a.reshape(-1)),
                        emb, flat_params)
    return enc_table[root]                       # (E,) — root is last node


# --------------------------- pure-JAX reference -----------------------------
def _cell_ref(x, h, c, w_ih, w_hh, b):
    gates = x @ w_ih + h @ w_hh + b[0]
    i_g = jax.nn.sigmoid(gates[0:H])
    f_g = jax.nn.sigmoid(gates[H:2 * H])
    g_g = jnp.tanh(gates[2 * H:3 * H])
    o_g = jax.nn.sigmoid(gates[3 * H:4 * H])
    c_new = f_g * c + i_g * g_g
    return o_g * jnp.tanh(c_new), c_new


def _node_ref(seq, lstm, fc):
    inp = seq
    h_fwd_final = h_bwd_final = None
    for l in range(L):
        (wihf, whhf, bf), (wihb, whhb, bb) = lstm[l]
        n = inp.shape[0]
        h = jnp.zeros((H,), jnp.float32); c = jnp.zeros((H,), jnp.float32)
        fwd = []
        for t in range(n):
            h, c = _cell_ref(inp[t], h, c, wihf, whhf, bf)
            fwd.append(h)
        h_fwd_final = h
        h = jnp.zeros((H,), jnp.float32); c = jnp.zeros((H,), jnp.float32)
        bwd = [None] * n
        for t in reversed(range(n)):
            h, c = _cell_ref(inp[t], h, c, wihb, whhb, bb)
            bwd[t] = h
        h_bwd_final = h
        inp = jnp.stack([jnp.concatenate([fwd[t], bwd[t]]) for t in range(n)])
    enc = jnp.concatenate([h_fwd_final, h_bwd_final])
    w_fc, b_fc = fc
    return jnp.tanh(enc @ w_fc + b_fc[0])


def tree_forward_ref(tree, emb, lstm, fc):
    node = emb[tree.label()]
    rows = [node]
    for child in tree:
        rows.append(tree_forward_ref(child, emb, lstm, fc))
    rows.append(node)
    return _node_ref(jnp.stack(rows), lstm, fc)


# --------------------------------- main --------------------------------------
if __name__ == "__main__":
    key = jax.random.PRNGKey(0)
    emb, lstm, fc = init_params(key)
    flat = flatten_params(lstm, fc)
    tree_fn = _make_tree_fn()

    # small deterministic example tree (labels in [1, LEX))
    tree = Tree(3, [Tree(5),
                    Tree(7, [Tree(2), Tree(4)]),
                    Tree(9, [Tree(1)])])

    out = tree_forward_kernel(tree, emb, flat, tree_fn)
    out = jax.block_until_ready(out)

    ref = tree_forward_ref(tree, emb, lstm, fc)
    np.testing.assert_allclose(np.asarray(out), np.asarray(ref),
                               rtol=2e-3, atol=2e-3)
    print("KERNEL_OK")
</pallas_src>

<mosaic_0001>
module attributes {stable_mosaic.version = 11 : i64} {
  func.func @_tree_lstm_kernel(%arg0: memref<1xi32, #tpu.memory_space<smem>>, %arg1: memref<64xi32, #tpu.memory_space<smem>>, %arg2: memref<64xi32, #tpu.memory_space<smem>>, %arg3: memref<384xi32, #tpu.memory_space<smem>>, %arg4: memref<20x16xf32, #tpu.memory_space<vmem>>, %arg5: memref<16x128xf32, #tpu.memory_space<vmem>>, %arg6: memref<32x128xf32, #tpu.memory_space<vmem>>, %arg7: memref<1x128xf32, #tpu.memory_space<vmem>>, %arg8: memref<16x128xf32, #tpu.memory_space<vmem>>, %arg9: memref<32x128xf32, #tpu.memory_space<vmem>>, %arg10: memref<1x128xf32, #tpu.memory_space<vmem>>, %arg11: memref<64x128xf32, #tpu.memory_space<vmem>>, %arg12: memref<32x128xf32, #tpu.memory_space<vmem>>, %arg13: memref<1x128xf32, #tpu.memory_space<vmem>>, %arg14: memref<64x128xf32, #tpu.memory_space<vmem>>, %arg15: memref<32x128xf32, #tpu.memory_space<vmem>>, %arg16: memref<1x128xf32, #tpu.memory_space<vmem>>, %arg17: memref<64x16xf32, #tpu.memory_space<vmem>>, %arg18: memref<1x16xf32, #tpu.memory_space<vmem>>, %arg19: memref<64x16xf32, #tpu.memory_space<vmem>>, %arg20: memref<8x16xf32, #tpu.memory_space<vmem>>) attributes {dimension_semantics = [], scalar_prefetch = 0 : i64, scratch_operands = 1 : i64, tpu.core_type = #tpu.core_type<tc>} {
    %0 = tpu.iota {dimensions = array<i32: 1>} : vector<1x128xi32>
    %c64_i32 = arith.constant 64 : i32
    %1 = vector.broadcast %c64_i32 : i32 to vector<1x128xi32>
    %2 = arith.cmpi sge, %0, %1 : vector<1x128xi32>
    %c96_i32 = arith.constant 96 : i32
    %3 = vector.broadcast %c96_i32 : i32 to vector<1x128xi32>
    %4 = arith.cmpi slt, %0, %3 : vector<1x128xi32>
    %5 = arith.andi %2, %4 : vector<1x128xi1>
    %c0 = arith.constant 0 : index
    %6 = memref.load %arg0[%c0] : memref<1xi32, #tpu.memory_space<smem>>
    %c0_i32 = arith.constant 0 : i32
    %c0_i32_0 = arith.constant 0 : i32
    %7 = arith.subi %6, %c0_i32_0 : i32
    %8 = arith.addi %c0_i32_0, %7 : i32
    %c1_i32 = arith.constant 1 : i32
    scf.for %arg21 = %c0_i32_0 to %8 step %c1_i32  : i32 {
      %9 = arith.index_cast %arg21 : i32 to index
      %10 = memref.load %arg1[%9] : memref<64xi32, #tpu.memory_space<smem>>
      %11 = arith.index_cast %arg21 : i32 to index
      %12 = memref.load %arg2[%11] : memref<64xi32, #tpu.memory_space<smem>>
      %c2_i32 = arith.constant 2 : i32
      %13 = arith.addi %12, %c2_i32 : i32
      %14 = arith.index_cast %10 : i32 to index
      %c0_1 = arith.constant 0 : index
      %15 = vector.load %arg4[%14, %c0_1] : memref<20x16xf32, #tpu.memory_space<vmem>>, vector<1x16xf32>
      %cst = arith.constant 0.000000e+00 : f32
      %16 = vector.broadcast %cst : f32 to vector<8x16xf32>
      %c0_2 = arith.constant 0 : index
      %c0_3 = arith.constant 0 : index
      %17 = vector.load %arg20[%c0_2, %c0_3] : memref<8x16xf32, #tpu.memory_space<vmem>>, vector<8x16xf32>
      tpu.vector_store %arg20[%c0_2, %c0_3], %16 {strides = array<i32>} : memref<8x16xf32, #tpu.memory_space<vmem>>, vector<8x16xf32>,
      %c0_4 = arith.constant 0 : index
      %c0_5 = arith.constant 0 : index
      %18 = vector.load %arg20[%c0_4, %c0_5] : memref<8x16xf32, #tpu.memory_space<vmem>>, vector<1x16xf32>
      tpu.vector_store %arg20[%c0_4, %c0_5], %15 {strides = array<i32>} : memref<8x16xf32, #tpu.memory_space<vmem>>, vector<1x16xf32>,
      %c6_i32 = arith.constant 6 : i32
      %19 = arith.muli %arg21, %c6_i32 : i32
      %c0_i32_6 = arith.constant 0 : i32
      %20 = arith.addi %19, %c0_i32_6 : i32
      %21 = arith.index_cast %20 : i32 to index
      %22 = memref.load %arg3[%21] : memref<384xi32, #tpu.memory_space<smem>>
      %23 = arith.index_cast %22 : i32 to index
      %c0_7 = arith.constant 0 : index
      %24 = vector.load %arg19[%23, %c0_7] : memref<64x16xf32, #tpu.memory_space<vmem>>, vector<1x16xf32>
      %c0_i32_8 = arith.constant 0 : i32
      %25 = arith.cmpi sgt, %12, %c0_i32_8 : i32
      %cst_9 = arith.constant 0.000000e+00 : f32
      %26 = vector.broadcast %cst_9 : f32 to vector<1x16xf32>
      %27 = arith.select %25, %24, %26 : vector<1x16xf32>
      %c1 = arith.constant 1 : index
      %c0_10 = arith.constant 0 : index
      %28 = vector.load %arg20[%c1, %c0_10] : memref<8x16xf32, #tpu.memory_space<vmem>>, vector<1x16xf32>
      tpu.vector_store %arg20[%c1, %c0_10], %27 {strides = array<i32>} : memref<8x16xf32, #tpu.memory_space<vmem>>, vector<1x16xf32>,
      %c6_i32_11 = arith.constant 6 : i32
      %29 = arith.muli %arg21, %c6_i32_11 : i32
      %c1_i32_12 = arith.constant 1 : i32
      %30 = arith.addi %29, %c1_i32_12 : i32
      %31 = arith.index_cast %30 : i32 to index
      %32 = memref.load %arg3[%31] : memref<384xi32, #tpu.memory_space<smem>>
      %33 = arith.index_cast %32 : i32 to index
      %c0_13 = arith.constant 0 : index
      %34 = vector.load %arg19[%33, %c0_13] : memref<64x16xf32, #tpu.memory_space<vmem>>, vector<1x16xf32>
      %c1_i32_14 = arith.constant 1 : i32
      %35 = arith.cmpi sgt, %12, %c1_i32_14 : i32
      %cst_15 = arith.constant 0.000000e+00 : f32
      %36 = vector.broadcast %cst_15 : f32 to vector<1x16xf32>
      %37 = arith.select %35, %34, %36 : vector<1x16xf32>
      %c2 = arith.constant 2 : index
      %c0_16 = arith.constant 0 : index
      %38 = vector.load %arg20[%c2, %c0_16] : memref<8x16xf32, #tpu.memory_space<vmem>>, vector<1x16xf32>
      tpu.vector_store %arg20[%c2, %c0_16], %37 {strides = array<i32>} : memref<8x16xf32, #tpu.memory_space<vmem>>, vector<1x16xf32>,
      %c6_i32_17 = arith.constant 6 : i32
      %39 = arith.muli %arg21, %c6_i32_17 : i32
      %c2_i32_18 = arith.constant 2 : i32
      %40 = arith.addi %39, %c2_i32_18 : i32
      %41 = arith.index_cast %40 : i32 to index
      %42 = memref.load %arg3[%41] : memref<384xi32, #tpu.memory_space<smem>>
      %43 = arith.index_cast %42 : i32 to index
      %c0_19 = arith.constant 0 : index
      %44 = vector.load %arg19[%43, %c0_19] : memref<64x16xf32, #tpu.memory_space<vmem>>, vector<1x16xf32>
      %c2_i32_20 = arith.constant 2 : i32
      %45 = arith.cmpi sgt, %12, %c2_i32_20 : i32
      %cst_21 = arith.constant 0.000000e+00 : f32
      %46 = vector.broadcast %cst_21 : f32 to vector<1x16xf32>
      %47 = arith.select %45, %44, %46 : vector<1x16xf32>
      %c3 = arith.constant 3 : index
      %c0_22 = arith.constant 0 : index
      %48 = vector.load %arg20[%c3, %c0_22] : memref<8x16xf32, #tpu.memory_space<vmem>>, vector<1x16xf32>
      tpu.vector_store %arg20[%c3, %c0_22], %47 {strides = array<i32>} : memref<8x16xf32, #tpu.memory_space<vmem>>, vector<1x16xf32>,
      %c6_i32_23 = arith.constant 6 : i32
      %49 = arith.muli %arg21, %c6_i32_23 : i32
      %c3_i32 = arith.constant 3 : i32
      %50 = arith.addi %49, %c3_i32 : i32
      %51 = arith.index_cast %50 : i32 to index
      %52 = memref.load %arg3[%51] : memref<384xi32, #tpu.memory_space<smem>>
      %53 = arith.index_cast %52 : i32 to index
      %c0_24 = arith.constant 0 : index
      %54 = vector.load %arg19[%53, %c0_24] : memref<64x16xf32, #tpu.memory_space<vmem>>, vector<1x16xf32>
      %c3_i32_25 = arith.constant 3 : i32
      %55 = arith.cmpi sgt, %12, %c3_i32_25 : i32
      %cst_26 = arith.constant 0.000000e+00 : f32
      %56 = vector.broadcast %cst_26 : f32 to vector<1x16xf32>
      %57 = arith.select %55, %54, %56 : vector<1x16xf32>
      %c4 = arith.constant 4 : index
      %c0_27 = arith.constant 0 : index
      %58 = vector.load %arg20[%c4, %c0_27] : memref<8x16xf32, #tpu.memory_space<vmem>>, vector<1x16xf32>
      tpu.vector_store %arg20[%c4, %c0_27], %57 {strides = array<i32>} : memref<8x16xf32, #tpu.memory_space<vmem>>, vector<1x16xf32>,
      %c6_i32_28 = arith.constant 6 : i32
      %59 = arith.muli %arg21, %c6_i32_28 : i32
      %c4_i32 = arith.constant 4 : i32
      %60 = arith.addi %59, %c4_i32 : i32
      %61 = arith.index_cast %60 : i32 to index
      %62 = memref.load %arg3[%61] : memref<384xi32, #tpu.memory_space<smem>>
      %63 = arith.index_cast %62 : i32 to index
      %c0_29 = arith.constant 0 : index
      %64 = vector.load %arg19[%63, %c0_29] : memref<64x16xf32, #tpu.memory_space<vmem>>, vector<1x16xf32>
      %c4_i32_30 = arith.constant 4 : i32
      %65 = arith.cmpi sgt, %12, %c4_i32_30 : i32
      %cst_31 = arith.constant 0.000000e+00 : f32
      %66 = vector.broadcast %cst_31 : f32 to vector<1x16xf32>
      %67 = arith.select %65, %64, %66 : vector<1x16xf32>
      %c5 = arith.constant 5 : index
      %c0_32 = arith.constant 0 : index
      %68 = vector.load %arg20[%c5, %c0_32] : memref<8x16xf32, #tpu.memory_space<vmem>>, vector<1x16xf32>
      tpu.vector_store %arg20[%c5, %c0_32], %67 {strides = array<i32>} : memref<8x16xf32, #tpu.memory_space<vmem>>, vector<1x16xf32>,
      %c6_i32_33 = arith.constant 6 : i32
      %69 = arith.muli %arg21, %c6_i32_33 : i32
      %c5_i32 = arith.constant 5 : i32
      %70 = arith.addi %69, %c5_i32 : i32
      %71 = arith.index_cast %70 : i32 to index
      %72 = memref.load %arg3[%71] : memref<384xi32, #tpu.memory_space<smem>>
      %73 = arith.index_cast %72 : i32 to index
      %c0_34 = arith.constant 0 : index
      %74 = vector.load %arg19[%73, %c0_34] : memref<64x16xf32, #tpu.memory_space<vmem>>, vector<1x16xf32>
      %c5_i32_35 = arith.constant 5 : i32
      %75 = arith.cmpi sgt, %12, %c5_i32_35 : i32
      %cst_36 = arith.constant 0.000000e+00 : f32
      %76 = vector.broadcast %cst_36 : f32 to vector<1x16xf32>
      %77 = arith.select %75, %74, %76 : vector<1x16xf32>
      %c6 = arith.constant 6 : index
      %c0_37 = arith.constant 0 : index
      %78 = vector.load %arg20[%c6, %c0_37] : memref<8x16xf32, #tpu.memory_space<vmem>>, vector<1x16xf32>
      tpu.vector_store %arg20[%c6, %c0_37], %77 {strides = array<i32>} : memref<8x16xf32, #tpu.memory_space<vmem>>, vector<1x16xf32>,
      %c1_i32_38 = arith.constant 1 : i32
      %79 = arith.addi %12, %c1_i32_38 : i32
      %80 = arith.index_cast %79 : i32 to index
      %c0_39 = arith.constant 0 : index
      %81 = vector.load %arg20[%80, %c0_39] : memref<8x16xf32, #tpu.memory_space<vmem>>, vector<1x16xf32>
      tpu.vector_store %arg20[%80, %c0_39], %15 {strides = array<i32>} : memref<8x16xf32, #tpu.memory_space<vmem>>, vector<1x16xf32>,
      %c0_40 = arith.constant 0 : index
      %c0_41 = arith.constant 0 : index
      %82 = vector.load %arg20[%c0_40, %c0_41] : memref<8x16xf32, #tpu.memory_space<vmem>>, vector<8x16xf32>
      %c0_42 = arith.constant 0 : index
      %c0_43 = arith.constant 0 : index
      %83 = vector.load %arg5[%c0_42, %c0_43] : memref<16x128xf32, #tpu.memory_space<vmem>>, vector<16x128xf32>
      %cst_44 = arith.constant dense<0.000000e+00> : vector<8x128xf32>
      %84 = tpu.matmul %82, %83, %cst_44 {dimension_numbers = #tpu.dot_dimension_numbers<[1], [0], [0], [1], [0, 0, 1, 1], [], []>} : vector<8x16xf32>, vector<16x128xf32>, vector<8x128xf32> -> vector<8x128xf32>
      %c0_45 = arith.constant 0 : index
      %c0_46 = arith.constant 0 : index
      %85 = vector.load %arg7[%c0_45, %c0_46] : memref<1x128xf32, #tpu.memory_space<vmem>>, vector<1x128xf32>
      %86 = vector.broadcast %85 : vector<1x128xf32> to vector<8x128xf32>
      %87 = arith.addf %84, %86 : vector<8x128xf32>
      %c0_47 = arith.constant 0 : index
      %c0_48 = arith.constant 0 : index
      %88 = vector.load %arg8[%c0_47, %c0_48] : memref<16x128xf32, #tpu.memory_space<vmem>>, vector<16x128xf32>
      %cst_49 = arith.constant dense<0.000000e+00> : vector<8x128xf32>
      %89 = tpu.matmul %82, %88, %cst_49 {dimension_numbers = #tpu.dot_dimension_numbers<[1], [0], [0], [1], [0, 0, 1, 1], [], []>} : vector<8x16xf32>, vector<16x128xf32>, vector<8x128xf32> -> vector<8x128xf32>
      %c0_50 = arith.constant 0 : index
      %c0_51 = arith.constant 0 : index
      %90 = vector.load %arg10[%c0_50, %c0_51] : memref<1x128xf32, #tpu.memory_space<vmem>>, vector<1x128xf32>
      %91 = vector.broadcast %90 : vector<1x128xf32> to vector<8x128xf32>
      %92 = arith.addf %89, %91 : vector<8x128xf32>
      %c0_52 = arith.constant 0 : index
      %c0_53 = arith.constant 0 : index
      %93 = vector.load %arg6[%c0_52, %c0_53] : memref<32x128xf32, #tpu.memory_space<vmem>>, vector<32x128xf32>
      %c0_54 = arith.constant 0 : index
      %c0_55 = arith.constant 0 : index
      %94 = vector.load %arg9[%c0_54, %c0_55] : memref<32x128xf32, #tpu.memory_space<vmem>>, vector<32x128xf32>
      %cst_56 = arith.constant 0.000000e+00 : f32
      %95 = vector.broadcast %cst_56 : f32 to vector<1x32xf32>
      %96 = vector.extract_strided_slice %87 {offsets = [0, 0], sizes = [1, 128], strides = [1, 1]} : vector<8x128xf32> to vector<1x128xf32>
      %c0_i32_57 = arith.constant 0 : i32
      %97 = arith.cmpi sgt, %13, %c0_i32_57 : i32
      %cst_58 = arith.constant dense<0.000000e+00> : vector<1x128xf32>
      %98 = tpu.matmul %95, %93, %cst_58 {dimension_numbers = #tpu.dot_dimension_numbers<[1], [0], [0], [1], [0, 0, 1, 1], [], []>} : vector<1x32xf32>, vector<32x128xf32>, vector<1x128xf32> -> vector<1x128xf32>
      %99 = arith.addf %96, %98 : vector<1x128xf32>
      %100 = arith.negf %99 : vector<1x128xf32>
      %101 = math.exp %100 : vector<1x128xf32>
      %cst_59 = arith.constant 1.000000e+00 : f32
      %102 = vector.broadcast %cst_59 : f32 to vector<1x128xf32>
      %103 = arith.addf %102, %101 : vector<1x128xf32>
      %104 = arith.divf %102, %103 : vector<1x128xf32>
      %105 = math.tanh %99 : vector<1x128xf32>
      %106 = arith.select %5, %105, %104 : vector<1x128xi1>, vector<1x128xf32>
      %107 = vector.extract_strided_slice %106 {offsets = [0, 0], sizes = [1, 32], strides = [1, 1]} : vector<1x128xf32> to vector<1x32xf32>
      %108 = vector.extract_strided_slice %106 {offsets = [0, 32], sizes = [1, 32], strides = [1, 1]} : vector<1x128xf32> to vector<1x32xf32>
      %109 = vector.extract_strided_slice %106 {offsets = [0, 64], sizes = [1, 32], strides = [1, 1]} : vector<1x128xf32> to vector<1x32xf32>
      %110 = vector.extract_strided_slice %106 {offsets = [0, 96], sizes = [1, 32], strides = [1, 1]} : vector<1x128xf32> to vector<1x32xf32>
      %111 = arith.mulf %108, %95 : vector<1x32xf32>
      %112 = arith.mulf %107, %109 : vector<1x32xf32>
      %113 = arith.addf %111, %112 : vector<1x32xf32>
      %114 = math.tanh %113 : vector<1x32xf32>
      %115 = arith.mulf %110, %114 : vector<1x32xf32>
      %116 = arith.select %97, %115, %95 : vector<1x32xf32>
      %117 = arith.select %97, %113, %95 : vector<1x32xf32>
      %118 = vector.extract_strided_slice %87 {offsets = [1, 0], sizes = [1, 128], strides = [1, 1]} : vector<8x128xf32> to vector<1x128xf32>
      %c1_i32_60 = arith.constant 1 : i32
      %119 = arith.cmpi sgt, %13, %c1_i32_60 : i32
      %cst_61 = arith.constant dense<0.000000e+00> : vector<1x128xf32>
      %120 = tpu.matmul %116, %93, %cst_61 {dimension_numbers = #tpu.dot_dimension_numbers<[1], [0], [0], [1], [0, 0, 1, 1], [], []>} : vector<1x32xf32>, vector<32x128xf32>, vector<1x128xf32> -> vector<1x128xf32>
      %121 = arith.addf %118, %120 : vector<1x128xf32>
      %122 = arith.negf %121 : vector<1x128xf32>
      %123 = math.exp %122 : vector<1x128xf32>
      %cst_62 = arith.constant 1.000000e+00 : f32
      %124 = vector.broadcast %cst_62 : f32 to vector<1x128xf32>
      %125 = arith.addf %124, %123 : vector<1x128xf32>
      %126 = arith.divf %124, %125 : vector<1x128xf32>
      %127 = math.tanh %121 : vector<1x128xf32>
      %128 = arith.select %5, %127, %126 : vector<1x128xi1>, vector<1x128xf32>
      %129 = vector.extract_strided_slice %128 {offsets = [0, 0], sizes = [1, 32], strides = [1, 1]} : vector<1x128xf32> to vector<1x32xf32>
      %130 = vector.extract_strided_slice %128 {offsets = [0, 32], sizes = [1, 32], strides = [1, 1]} : vector<1x128xf32> to vector<1x32xf32>
      %131 = vector.extract_strided_slice %128 {offsets = [0, 64], sizes = [1, 32], strides = [1, 1]} : vector<1x128xf32> to vector<1x32xf32>
      %132 = vector.extract_strided_slice %128 {offsets = [0, 96], sizes = [1, 32], strides = [1, 1]} : vector<1x128xf32> to vector<1x32xf32>
      %133 = arith.mulf %130, %117 : vector<1x32xf32>
      %134 = arith.mulf %129, %131 : vector<1x32xf32>
      %135 = arith.addf %133, %134 : vector<1x32xf32>
      %136 = math.tanh %135 : vector<1x32xf32>
      %137 = arith.mulf %132, %136 : vector<1x32xf32>
      %138 = arith.select %119, %137, %116 : vector<1x32xf32>
      %139 = arith.select %119, %135, %117 : vector<1x32xf32>
      %140 = vector.extract_strided_slice %87 {offsets = [2, 0], sizes = [1, 128], strides = [1, 1]} : vector<8x128xf32> to vector<1x128xf32>
      %c2_i32_63 = arith.constant 2 : i32
      %141 = arith.cmpi sgt, %13, %c2_i32_63 : i32
      %cst_64 = arith.constant dense<0.000000e+00> : vector<1x128xf32>
      %142 = tpu.matmul %138, %93, %cst_64 {dimension_numbers = #tpu.dot_dimension_numbers<[1], [0], [0], [1], [0, 0, 1, 1], [], []>} : vector<1x32xf32>, vector<32x128xf32>, vector<1x128xf32> -> vector<1x128xf32>
      %143 = arith.addf %140, %142 : vector<1x128xf32>
      %144 = arith.negf %143 : vector<1x128xf32>
      %145 = math.exp %144 : vector<1x128xf32>
      %cst_65 = arith.constant 1.000000e+00 : f32
      %146 = vector.broadcast %cst_65 : f32 to vector<1x128xf32>
      %147 = arith.addf %146, %145 : vector<1x128xf32>
      %148 = arith.divf %146, %147 : vector<1x128xf32>
      %149 = math.tanh %143 : vector<1x128xf32>
      %150 = arith.select %5, %149, %148 : vector<1x128xi1>, vector<1x128xf32>
      %151 = vector.extract_strided_slice %150 {offsets = [0, 0], sizes = [1, 32], strides = [1, 1]} : vector<1x128xf32> to vector<1x32xf32>
      %152 = vector.extract_strided_slice %150 {offsets = [0, 32], sizes = [1, 32], strides = [1, 1]} : vector<1x128xf32> to vector<1x32xf32>
      %153 = vector.extract_strided_slice %150 {offsets = [0, 64], sizes = [1, 32], strides = [1, 1]} : vector<1x128xf32> to vector<1x32xf32>
      %154 = vector.extract_strided_slice %150 {offsets = [0, 96], sizes = [1, 32], strides = [1, 1]} : vector<1x128xf32> to vector<1x32xf32>
      %155 = arith.mulf %152, %139 : vector<1x32xf32>
      %156 = arith.mulf %151, %153 : vector<1x32xf32>
      %157 = arith.addf %155, %156 : vector<1x32xf32>
      %158 = math.tanh %157 : vector<1x32xf32>
      %159 = arith.mulf %154, %158 : vector<1x32xf32>
      %160 = arith.select %141, %159, %138 : vector<1x32xf32>
      %161 = arith.select %141, %157, %139 : vector<1x32xf32>
      %162 = vector.extract_strided_slice %87 {offsets = [3, 0], sizes = [1, 128], strides = [1, 1]} : vector<8x128xf32> to vector<1x128xf32>
      %c3_i32_66 = arith.constant 3 : i32
      %163 = arith.cmpi sgt, %13, %c3_i32_66 : i32
      %cst_67 = arith.constant dense<0.000000e+00> : vector<1x128xf32>
      %164 = tpu.matmul %160, %93, %cst_67 {dimension_numbers = #tpu.dot_dimension_numbers<[1], [0], [0], [1], [0, 0, 1, 1], [], []>} : vector<1x32xf32>, vector<32x128xf32>, vector<1x128xf32> -> vector<1x128xf32>
      %165 = arith.addf %162, %164 : vector<1x128xf32>
      %166 = arith.negf %165 : vector<1x128xf32>
      %167 = math.exp %166 : vector<1x128xf32>
      %cst_68 = arith.constant 1.000000e+00 : f32
      %168 = vector.broadcast %cst_68 : f32 to vector<1x128xf32>
      %169 = arith.addf %168, %167 : vector<1x128xf32>
      %170 = arith.divf %168, %169 : vector<1x128xf32>
      %171 = math.tanh %165 : vector<1x128xf32>
      %172 = arith.select %5, %171, %170 : vector<1x128xi1>, vector<1x128xf32>
      %173 = vector.extract_strided_slice %172 {offsets = [0, 0], sizes = [1, 32], strides = [1, 1]} : vector<1x128xf32> to vector<1x32xf32>
      %174 = vector.extract_strided_slice %172 {offsets = [0, 32], sizes = [1, 32], strides = [1, 1]} : vector<1x128xf32> to vector<1x32xf32>
      %175 = vector.extract_strided_slice %172 {offsets = [0, 64], sizes = [1, 32], strides = [1, 1]} : vector<1x128xf32> to vector<1x32xf32>
      %176 = vector.extract_strided_slice %172 {offsets = [0, 96], sizes = [1, 32], strides = [1, 1]} : vector<1x128xf32> to vector<1x32xf32>
      %177 = arith.mulf %174, %161 : vector<1x32xf32>
      %178 = arith.mulf %173, %175 : vector<1x32xf32>
      %179 = arith.addf %177, %178 : vector<1x32xf32>
      %180 = math.tanh %179 : vector<1x32xf32>
      %181 = arith.mulf %176, %180 : vector<1x32xf32>
      %182 = arith.select %163, %181, %160 : vector<1x32xf32>
      %183 = arith.select %163, %179, %161 : vector<1x32xf32>
      %184 = vector.extract_strided_slice %87 {offsets = [4, 0], sizes = [1, 128], strides = [1, 1]} : vector<8x128xf32> to vector<1x128xf32>
      %c4_i32_69 = arith.constant 4 : i32
      %185 = arith.cmpi sgt, %13, %c4_i32_69 : i32
      %cst_70 = arith.constant dense<0.000000e+00> : vector<1x128xf32>
      %186 = tpu.matmul %182, %93, %cst_70 {dimension_numbers = #tpu.dot_dimension_numbers<[1], [0], [0], [1], [0, 0, 1, 1], [], []>} : vector<1x32xf32>, vector<32x128xf32>, vector<1x128xf32> -> vector<1x128xf32>
      %187 = arith.addf %184, %186 : vector<1x128xf32>
      %188 = arith.negf %187 : vector<1x128xf32>
      %189 = math.exp %188 : vector<1x128xf32>
      %cst_71 = arith.constant 1.000000e+00 : f32
      %190 = vector.broadcast %cst_71 : f32 to vector<1x128xf32>
      %191 = arith.addf %190, %189 : vector<1x128xf32>
      %192 = arith.divf %190, %191 : vector<1x128xf32>
      %193 = math.tanh %187 : vector<1x128xf32>
      %194 = arith.select %5, %193, %192 : vector<1x128xi1>, vector<1x128xf32>
      %195 = vector.extract_strided_slice %194 {offsets = [0, 0], sizes = [1, 32], strides = [1, 1]} : vector<1x128xf32> to vector<1x32xf32>
      %196 = vector.extract_strided_slice %194 {offsets = [0, 32], sizes = [1, 32], strides = [1, 1]} : vector<1x128xf32> to vector<1x32xf32>
      %197 = vector.extract_strided_slice %194 {offsets = [0, 64], sizes = [1, 32], strides = [1, 1]} : vector<1x128xf32> to vector<1x32xf32>
      %198 = vector.extract_strided_slice %194 {offsets = [0, 96], sizes = [1, 32], strides = [1, 1]} : vector<1x128xf32> to vector<1x32xf32>
      %199 = arith.mulf %196, %183 : vector<1x32xf32>
      %200 = arith.mulf %195, %197 : vector<1x32xf32>
      %201 = arith.addf %199, %200 : vector<1x32xf32>
      %202 = math.tanh %201 : vector<1x32xf32>
      %203 = arith.mulf %198, %202 : vector<1x32xf32>
      %204 = arith.select %185, %203, %182 : vector<1x32xf32>
      %205 = arith.select %185, %201, %183 : vector<1x32xf32>
      %206 = vector.extract_strided_slice %87 {offsets = [5, 0], sizes = [1, 128], strides = [1, 1]} : vector<8x128xf32> to vector<1x128xf32>
      %c5_i32_72 = arith.constant 5 : i32
      %207 = arith.cmpi sgt, %13, %c5_i32_72 : i32
      %cst_73 = arith.constant dense<0.000000e+00> : vector<1x128xf32>
      %208 = tpu.matmul %204, %93, %cst_73 {dimension_numbers = #tpu.dot_dimension_numbers<[1], [0], [0], [1], [0, 0, 1, 1], [], []>} : vector<1x32xf32>, vector<32x128xf32>, vector<1x128xf32> -> vector<1x128xf32>
      %209 = arith.addf %206, %208 : vector<1x128xf32>
      %210 = arith.negf %209 : vector<1x128xf32>
      %211 = math.exp %210 : vector<1x128xf32>
      %cst_74 = arith.constant 1.000000e+00 : f32
      %212 = vector.broadcast %cst_74 : f32 to vector<1x128xf32>
      %213 = arith.addf %212, %211 : vector<1x128xf32>
      %214 = arith.divf %212, %213 : vector<1x128xf32>
      %215 = math.tanh %209 : vector<1x128xf32>
      %216 = arith.select %5, %215, %214 : vector<1x128xi1>, vector<1x128xf32>
      %217 = vector.extract_strided_slice %216 {offsets = [0, 0], sizes = [1, 32], strides = [1, 1]} : vector<1x128xf32> to vector<1x32xf32>
      %218 = vector.extract_strided_slice %216 {offsets = [0, 32], sizes = [1, 32], strides = [1, 1]} : vector<1x128xf32> to vector<1x32xf32>
      %219 = vector.extract_strided_slice %216 {offsets = [0, 64], sizes = [1, 32], strides = [1, 1]} : vector<1x128xf32> to vector<1x32xf32>
      %220 = vector.extract_strided_slice %216 {offsets = [0, 96], sizes = [1, 32], strides = [1, 1]} : vector<1x128xf32> to vector<1x32xf32>
      %221 = arith.mulf %218, %205 : vector<1x32xf32>
      %222 = arith.mulf %217, %219 : vector<1x32xf32>
      %223 = arith.addf %221, %222 : vector<1x32xf32>
      %224 = math.tanh %223 : vector<1x32xf32>
      %225 = arith.mulf %220, %224 : vector<1x32xf32>
      %226 = arith.select %207, %225, %204 : vector<1x32xf32>
      %227 = arith.select %207, %223, %205 : vector<1x32xf32>
      %228 = vector.extract_strided_slice %87 {offsets = [6, 0], sizes = [1, 128], strides = [1, 1]} : vector<8x128xf32> to vector<1x128xf32>
      %c6_i32_75 = arith.constant 6 : i32
      %229 = arith.cmpi sgt, %13, %c6_i32_75 : i32
      %cst_76 = arith.constant dense<0.000000e+00> : vector<1x128xf32>
      %230 = tpu.matmul %226, %93, %cst_76 {dimension_numbers = #tpu.dot_dimension_numbers<[1], [0], [0], [1], [0, 0, 1, 1], [], []>} : vector<1x32xf32>, vector<32x128xf32>, vector<1x128xf32> -> vector<1x128xf32>
      %231 = arith.addf %228, %230 : vector<1x128xf32>
      %232 = arith.negf %231 : vector<1x128xf32>
      %233 = math.exp %232 : vector<1x128xf32>
      %cst_77 = arith.constant 1.000000e+00 : f32
      %234 = vector.broadcast %cst_77 : f32 to vector<1x128xf32>
      %235 = arith.addf %234, %233 : vector<1x128xf32>
      %236 = arith.divf %234, %235 : vector<1x128xf32>
      %237 = math.tanh %231 : vector<1x128xf32>
      %238 = arith.select %5, %237, %236 : vector<1x128xi1>, vector<1x128xf32>
      %239 = vector.extract_strided_slice %238 {offsets = [0, 0], sizes = [1, 32], strides = [1, 1]} : vector<1x128xf32> to vector<1x32xf32>
      %240 = vector.extract_strided_slice %238 {offsets = [0, 32], sizes = [1, 32], strides = [1, 1]} : vector<1x128xf32> to vector<1x32xf32>
      %241 = vector.extract_strided_slice %238 {offsets = [0, 64], sizes = [1, 32], strides = [1, 1]} : vector<1x128xf32> to vector<1x32xf32>
      %242 = vector.extract_strided_slice %238 {offsets = [0, 96], sizes = [1, 32], strides = [1, 1]} : vector<1x128xf32> to vector<1x32xf32>
      %243 = arith.mulf %240, %227 : vector<1x32xf32>
      %244 = arith.mulf %239, %241 : vector<1x32xf32>
      %245 = arith.addf %243, %244 : vector<1x32xf32>
      %246 = math.tanh %245 : vector<1x32xf32>
      %247 = arith.mulf %242, %246 : vector<1x32xf32>
      %248 = arith.select %229, %247, %226 : vector<1x32xf32>
      %249 = arith.select %229, %245, %227 : vector<1x32xf32>
      %250 = vector.extract_strided_slice %87 {offsets = [7, 0], sizes = [1, 128], strides = [1, 1]} : vector<8x128xf32> to vector<1x128xf32>
      %c7_i32 = arith.constant 7 : i32
      %251 = arith.cmpi sgt, %13, %c7_i32 : i32
      %cst_78 = arith.constant dense<0.000000e+00> : vector<1x128xf32>
      %252 = tpu.matmul %248, %93, %cst_78 {dimension_numbers = #tpu.dot_dimension_numbers<[1], [0], [0], [1], [0, 0, 1, 1], [], []>} : vector<1x32xf32>, vector<32x128xf32>, vector<1x128xf32> -> vector<1x128xf32>
      %253 = arith.addf %250, %252 : vector<1x128xf32>
      %254 = arith.negf %253 : vector<1x128xf32>
      %255 = math.exp %254 : vector<1x128xf32>
      %cst_79 = arith.constant 1.000000e+00 : f32
      %256 = vector.broadcast %cst_79 : f32 to vector<1x128xf32>
      %257 = arith.addf %256, %255 : vector<1x128xf32>
      %258 = arith.divf %256, %257 : vector<1x128xf32>
      %259 = math.tanh %253 : vector<1x128xf32>
      %260 = arith.select %5, %259, %258 : vector<1x128xi1>, vector<1x128xf32>
      %261 = vector.extract_strided_slice %260 {offsets = [0, 0], sizes = [1, 32], strides = [1, 1]} : vector<1x128xf32> to vector<1x32xf32>
      %262 = vector.extract_strided_slice %260 {offsets = [0, 32], sizes = [1, 32], strides = [1, 1]} : vector<1x128xf32> to vector<1x32xf32>
      %263 = vector.extract_strided_slice %260 {offsets = [0, 64], sizes = [1, 32], strides = [1, 1]} : vector<1x128xf32> to vector<1x32xf32>
      %264 = vector.extract_strided_slice %260 {offsets = [0, 96], sizes = [1, 32], strides = [1, 1]} : vector<1x128xf32> to vector<1x32xf32>
      %265 = arith.mulf %262, %249 : vector<1x32xf32>
      %266 = arith.mulf %261, %263 : vector<1x32xf32>
      %267 = arith.addf %265, %266 : vector<1x32xf32>
      %268 = math.tanh %267 : vector<1x32xf32>
      %269 = arith.mulf %264, %268 : vector<1x32xf32>
      %270 = arith.select %251, %269, %248 : vector<1x32xf32>
      %271 = arith.select %251, %267, %249 : vector<1x32xf32>
      %272 = vector.extract_strided_slice %92 {offsets = [7, 0], sizes = [1, 128], strides = [1, 1]} : vector<8x128xf32> to vector<1x128xf32>
      %c7_i32_80 = arith.constant 7 : i32
      %273 = arith.cmpi sgt, %13, %c7_i32_80 : i32
      %cst_81 = arith.constant dense<0.000000e+00> : vector<1x128xf32>
      %274 = tpu.matmul %95, %94, %cst_81 {dimension_numbers = #tpu.dot_dimension_numbers<[1], [0], [0], [1], [0, 0, 1, 1], [], []>} : vector<1x32xf32>, vector<32x128xf32>, vector<1x128xf32> -> vector<1x128xf32>
      %275 = arith.addf %272, %274 : vector<1x128xf32>
      %276 = arith.negf %275 : vector<1x128xf32>
      %277 = math.exp %276 : vector<1x128xf32>
      %cst_82 = arith.constant 1.000000e+00 : f32
      %278 = vector.broadcast %cst_82 : f32 to vector<1x128xf32>
      %279 = arith.addf %278, %277 : vector<1x128xf32>
      %280 = arith.divf %278, %279 : vector<1x128xf32>
      %281 = math.tanh %275 : vector<1x128xf32>
      %282 = arith.select %5, %281, %280 : vector<1x128xi1>, vector<1x128xf32>
      %283 = vector.extract_strided_slice %282 {offsets = [0, 0], sizes = [1, 32], strides = [1, 1]} : vector<1x128xf32> to vector<1x32xf32>
      %284 = vector.extract_strided_slice %282 {offsets = [0, 32], sizes = [1, 32], strides = [1, 1]} : vector<1x128xf32> to vector<1x32xf32>
      %285 = vector.extract_strided_slice %282 {offsets = [0, 64], sizes = [1, 32], strides = [1, 1]} : vector<1x128xf32> to vector<1x32xf32>
      %286 = vector.extract_strided_slice %282 {offsets = [0, 96], sizes = [1, 32], strides = [1, 1]} : vector<1x128xf32> to vector<1x32xf32>
      %287 = arith.mulf %284, %95 : vector<1x32xf32>
      %288 = arith.mulf %283, %285 : vector<1x32xf32>
      %289 = arith.addf %287, %288 : vector<1x32xf32>
      %290 = math.tanh %289 : vector<1x32xf32>
      %291 = arith.mulf %286, %290 : vector<1x32xf32>
      %292 = arith.select %273, %291, %95 : vector<1x32xf32>
      %293 = arith.select %273, %289, %95 : vector<1x32xf32>
      %294 = vector.extract_strided_slice %92 {offsets = [6, 0], sizes = [1, 128], strides = [1, 1]} : vector<8x128xf32> to vector<1x128xf32>
      %c6_i32_83 = arith.constant 6 : i32
      %295 = arith.cmpi sgt, %13, %c6_i32_83 : i32
      %cst_84 = arith.constant dense<0.000000e+00> : vector<1x128xf32>
      %296 = tpu.matmul %292, %94, %cst_84 {dimension_numbers = #tpu.dot_dimension_numbers<[1], [0], [0], [1], [0, 0, 1, 1], [], []>} : vector<1x32xf32>, vector<32x128xf32>, vector<1x128xf32> -> vector<1x128xf32>
      %297 = arith.addf %294, %296 : vector<1x128xf32>
      %298 = arith.negf %297 : vector<1x128xf32>
      %299 = math.exp %298 : vector<1x128xf32>
      %cst_85 = arith.constant 1.000000e+00 : f32
      %300 = vector.broadcast %cst_85 : f32 to vector<1x128xf32>
      %301 = arith.addf %300, %299 : vector<1x128xf32>
      %302 = arith.divf %300, %301 : vector<1x128xf32>
      %303 = math.tanh %297 : vector<1x128xf32>
      %304 = arith.select %5, %303, %302 : vector<1x128xi1>, vector<1x128xf32>
      %305 = vector.extract_strided_slice %304 {offsets = [0, 0], sizes = [1, 32], strides = [1, 1]} : vector<1x128xf32> to vector<1x32xf32>
      %306 = vector.extract_strided_slice %304 {offsets = [0, 32], sizes = [1, 32], strides = [1, 1]} : vector<1x128xf32> to vector<1x32xf32>
      %307 = vector.extract_strided_slice %304 {offsets = [0, 64], sizes = [1, 32], strides = [1, 1]} : vector<1x128xf32> to vector<1x32xf32>
      %308 = vector.extract_strided_slice %304 {offsets = [0, 96], sizes = [1, 32], strides = [1, 1]} : vector<1x128xf32> to vector<1x32xf32>
      %309 = arith.mulf %306, %293 : vector<1x32xf32>
      %310 = arith.mulf %305, %307 : vector<1x32xf32>
      %311 = arith.addf %309, %310 : vector<1x32xf32>
      %312 = math.tanh %311 : vector<1x32xf32>
      %313 = arith.mulf %308, %312 : vector<1x32xf32>
      %314 = arith.select %295, %313, %292 : vector<1x32xf32>
      %315 = arith.select %295, %311, %293 : vector<1x32xf32>
      %316 = vector.extract_strided_slice %92 {offsets = [5, 0], sizes = [1, 128], strides = [1, 1]} : vector<8x128xf32> to vector<1x128xf32>
      %c5_i32_86 = arith.constant 5 : i32
      %317 = arith.cmpi sgt, %13, %c5_i32_86 : i32
      %cst_87 = arith.constant dense<0.000000e+00> : vector<1x128xf32>
      %318 = tpu.matmul %314, %94, %cst_87 {dimension_numbers = #tpu.dot_dimension_numbers<[1], [0], [0], [1], [0, 0, 1, 1], [], []>} : vector<1x32xf32>, vector<32x128xf32>, vector<1x128xf32> -> vector<1x128xf32>
      %319 = arith.addf %316, %318 : vector<1x128xf32>
      %320 = arith.negf %319 : vector<1x128xf32>
      %321 = math.exp %320 : vector<1x128xf32>
      %cst_88 = arith.constant 1.000000e+00 : f32
      %322 = vector.broadcast %cst_88 : f32 to vector<1x128xf32>
      %323 = arith.addf %322, %321 : vector<1x128xf32>
      %324 = arith.divf %322, %323 : vector<1x128xf32>
      %325 = math.tanh %319 : vector<1x128xf32>
      %326 = arith.select %5, %325, %324 : vector<1x128xi1>, vector<1x128xf32>
      %327 = vector.extract_strided_slice %326 {offsets = [0, 0], sizes = [1, 32], strides = [1, 1]} : vector<1x128xf32> to vector<1x32xf32>
      %328 = vector.extract_strided_slice %326 {offsets = [0, 32], sizes = [1, 32], strides = [1, 1]} : vector<1x128xf32> to vector<1x32xf32>
      %329 = vector.extract_strided_slice %326 {offsets = [0, 64], sizes = [1, 32], strides = [1, 1]} : vector<1x128xf32> to vector<1x32xf32>
      %330 = vector.extract_strided_slice %326 {offsets = [0, 96], sizes = [1, 32], strides = [1, 1]} : vector<1x128xf32> to vector<1x32xf32>
      %331 = arith.mulf %328, %315 : vector<1x32xf32>
      %332 = arith.mulf %327, %329 : vector<1x32xf32>
      %333 = arith.addf %331, %332 : vector<1x32xf32>
      %334 = math.tanh %333 : vector<1x32xf32>
      %335 = arith.mulf %330, %334 : vector<1x32xf32>
      %336 = arith.select %317, %335, %314 : vector<1x32xf32>
      %337 = arith.select %317, %333, %315 : vector<1x32xf32>
      %338 = vector.extract_strided_slice %92 {offsets = [4, 0], sizes = [1, 128], strides = [1, 1]} : vector<8x128xf32> to vector<1x128xf32>
      %c4_i32_89 = arith.constant 4 : i32
      %339 = arith.cmpi sgt, %13, %c4_i32_89 : i32
      %cst_90 = arith.constant dense<0.000000e+00> : vector<1x128xf32>
      %340 = tpu.matmul %336, %94, %cst_90 {dimension_numbers = #tpu.dot_dimension_numbers<[1], [0], [0], [1], [0, 0, 1, 1], [], []>} : vector<1x32xf32>, vector<32x128xf32>, vector<1x128xf32> -> vector<1x128xf32>
      %341 = arith.addf %338, %340 : vector<1x128xf32>
      %342 = arith.negf %341 : vector<1x128xf32>
      %343 = math.exp %342 : vector<1x128xf32>
      %cst_91 = arith.constant 1.000000e+00 : f32
      %344 = vector.broadcast %cst_91 : f32 to vector<1x128xf32>
      %345 = arith.addf %344, %343 : vector<1x128xf32>
      %346 = arith.divf %344, %345 : vector<1x128xf32>
      %347 = math.tanh %341 : vector<1x128xf32>
      %348 = arith.select %5, %347, %346 : vector<1x128xi1>, vector<1x128xf32>
      %349 = vector.extract_strided_slice %348 {offsets = [0, 0], sizes = [1, 32], strides = [1, 1]} : vector<1x128xf32> to vector<1x32xf32>
      %350 = vector.extract_strided_slice %348 {offsets = [0, 32], sizes = [1, 32], strides = [1, 1]} : vector<1x128xf32> to vector<1x32xf32>
      %351 = vector.extract_strided_slice %348 {offsets = [0, 64], sizes = [1, 32], strides = [1, 1]} : vector<1x128xf32> to vector<1x32xf32>
      %352 = vector.extract_strided_slice %348 {offsets = [0, 96], sizes = [1, 32], strides = [1, 1]} : vector<1x128xf32> to vector<1x32xf32>
      %353 = arith.mulf %350, %337 : vector<1x32xf32>
      %354 = arith.mulf %349, %351 : vector<1x32xf32>
      %355 = arith.addf %353, %354 : vector<1x32xf32>
      %356 = math.tanh %355 : vector<1x32xf32>
      %357 = arith.mulf %352, %356 : vector<1x32xf32>
      %358 = arith.select %339, %357, %336 : vector<1x32xf32>
      %359 = arith.select %339, %355, %337 : vector<1x32xf32>
      %360 = vector.extract_strided_slice %92 {offsets = [3, 0], sizes = [1, 128], strides = [1, 1]} : vector<8x128xf32> to vector<1x128xf32>
      %c3_i32_92 = arith.constant 3 : i32
      %361 = arith.cmpi sgt, %13, %c3_i32_92 : i32
      %cst_93 = arith.constant dense<0.000000e+00> : vector<1x128xf32>
      %362 = tpu.matmul %358, %94, %cst_93 {dimension_numbers = #tpu.dot_dimension_numbers<[1], [0], [0], [1], [0, 0, 1, 1], [], []>} : vector<1x32xf32>, vector<32x128xf32>, vector<1x128xf32> -> vector<1x128xf32>
      %363 = arith.addf %360, %362 : vector<1x128xf32>
      %364 = arith.negf %363 : vector<1x128xf32>
      %365 = math.exp %364 : vector<1x128xf32>
      %cst_94 = arith.constant 1.000000e+00 : f32
      %366 = vector.broadcast %cst_94 : f32 to vector<1x128xf32>
      %367 = arith.addf %366, %365 : vector<1x128xf32>
      %368 = arith.divf %366, %367 : vector<1x128xf32>
      %369 = math.tanh %363 : vector<1x128xf32>
      %370 = arith.select %5, %369, %368 : vector<1x128xi1>, vector<1x128xf32>
      %371 = vector.extract_strided_slice %370 {offsets = [0, 0], sizes = [1, 32], strides = [1, 1]} : vector<1x128xf32> to vector<1x32xf32>
      %372 = vector.extract_strided_slice %370 {offsets = [0, 32], sizes = [1, 32], strides = [1, 1]} : vector<1x128xf32> to vector<1x32xf32>
      %373 = vector.extract_strided_slice %370 {offsets = [0, 64], sizes = [1, 32], strides = [1, 1]} : vector<1x128xf32> to vector<1x32xf32>
      %374 = vector.extract_strided_slice %370 {offsets = [0, 96], sizes = [1, 32], strides = [1, 1]} : vector<1x128xf32> to vector<1x32xf32>
      %375 = arith.mulf %372, %359 : vector<1x32xf32>
      %376 = arith.mulf %371, %373 : vector<1x32xf32>
      %377 = arith.addf %375, %376 : vector<1x32xf32>
      %378 = math.tanh %377 : vector<1x32xf32>
      %379 = arith.mulf %374, %378 : vector<1x32xf32>
      %380 = arith.select %361, %379, %358 : vector<1x32xf32>
      %381 = arith.select %361, %377, %359 : vector<1x32xf32>
      %382 = vector.extract_strided_slice %92 {offsets = [2, 0], sizes = [1, 128], strides = [1, 1]} : vector<8x128xf32> to vector<1x128xf32>
      %c2_i32_95 = arith.constant 2 : i32
      %383 = arith.cmpi sgt, %13, %c2_i32_95 : i32
      %cst_96 = arith.constant dense<0.000000e+00> : vector<1x128xf32>
      %384 = tpu.matmul %380, %94, %cst_96 {dimension_numbers = #tpu.dot_dimension_numbers<[1], [0], [0], [1], [0, 0, 1, 1], [], []>} : vector<1x32xf32>, vector<32x128xf32>, vector<1x128xf32> -> vector<1x128xf32>
      %385 = arith.addf %382, %384 : vector<1x128xf32>
      %386 = arith.negf %385 : vector<1x128xf32>
      %387 = math.exp %386 : vector<1x128xf32>
      %cst_97 = arith.constant 1.000000e+00 : f32
      %388 = vector.broadcast %cst_97 : f32 to vector<1x128xf32>
      %389 = arith.addf %388, %387 : vector<1x128xf32>
      %390 = arith.divf %388, %389 : vector<1x128xf32>
      %391 = math.tanh %385 : vector<1x128xf32>
      %392 = arith.select %5, %391, %390 : vector<1x128xi1>, vector<1x128xf32>
      %393 = vector.extract_strided_slice %392 {offsets = [0, 0], sizes = [1, 32], strides = [1, 1]} : vector<1x128xf32> to vector<1x32xf32>
      %394 = vector.extract_strided_slice %392 {offsets = [0, 32], sizes = [1, 32], strides = [1, 1]} : vector<1x128xf32> to vector<1x32xf32>
      %395 = vector.extract_strided_slice %392 {offsets = [0, 64], sizes = [1, 32], strides = [1, 1]} : vector<1x128xf32> to vector<1x32xf32>
      %396 = vector.extract_strided_slice %392 {offsets = [0, 96], sizes = [1, 32], strides = [1, 1]} : vector<1x128xf32> to vector<1x32xf32>
      %397 = arith.mulf %394, %381 : vector<1x32xf32>
      %398 = arith.mulf %393, %395 : vector<1x32xf32>
      %399 = arith.addf %397, %398 : vector<1x32xf32>
      %400 = math.tanh %399 : vector<1x32xf32>
      %401 = arith.mulf %396, %400 : vector<1x32xf32>
      %402 = arith.select %383, %401, %380 : vector<1x32xf32>
      %403 = arith.select %383, %399, %381 : vector<1x32xf32>
      %404 = vector.extract_strided_slice %92 {offsets = [1, 0], sizes = [1, 128], strides = [1, 1]} : vector<8x128xf32> to vector<1x128xf32>
      %c1_i32_98 = arith.constant 1 : i32
      %405 = arith.cmpi sgt, %13, %c1_i32_98 : i32
      %cst_99 = arith.constant dense<0.000000e+00> : vector<1x128xf32>
      %406 = tpu.matmul %402, %94, %cst_99 {dimension_numbers = #tpu.dot_dimension_numbers<[1], [0], [0], [1], [0, 0, 1, 1], [], []>} : vector<1x32xf32>, vector<32x128xf32>, vector<1x128xf32> -> vector<1x128xf32>
      %407 = arith.addf %404, %406 : vector<1x128xf32>
      %408 = arith.negf %407 : vector<1x128xf32>
      %409 = math.exp %408 : vector<1x128xf32>
      %cst_100 = arith.constant 1.000000e+00 : f32
      %410 = vector.broadcast %cst_100 : f32 to vector<1x128xf32>
      %411 = arith.addf %410, %409 : vector<1x128xf32>
      %412 = arith.divf %410, %411 : vector<1x128xf32>
      %413 = math.tanh %407 : vector<1x128xf32>
      %414 = arith.select %5, %413, %412 : vector<1x128xi1>, vector<1x128xf32>
      %415 = vector.extract_strided_slice %414 {offsets = [0, 0], sizes = [1, 32], strides = [1, 1]} : vector<1x128xf32> to vector<1x32xf32>
      %416 = vector.extract_strided_slice %414 {offsets = [0, 32], sizes = [1, 32], strides = [1, 1]} : vector<1x128xf32> to vector<1x32xf32>
      %417 = vector.extract_strided_slice %414 {offsets = [0, 64], sizes = [1, 32], strides = [1, 1]} : vector<1x128xf32> to vector<1x32xf32>
      %418 = vector.extract_strided_slice %414 {offsets = [0, 96], sizes = [1, 32], strides = [1, 1]} : vector<1x128xf32> to vector<1x32xf32>
      %419 = arith.mulf %416, %403 : vector<1x32xf32>
      %420 = arith.mulf %415, %417 : vector<1x32xf32>
      %421 = arith.addf %419, %420 : vector<1x32xf32>
      %422 = math.tanh %421 : vector<1x32xf32>
      %423 = arith.mulf %418, %422 : vector<1x32xf32>
      %424 = arith.select %405, %423, %402 : vector<1x32xf32>
      %425 = arith.select %405, %421, %403 : vector<1x32xf32>
      %426 = vector.extract_strided_slice %92 {offsets = [0, 0], sizes = [1, 128], strides = [1, 1]} : vector<8x128xf32> to vector<1x128xf32>
      %c0_i32_101 = arith.constant 0 : i32
      %427 = arith.cmpi sgt, %13, %c0_i32_101 : i32
      %cst_102 = arith.constant dense<0.000000e+00> : vector<1x128xf32>
      %428 = tpu.matmul %424, %94, %cst_102 {dimension_numbers = #tpu.dot_dimension_numbers<[1], [0], [0], [1], [0, 0, 1, 1], [], []>} : vector<1x32xf32>, vector<32x128xf32>, vector<1x128xf32> -> vector<1x128xf32>
      %429 = arith.addf %426, %428 : vector<1x128xf32>
      %430 = arith.negf %429 : vector<1x128xf32>
      %431 = math.exp %430 : vector<1x128xf32>
      %cst_103 = arith.constant 1.000000e+00 : f32
      %432 = vector.broadcast %cst_103 : f32 to vector<1x128xf32>
      %433 = arith.addf %432, %431 : vector<1x128xf32>
      %434 = arith.divf %432, %433 : vector<1x128xf32>
      %435 = math.tanh %429 : vector<1x128xf32>
      %436 = arith.select %5, %435, %434 : vector<1x128xi1>, vector<1x128xf32>
      %437 = vector.extract_strided_slice %436 {offsets = [0, 0], sizes = [1, 32], strides = [1, 1]} : vector<1x128xf32> to vector<1x32xf32>
      %438 = vector.extract_strided_slice %436 {offsets = [0, 32], sizes = [1, 32], strides = [1, 1]} : vector<1x128xf32> to vector<1x32xf32>
      %439 = vector.extract_strided_slice %436 {offsets = [0, 64], sizes = [1, 32], strides = [1, 1]} : vector<1x128xf32> to vector<1x32xf32>
      %440 = vector.extract_strided_slice %436 {offsets = [0, 96], sizes = [1, 32], strides = [1, 1]} : vector<1x128xf32> to vector<1x32xf32>
      %441 = arith.mulf %438, %425 : vector<1x32xf32>
      %442 = arith.mulf %437, %439 : vector<1x32xf32>
      %443 = arith.addf %441, %442 : vector<1x32xf32>
      %444 = math.tanh %443 : vector<1x32xf32>
      %445 = arith.mulf %440, %444 : vector<1x32xf32>
      %446 = arith.select %427, %445, %424 : vector<1x32xf32>
      %447 = arith.select %427, %443, %425 : vector<1x32xf32>
      %448 = tpu.concatenate %116, %138, %160, %182, %204, %226, %248, %270 in 0 : vector<1x32xf32>, vector<1x32xf32>, vector<1x32xf32>, vector<1x32xf32>, vector<1x32xf32>, vector<1x32xf32>, vector<1x32xf32>, vector<1x32xf32> -> vector<8x32xf32>
      %449 = tpu.concatenate %446, %424, %402, %380, %358, %336, %314, %292 in 0 : vector<1x32xf32>, vector<1x32xf32>, vector<1x32xf32>, vector<1x32xf32>, vector<1x32xf32>, vector<1x32xf32>, vector<1x32xf32>, vector<1x32xf32> -> vector<8x32xf32>
      %450 = tpu.concatenate %448, %449 in 1 : vector<8x32xf32>, vector<8x32xf32> -> vector<8x64xf32>
      %c0_104 = arith.constant 0 : index
      %c0_105 = arith.constant 0 : index
      %451 = vector.load %arg11[%c0_104, %c0_105] : memref<64x128xf32, #tpu.memory_space<vmem>>, vector<64x128xf32>
      %cst_106 = arith.constant dense<0.000000e+00> : vector<8x128xf32>
      %452 = tpu.matmul %450, %451, %cst_106 {dimension_numbers = #tpu.dot_dimension_numbers<[1], [0], [0], [1], [0, 0, 1, 1], [], []>} : vector<8x64xf32>, vector<64x128xf32>, vector<8x128xf32> -> vector<8x128xf32>
      %c0_107 = arith.constant 0 : index
      %c0_108 = arith.constant 0 : index
      %453 = vector.load %arg13[%c0_107, %c0_108] : memref<1x128xf32, #tpu.memory_space<vmem>>, vector<1x128xf32>
      %454 = vector.broadcast %453 : vector<1x128xf32> to vector<8x128xf32>
      %455 = arith.addf %452, %454 : vector<8x128xf32>
      %c0_109 = arith.constant 0 : index
      %c0_110 = arith.constant 0 : index
      %456 = vector.load %arg14[%c0_109, %c0_110] : memref<64x128xf32, #tpu.memory_space<vmem>>, vector<64x128xf32>
      %cst_111 = arith.constant dense<0.000000e+00> : vector<8x128xf32>
      %457 = tpu.matmul %450, %456, %cst_111 {dimension_numbers = #tpu.dot_dimension_numbers<[1], [0], [0], [1], [0, 0, 1, 1], [], []>} : vector<8x64xf32>, vector<64x128xf32>, vector<8x128xf32> -> vector<8x128xf32>
      %c0_112 = arith.constant 0 : index
      %c0_113 = arith.constant 0 : index
      %458 = vector.load %arg16[%c0_112, %c0_113] : memref<1x128xf32, #tpu.memory_space<vmem>>, vector<1x128xf32>
      %459 = vector.broadcast %458 : vector<1x128xf32> to vector<8x128xf32>
      %460 = arith.addf %457, %459 : vector<8x128xf32>
      %c0_114 = arith.constant 0 : index
      %c0_115 = arith.constant 0 : index
      %461 = vector.load %arg12[%c0_114, %c0_115] : memref<32x128xf32, #tpu.memory_space<vmem>>, vector<32x128xf32>
      %c0_116 = arith.constant 0 : index
      %c0_117 = arith.constant 0 : index
      %462 = vector.load %arg15[%c0_116, %c0_117] : memref<32x128xf32, #tpu.memory_space<vmem>>, vector<32x128xf32>
      %cst_118 = arith.constant 0.000000e+00 : f32
      %463 = vector.broadcast %cst_118 : f32 to vector<1x32xf32>
      %464 = vector.extract_strided_slice %455 {offsets = [0, 0], sizes = [1, 128], strides = [1, 1]} : vector<8x128xf32> to vector<1x128xf32>
      %c0_i32_119 = arith.constant 0 : i32
      %465 = arith.cmpi sgt, %13, %c0_i32_119 : i32
      %cst_120 = arith.constant dense<0.000000e+00> : vector<1x128xf32>
      %466 = tpu.matmul %463, %461, %cst_120 {dimension_numbers = #tpu.dot_dimension_numbers<[1], [0], [0], [1], [0, 0, 1, 1], [], []>} : vector<1x32xf32>, vector<32x128xf32>, vector<1x128xf32> -> vector<1x128xf32>
      %467 = arith.addf %464, %466 : vector<1x128xf32>
      %468 = arith.negf %467 : vector<1x128xf32>
      %469 = math.exp %468 : vector<1x128xf32>
      %cst_121 = arith.constant 1.000000e+00 : f32
      %470 = vector.broadcast %cst_121 : f32 to vector<1x128xf32>
      %471 = arith.addf %470, %469 : vector<1x128xf32>
      %472 = arith.divf %470, %471 : vector<1x128xf32>
      %473 = math.tanh %467 : vector<1x128xf32>
      %474 = arith.select %5, %473, %472 : vector<1x128xi1>, vector<1x128xf32>
      %475 = vector.extract_strided_slice %474 {offsets = [0, 0], sizes = [1, 32], strides = [1, 1]} : vector<1x128xf32> to vector<1x32xf32>
      %476 = vector.extract_strided_slice %474 {offsets = [0, 32], sizes = [1, 32], strides = [1, 1]} : vector<1x128xf32> to vector<1x32xf32>
      %477 = vector.extract_strided_slice %474 {offsets = [0, 64], sizes = [1, 32], strides = [1, 1]} : vector<1x128xf32> to vector<1x32xf32>
      %478 = vector.extract_strided_slice %474 {offsets = [0, 96], sizes = [1, 32], strides = [1, 1]} : vector<1x128xf32> to vector<1x32xf32>
      %479 = arith.mulf %476, %463 : vector<1x32xf32>
      %480 = arith.mulf %475, %477 : vector<1x32xf32>
      %481 = arith.addf %479, %480 : vector<1x32xf32>
      %482 = math.tanh %481 : vector<1x32xf32>
      %483 = arith.mulf %478, %482 : vector<1x32xf32>
      %484 = arith.select %465, %483, %463 : vector<1x32xf32>
      %485 = arith.select %465, %481, %463 : vector<1x32xf32>
      %486 = vector.extract_strided_slice %455 {offsets = [1, 0], sizes = [1, 128], strides = [1, 1]} : vector<8x128xf32> to vector<1x128xf32>
      %c1_i32_122 = arith.constant 1 : i32
      %487 = arith.cmpi sgt, %13, %c1_i32_122 : i32
      %cst_123 = arith.constant dense<0.000000e+00> : vector<1x128xf32>
      %488 = tpu.matmul %484, %461, %cst_123 {dimension_numbers = #tpu.dot_dimension_numbers<[1], [0], [0], [1], [0, 0, 1, 1], [], []>} : vector<1x32xf32>, vector<32x128xf32>, vector<1x128xf32> -> vector<1x128xf32>
      %489 = arith.addf %486, %488 : vector<1x128xf32>
      %490 = arith.negf %489 : vector<1x128xf32>
      %491 = math.exp %490 : vector<1x128xf32>
      %cst_124 = arith.constant 1.000000e+00 : f32
      %492 = vector.broadcast %cst_124 : f32 to vector<1x128xf32>
      %493 = arith.addf %492, %491 : vector<1x128xf32>
      %494 = arith.divf %492, %493 : vector<1x128xf32>
      %495 = math.tanh %489 : vector<1x128xf32>
      %496 = arith.select %5, %495, %494 : vector<1x128xi1>, vector<1x128xf32>
      %497 = vector.extract_strided_slice %496 {offsets = [0, 0], sizes = [1, 32], strides = [1, 1]} : vector<1x128xf32> to vector<1x32xf32>
      %498 = vector.extract_strided_slice %496 {offsets = [0, 32], sizes = [1, 32], strides = [1, 1]} : vector<1x128xf32> to vector<1x32xf32>
      %499 = vector.extract_strided_slice %496 {offsets = [0, 64], sizes = [1, 32], strides = [1, 1]} : vector<1x128xf32> to vector<1x32xf32>
      %500 = vector.extract_strided_slice %496 {offsets = [0, 96], sizes = [1, 32], strides = [1, 1]} : vector<1x128xf32> to vector<1x32xf32>
      %501 = arith.mulf %498, %485 : vector<1x32xf32>
      %502 = arith.mulf %497, %499 : vector<1x32xf32>
      %503 = arith.addf %501, %502 : vector<1x32xf32>
      %504 = math.tanh %503 : vector<1x32xf32>
      %505 = arith.mulf %500, %504 : vector<1x32xf32>
      %506 = arith.select %487, %505, %484 : vector<1x32xf32>
      %507 = arith.select %487, %503, %485 : vector<1x32xf32>
      %508 = vector.extract_strided_slice %455 {offsets = [2, 0], sizes = [1, 128], strides = [1, 1]} : vector<8x128xf32> to vector<1x128xf32>
      %c2_i32_125 = arith.constant 2 : i32
      %509 = arith.cmpi sgt, %13, %c2_i32_125 : i32
      %cst_126 = arith.constant dense<0.000000e+00> : vector<1x128xf32>
      %510 = tpu.matmul %506, %461, %cst_126 {dimension_numbers = #tpu.dot_dimension_numbers<[1], [0], [0], [1], [0, 0, 1, 1], [], []>} : vector<1x32xf32>, vector<32x128xf32>, vector<1x128xf32> -> vector<1x128xf32>
      %511 = arith.addf %508, %510 : vector<1x128xf32>
      %512 = arith.negf %511 : vector<1x128xf32>
      %513 = math.exp %512 : vector<1x128xf32>
      %cst_127 = arith.constant 1.000000e+00 : f32
      %514 = vector.broadcast %cst_127 : f32 to vector<1x128xf32>
      %515 = arith.addf %514, %513 : vector<1x128xf32>
      %516 = arith.divf %514, %515 : vector<1x128xf32>
      %517 = math.tanh %511 : vector<1x128xf32>
      %518 = arith.select %5, %517, %516 : vector<1x128xi1>, vector<1x128xf32>
      %519 = vector.extract_strided_slice %518 {offsets = [0, 0], sizes = [1, 32], strides = [1, 1]} : vector<1x128xf32> to vector<1x32xf32>
      %520 = vector.extract_strided_slice %518 {offsets = [0, 32], sizes = [1, 32], strides = [1, 1]} : vector<1x128xf32> to vector<1x32xf32>
      %521 = vector.extract_strided_slice %518 {offsets = [0, 64], sizes = [1, 32], strides = [1, 1]} : vector<1x128xf32> to vector<1x32xf32>
      %522 = vector.extract_strided_slice %518 {offsets = [0, 96], sizes = [1, 32], strides = [1, 1]} : vector<1x128xf32> to vector<1x32xf32>
      %523 = arith.mulf %520, %507 : vector<1x32xf32>
      %524 = arith.mulf %519, %521 : vector<1x32xf32>
      %525 = arith.addf %523, %524 : vector<1x32xf32>
      %526 = math.tanh %525 : vector<1x32xf32>
      %527 = arith.mulf %522, %526 : vector<1x32xf32>
      %528 = arith.select %509, %527, %506 : vector<1x32xf32>
      %529 = arith.select %509, %525, %507 : vector<1x32xf32>
      %530 = vector.extract_strided_slice %455 {offsets = [3, 0], sizes = [1, 128], strides = [1, 1]} : vector<8x128xf32> to vector<1x128xf32>
      %c3_i32_128 = arith.constant 3 : i32
      %531 = arith.cmpi sgt, %13, %c3_i32_128 : i32
      %cst_129 = arith.constant dense<0.000000e+00> : vector<1x128xf32>
      %532 = tpu.matmul %528, %461, %cst_129 {dimension_numbers = #tpu.dot_dimension_numbers<[1], [0], [0], [1], [0, 0, 1, 1], [], []>} : vector<1x32xf32>, vector<32x128xf32>, vector<1x128xf32> -> vector<1x128xf32>
      %533 = arith.addf %530, %532 : vector<1x128xf32>
      %534 = arith.negf %533 : vector<1x128xf32>
      %535 = math.exp %534 : vector<1x128xf32>
      %cst_130 = arith.constant 1.000000e+00 : f32
      %536 = vector.broadcast %cst_130 : f32 to vector<1x128xf32>
      %537 = arith.addf %536, %535 : vector<1x128xf32>
      %538 = arith.divf %536, %537 : vector<1x128xf32>
      %539 = math.tanh %533 : vector<1x128xf32>
      %540 = arith.select %5, %539, %538 : vector<1x128xi1>, vector<1x128xf32>
      %541 = vector.extract_strided_slice %540 {offsets = [0, 0], sizes = [1, 32], strides = [1, 1]} : vector<1x128xf32> to vector<1x32xf32>
      %542 = vector.extract_strided_slice %540 {offsets = [0, 32], sizes = [1, 32], strides = [1, 1]} : vector<1x128xf32> to vector<1x32xf32>
      %543 = vector.extract_strided_slice %540 {offsets = [0, 64], sizes = [1, 32], strides = [1, 1]} : vector<1x128xf32> to vector<1x32xf32>
      %544 = vector.extract_strided_slice %540 {offsets = [0, 96], sizes = [1, 32], strides = [1, 1]} : vector<1x128xf32> to vector<1x32xf32>
      %545 = arith.mulf %542, %529 : vector<1x32xf32>
      %546 = arith.mulf %541, %543 : vector<1x32xf32>
      %547 = arith.addf %545, %546 : vector<1x32xf32>
      %548 = math.tanh %547 : vector<1x32xf32>
      %549 = arith.mulf %544, %548 : vector<1x32xf32>
      %550 = arith.select %531, %549, %528 : vector<1x32xf32>
      %551 = arith.select %531, %547, %529 : vector<1x32xf32>
      %552 = vector.extract_strided_slice %455 {offsets = [4, 0], sizes = [1, 128], strides = [1, 1]} : vector<8x128xf32> to vector<1x128xf32>
      %c4_i32_131 = arith.constant 4 : i32
      %553 = arith.cmpi sgt, %13, %c4_i32_131 : i32
      %cst_132 = arith.constant dense<0.000000e+00> : vector<1x128xf32>
      %554 = tpu.matmul %550, %461, %cst_132 {dimension_numbers = #tpu.dot_dimension_numbers<[1], [0], [0], [1], [0, 0, 1, 1], [], []>} : vector<1x32xf32>, vector<32x128xf32>, vector<1x128xf32> -> vector<1x128xf32>
      %555 = arith.addf %552, %554 : vector<1x128xf32>
      %556 = arith.negf %555 : vector<1x128xf32>
      %557 = math.exp %556 : vector<1x128xf32>
      %cst_133 = arith.constant 1.000000e+00 : f32
      %558 = vector.broadcast %cst_133 : f32 to vector<1x128xf32>
      %559 = arith.addf %558, %557 : vector<1x128xf32>
      %560 = arith.divf %558, %559 : vector<1x128xf32>
      %561 = math.tanh %555 : vector<1x128xf32>
      %562 = arith.select %5, %561, %560 : vector<1x128xi1>, vector<1x128xf32>
      %563 = vector.extract_strided_slice %562 {offsets = [0, 0], sizes = [1, 32], strides = [1, 1]} : vector<1x128xf32> to vector<1x32xf32>
      %564 = vector.extract_strided_slice %562 {offsets = [0, 32], sizes = [1, 32], strides = [1, 1]} : vector<1x128xf32> to vector<1x32xf32>
      %565 = vector.extract_strided_slice %562 {offsets = [0, 64], sizes = [1, 32], strides = [1, 1]} : vector<1x128xf32> to vector<1x32xf32>
      %566 = vector.extract_strided_slice %562 {offsets = [0, 96], sizes = [1, 32], strides = [1, 1]} : vector<1x128xf32> to vector<1x32xf32>
      %567 = arith.mulf %564, %551 : vector<1x32xf32>
      %568 = arith.mulf %563, %565 : vector<1x32xf32>
      %569 = arith.addf %567, %568 : vector<1x32xf32>
      %570 = math.tanh %569 : vector<1x32xf32>
      %571 = arith.mulf %566, %570 : vector<1x32xf32>
      %572 = arith.select %553, %571, %550 : vector<1x32xf32>
      %573 = arith.select %553, %569, %551 : vector<1x32xf32>
      %574 = vector.extract_strided_slice %455 {offsets = [5, 0], sizes = [1, 128], strides = [1, 1]} : vector<8x128xf32> to vector<1x128xf32>
      %c5_i32_134 = arith.constant 5 : i32
      %575 = arith.cmpi sgt, %13, %c5_i32_134 : i32
      %cst_135 = arith.constant dense<0.000000e+00> : vector<1x128xf32>
      %576 = tpu.matmul %572, %461, %cst_135 {dimension_numbers = #tpu.dot_dimension_numbers<[1], [0], [0], [1], [0, 0, 1, 1], [], []>} : vector<1x32xf32>, vector<32x128xf32>, vector<1x128xf32> -> vector<1x128xf32>
      %577 = arith.addf %574, %576 : vector<1x128xf32>
      %578 = arith.negf %577 : vector<1x128xf32>
      %579 = math.exp %578 : vector<1x128xf32>
      %cst_136 = arith.constant 1.000000e+00 : f32
      %580 = vector.broadcast %cst_136 : f32 to vector<1x128xf32>
      %581 = arith.addf %580, %579 : vector<1x128xf32>
      %582 = arith.divf %580, %581 : vector<1x128xf32>
      %583 = math.tanh %577 : vector<1x128xf32>
      %584 = arith.select %5, %583, %582 : vector<1x128xi1>, vector<1x128xf32>
      %585 = vector.extract_strided_slice %584 {offsets = [0, 0], sizes = [1, 32], strides = [1, 1]} : vector<1x128xf32> to vector<1x32xf32>
      %586 = vector.extract_strided_slice %584 {offsets = [0, 32], sizes = [1, 32], strides = [1, 1]} : vector<1x128xf32> to vector<1x32xf32>
      %587 = vector.extract_strided_slice %584 {offsets = [0, 64], sizes = [1, 32], strides = [1, 1]} : vector<1x128xf32> to vector<1x32xf32>
      %588 = vector.extract_strided_slice %584 {offsets = [0, 96], sizes = [1, 32], strides = [1, 1]} : vector<1x128xf32> to vector<1x32xf32>
      %589 = arith.mulf %586, %573 : vector<1x32xf32>
      %590 = arith.mulf %585, %587 : vector<1x32xf32>
      %591 = arith.addf %589, %590 : vector<1x32xf32>
      %592 = math.tanh %591 : vector<1x32xf32>
      %593 = arith.mulf %588, %592 : vector<1x32xf32>
      %594 = arith.select %575, %593, %572 : vector<1x32xf32>
      %595 = arith.select %575, %591, %573 : vector<1x32xf32>
      %596 = vector.extract_strided_slice %455 {offsets = [6, 0], sizes = [1, 128], strides = [1, 1]} : vector<8x128xf32> to vector<1x128xf32>
      %c6_i32_137 = arith.constant 6 : i32
      %597 = arith.cmpi sgt, %13, %c6_i32_137 : i32
      %cst_138 = arith.constant dense<0.000000e+00> : vector<1x128xf32>
      %598 = tpu.matmul %594, %461, %cst_138 {dimension_numbers = #tpu.dot_dimension_numbers<[1], [0], [0], [1], [0, 0, 1, 1], [], []>} : vector<1x32xf32>, vector<32x128xf32>, vector<1x128xf32> -> vector<1x128xf32>
      %599 = arith.addf %596, %598 : vector<1x128xf32>
      %600 = arith.negf %599 : vector<1x128xf32>
      %601 = math.exp %600 : vector<1x128xf32>
      %cst_139 = arith.constant 1.000000e+00 : f32
      %602 = vector.broadcast %cst_139 : f32 to vector<1x128xf32>
      %603 = arith.addf %602, %601 : vector<1x128xf32>
      %604 = arith.divf %602, %603 : vector<1x128xf32>
      %605 = math.tanh %599 : vector<1x128xf32>
      %606 = arith.select %5, %605, %604 : vector<1x128xi1>, vector<1x128xf32>
      %607 = vector.extract_strided_slice %606 {offsets = [0, 0], sizes = [1, 32], strides = [1, 1]} : vector<1x128xf32> to vector<1x32xf32>
      %608 = vector.extract_strided_slice %606 {offsets = [0, 32], sizes = [1, 32], strides = [1, 1]} : vector<1x128xf32> to vector<1x32xf32>
      %609 = vector.extract_strided_slice %606 {offsets = [0, 64], sizes = [1, 32], strides = [1, 1]} : vector<1x128xf32> to vector<1x32xf32>
      %610 = vector.extract_strided_slice %606 {offsets = [0, 96], sizes = [1, 32], strides = [1, 1]} : vector<1x128xf32> to vector<1x32xf32>
      %611 = arith.mulf %608, %595 : vector<1x32xf32>
      %612 = arith.mulf %607, %609 : vector<1x32xf32>
      %613 = arith.addf %611, %612 : vector<1x32xf32>
      %614 = math.tanh %613 : vector<1x32xf32>
      %615 = arith.mulf %610, %614 : vector<1x32xf32>
      %616 = arith.select %597, %615, %594 : vector<1x32xf32>
      %617 = arith.select %597, %613, %595 : vector<1x32xf32>
      %618 = vector.extract_strided_slice %455 {offsets = [7, 0], sizes = [1, 128], strides = [1, 1]} : vector<8x128xf32> to vector<1x128xf32>
      %c7_i32_140 = arith.constant 7 : i32
      %619 = arith.cmpi sgt, %13, %c7_i32_140 : i32
      %cst_141 = arith.constant dense<0.000000e+00> : vector<1x128xf32>
      %620 = tpu.matmul %616, %461, %cst_141 {dimension_numbers = #tpu.dot_dimension_numbers<[1], [0], [0], [1], [0, 0, 1, 1], [], []>} : vector<1x32xf32>, vector<32x128xf32>, vector<1x128xf32> -> vector<1x128xf32>
      %621 = arith.addf %618, %620 : vector<1x128xf32>
      %622 = arith.negf %621 : vector<1x128xf32>
      %623 = math.exp %622 : vector<1x128xf32>
      %cst_142 = arith.constant 1.000000e+00 : f32
      %624 = vector.broadcast %cst_142 : f32 to vector<1x128xf32>
      %625 = arith.addf %624, %623 : vector<1x128xf32>
      %626 = arith.divf %624, %625 : vector<1x128xf32>
      %627 = math.tanh %621 : vector<1x128xf32>
      %628 = arith.select %5, %627, %626 : vector<1x128xi1>, vector<1x128xf32>
      %629 = vector.extract_strided_slice %628 {offsets = [0, 0], sizes = [1, 32], strides = [1, 1]} : vector<1x128xf32> to vector<1x32xf32>
      %630 = vector.extract_strided_slice %628 {offsets = [0, 32], sizes = [1, 32], strides = [1, 1]} : vector<1x128xf32> to vector<1x32xf32>
      %631 = vector.extract_strided_slice %628 {offsets = [0, 64], sizes = [1, 32], strides = [1, 1]} : vector<1x128xf32> to vector<1x32xf32>
      %632 = vector.extract_strided_slice %628 {offsets = [0, 96], sizes = [1, 32], strides = [1, 1]} : vector<1x128xf32> to vector<1x32xf32>
      %633 = arith.mulf %630, %617 : vector<1x32xf32>
      %634 = arith.mulf %629, %631 : vector<1x32xf32>
      %635 = arith.addf %633, %634 : vector<1x32xf32>
      %636 = math.tanh %635 : vector<1x32xf32>
      %637 = arith.mulf %632, %636 : vector<1x32xf32>
      %638 = arith.select %619, %637, %616 : vector<1x32xf32>
      %639 = arith.select %619, %635, %617 : vector<1x32xf32>
      %640 = vector.extract_strided_slice %460 {offsets = [7, 0], sizes = [1, 128], strides = [1, 1]} : vector<8x128xf32> to vector<1x128xf32>
      %c7_i32_143 = arith.constant 7 : i32
      %641 = arith.cmpi sgt, %13, %c7_i32_143 : i32
      %cst_144 = arith.constant dense<0.000000e+00> : vector<1x128xf32>
      %642 = tpu.matmul %463, %462, %cst_144 {dimension_numbers = #tpu.dot_dimension_numbers<[1], [0], [0], [1], [0, 0, 1, 1], [], []>} : vector<1x32xf32>, vector<32x128xf32>, vector<1x128xf32> -> vector<1x128xf32>
      %643 = arith.addf %640, %642 : vector<1x128xf32>
      %644 = arith.negf %643 : vector<1x128xf32>
      %645 = math.exp %644 : vector<1x128xf32>
      %cst_145 = arith.constant 1.000000e+00 : f32
      %646 = vector.broadcast %cst_145 : f32 to vector<1x128xf32>
      %647 = arith.addf %646, %645 : vector<1x128xf32>
      %648 = arith.divf %646, %647 : vector<1x128xf32>
      %649 = math.tanh %643 : vector<1x128xf32>
      %650 = arith.select %5, %649, %648 : vector<1x128xi1>, vector<1x128xf32>
      %651 = vector.extract_strided_slice %650 {offsets = [0, 0], sizes = [1, 32], strides = [1, 1]} : vector<1x128xf32> to vector<1x32xf32>
      %652 = vector.extract_strided_slice %650 {offsets = [0, 32], sizes = [1, 32], strides = [1, 1]} : vector<1x128xf32> to vector<1x32xf32>
      %653 = vector.extract_strided_slice %650 {offsets = [0, 64], sizes = [1, 32], strides = [1, 1]} : vector<1x128xf32> to vector<1x32xf32>
      %654 = vector.extract_strided_slice %650 {offsets = [0, 96], sizes = [1, 32], strides = [1, 1]} : vector<1x128xf32> to vector<1x32xf32>
      %655 = arith.mulf %652, %463 : vector<1x32xf32>
      %656 = arith.mulf %651, %653 : vector<1x32xf32>
      %657 = arith.addf %655, %656 : vector<1x32xf32>
      %658 = math.tanh %657 : vector<1x32xf32>
      %659 = arith.mulf %654, %658 : vector<1x32xf32>
      %660 = arith.select %641, %659, %463 : vector<1x32xf32>
      %661 = arith.select %641, %657, %463 : vector<1x32xf32>
      %662 = vector.extract_strided_slice %460 {offsets = [6, 0], sizes = [1, 128], strides = [1, 1]} : vector<8x128xf32> to vector<1x128xf32>
      %c6_i32_146 = arith.constant 6 : i32
      %663 = arith.cmpi sgt, %13, %c6_i32_146 : i32
      %cst_147 = arith.constant dense<0.000000e+00> : vector<1x128xf32>
      %664 = tpu.matmul %660, %462, %cst_147 {dimension_numbers = #tpu.dot_dimension_numbers<[1], [0], [0], [1], [0, 0, 1, 1], [], []>} : vector<1x32xf32>, vector<32x128xf32>, vector<1x128xf32> -> vector<1x128xf32>
      %665 = arith.addf %662, %664 : vector<1x128xf32>
      %666 = arith.negf %665 : vector<1x128xf32>
      %667 = math.exp %666 : vector<1x128xf32>
      %cst_148 = arith.constant 1.000000e+00 : f32
      %668 = vector.broadcast %cst_148 : f32 to vector<1x128xf32>
      %669 = arith.addf %668, %667 : vector<1x128xf32>
      %670 = arith.divf %668, %669 : vector<1x128xf32>
      %671 = math.tanh %665 : vector<1x128xf32>
      %672 = arith.select %5, %671, %670 : vector<1x128xi1>, vector<1x128xf32>
      %673 = vector.extract_strided_slice %672 {offsets = [0, 0], sizes = [1, 32], strides = [1, 1]} : vector<1x128xf32> to vector<1x32xf32>
      %674 = vector.extract_strided_slice %672 {offsets = [0, 32], sizes = [1, 32], strides = [1, 1]} : vector<1x128xf32> to vector<1x32xf32>
      %675 = vector.extract_strided_slice %672 {offsets = [0, 64], sizes = [1, 32], strides = [1, 1]} : vector<1x128xf32> to vector<1x32xf32>
      %676 = vector.extract_strided_slice %672 {offsets = [0, 96], sizes = [1, 32], strides = [1, 1]} : vector<1x128xf32> to vector<1x32xf32>
      %677 = arith.mulf %674, %661 : vector<1x32xf32>
      %678 = arith.mulf %673, %675 : vector<1x32xf32>
      %679 = arith.addf %677, %678 : vector<1x32xf32>
      %680 = math.tanh %679 : vector<1x32xf32>
      %681 = arith.mulf %676, %680 : vector<1x32xf32>
      %682 = arith.select %663, %681, %660 : vector<1x32xf32>
      %683 = arith.select %663, %679, %661 : vector<1x32xf32>
      %684 = vector.extract_strided_slice %460 {offsets = [5, 0], sizes = [1, 128], strides = [1, 1]} : vector<8x128xf32> to vector<1x128xf32>
      %c5_i32_149 = arith.constant 5 : i32
      %685 = arith.cmpi sgt, %13, %c5_i32_149 : i32
      %cst_150 = arith.constant dense<0.000000e+00> : vector<1x128xf32>
      %686 = tpu.matmul %682, %462, %cst_150 {dimension_numbers = #tpu.dot_dimension_numbers<[1], [0], [0], [1], [0, 0, 1, 1], [], []>} : vector<1x32xf32>, vector<32x128xf32>, vector<1x128xf32> -> vector<1x128xf32>
      %687 = arith.addf %684, %686 : vector<1x128xf32>
      %688 = arith.negf %687 : vector<1x128xf32>
      %689 = math.exp %688 : vector<1x128xf32>
      %cst_151 = arith.constant 1.000000e+00 : f32
      %690 = vector.broadcast %cst_151 : f32 to vector<1x128xf32>
      %691 = arith.addf %690, %689 : vector<1x128xf32>
      %692 = arith.divf %690, %691 : vector<1x128xf32>
      %693 = math.tanh %687 : vector<1x128xf32>
      %694 = arith.select %5, %693, %692 : vector<1x128xi1>, vector<1x128xf32>
      %695 = vector.extract_strided_slice %694 {offsets = [0, 0], sizes = [1, 32], strides = [1, 1]} : vector<1x128xf32> to vector<1x32xf32>
      %696 = vector.extract_strided_slice %694 {offsets = [0, 32], sizes = [1, 32], strides = [1, 1]} : vector<1x128xf32> to vector<1x32xf32>
      %697 = vector.extract_strided_slice %694 {offsets = [0, 64], sizes = [1, 32], strides = [1, 1]} : vector<1x128xf32> to vector<1x32xf32>
      %698 = vector.extract_strided_slice %694 {offsets = [0, 96], sizes = [1, 32], strides = [1, 1]} : vector<1x128xf32> to vector<1x32xf32>
      %699 = arith.mulf %696, %683 : vector<1x32xf32>
      %700 = arith.mulf %695, %697 : vector<1x32xf32>
      %701 = arith.addf %699, %700 : vector<1x32xf32>
      %702 = math.tanh %701 : vector<1x32xf32>
      %703 = arith.mulf %698, %702 : vector<1x32xf32>
      %704 = arith.select %685, %703, %682 : vector<1x32xf32>
      %705 = arith.select %685, %701, %683 : vector<1x32xf32>
      %706 = vector.extract_strided_slice %460 {offsets = [4, 0], sizes = [1, 128], strides = [1, 1]} : vector<8x128xf32> to vector<1x128xf32>
      %c4_i32_152 = arith.constant 4 : i32
      %707 = arith.cmpi sgt, %13, %c4_i32_152 : i32
      %cst_153 = arith.constant dense<0.000000e+00> : vector<1x128xf32>
      %708 = tpu.matmul %704, %462, %cst_153 {dimension_numbers = #tpu.dot_dimension_numbers<[1], [0], [0], [1], [0, 0, 1, 1], [], []>} : vector<1x32xf32>, vector<32x128xf32>, vector<1x128xf32> -> vector<1x128xf32>
      %709 = arith.addf %706, %708 : vector<1x128xf32>
      %710 = arith.negf %709 : vector<1x128xf32>
      %711 = math.exp %710 : vector<1x128xf32>
      %cst_154 = arith.constant 1.000000e+00 : f32
      %712 = vector.broadcast %cst_154 : f32 to vector<1x128xf32>
      %713 = arith.addf %712, %711 : vector<1x128xf32>
      %714 = arith.divf %712, %713 : vector<1x128xf32>
      %715 = math.tanh %709 : vector<1x128xf32>
      %716 = arith.select %5, %715, %714 : vector<1x128xi1>, vector<1x128xf32>
      %717 = vector.extract_strided_slice %716 {offsets = [0, 0], sizes = [1, 32], strides = [1, 1]} : vector<1x128xf32> to vector<1x32xf32>
      %718 = vector.extract_strided_slice %716 {offsets = [0, 32], sizes = [1, 32], strides = [1, 1]} : vector<1x128xf32> to vector<1x32xf32>
      %719 = vector.extract_strided_slice %716 {offsets = [0, 64], sizes = [1, 32], strides = [1, 1]} : vector<1x128xf32> to vector<1x32xf32>
      %720 = vector.extract_strided_slice %716 {offsets = [0, 96], sizes = [1, 32], strides = [1, 1]} : vector<1x128xf32> to vector<1x32xf32>
      %721 = arith.mulf %718, %705 : vector<1x32xf32>
      %722 = arith.mulf %717, %719 : vector<1x32xf32>
      %723 = arith.addf %721, %722 : vector<1x32xf32>
      %724 = math.tanh %723 : vector<1x32xf32>
      %725 = arith.mulf %720, %724 : vector<1x32xf32>
      %726 = arith.select %707, %725, %704 : vector<1x32xf32>
      %727 = arith.select %707, %723, %705 : vector<1x32xf32>
      %728 = vector.extract_strided_slice %460 {offsets = [3, 0], sizes = [1, 128], strides = [1, 1]} : vector<8x128xf32> to vector<1x128xf32>
      %c3_i32_155 = arith.constant 3 : i32
      %729 = arith.cmpi sgt, %13, %c3_i32_155 : i32
      %cst_156 = arith.constant dense<0.000000e+00> : vector<1x128xf32>
      %730 = tpu.matmul %726, %462, %cst_156 {dimension_numbers = #tpu.dot_dimension_numbers<[1], [0], [0], [1], [0, 0, 1, 1], [], []>} : vector<1x32xf32>, vector<32x128xf32>, vector<1x128xf32> -> vector<1x128xf32>
      %731 = arith.addf %728, %730 : vector<1x128xf32>
      %732 = arith.negf %731 : vector<1x128xf32>
      %733 = math.exp %732 : vector<1x128xf32>
      %cst_157 = arith.constant 1.000000e+00 : f32
      %734 = vector.broadcast %cst_157 : f32 to vector<1x128xf32>
      %735 = arith.addf %734, %733 : vector<1x128xf32>
      %736 = arith.divf %734, %735 : vector<1x128xf32>
      %737 = math.tanh %731 : vector<1x128xf32>
      %738 = arith.select %5, %737, %736 : vector<1x128xi1>, vector<1x128xf32>
      %739 = vector.extract_strided_slice %738 {offsets = [0, 0], sizes = [1, 32], strides = [1, 1]} : vector<1x128xf32> to vector<1x32xf32>
      %740 = vector.extract_strided_slice %738 {offsets = [0, 32], sizes = [1, 32], strides = [1, 1]} : vector<1x128xf32> to vector<1x32xf32>
      %741 = vector.extract_strided_slice %738 {offsets = [0, 64], sizes = [1, 32], strides = [1, 1]} : vector<1x128xf32> to vector<1x32xf32>
      %742 = vector.extract_strided_slice %738 {offsets = [0, 96], sizes = [1, 32], strides = [1, 1]} : vector<1x128xf32> to vector<1x32xf32>
      %743 = arith.mulf %740, %727 : vector<1x32xf32>
      %744 = arith.mulf %739, %741 : vector<1x32xf32>
      %745 = arith.addf %743, %744 : vector<1x32xf32>
      %746 = math.tanh %745 : vector<1x32xf32>
      %747 = arith.mulf %742, %746 : vector<1x32xf32>
      %748 = arith.select %729, %747, %726 : vector<1x32xf32>
      %749 = arith.select %729, %745, %727 : vector<1x32xf32>
      %750 = vector.extract_strided_slice %460 {offsets = [2, 0], sizes = [1, 128], strides = [1, 1]} : vector<8x128xf32> to vector<1x128xf32>
      %c2_i32_158 = arith.constant 2 : i32
      %751 = arith.cmpi sgt, %13, %c2_i32_158 : i32
      %cst_159 = arith.constant dense<0.000000e+00> : vector<1x128xf32>
      %752 = tpu.matmul %748, %462, %cst_159 {dimension_numbers = #tpu.dot_dimension_numbers<[1], [0], [0], [1], [0, 0, 1, 1], [], []>} : vector<1x32xf32>, vector<32x128xf32>, vector<1x128xf32> -> vector<1x128xf32>
      %753 = arith.addf %750, %752 : vector<1x128xf32>
      %754 = arith.negf %753 : vector<1x128xf32>
      %755 = math.exp %754 : vector<1x128xf32>
      %cst_160 = arith.constant 1.000000e+00 : f32
      %756 = vector.broadcast %cst_160 : f32 to vector<1x128xf32>
      %757 = arith.addf %756, %755 : vector<1x128xf32>
      %758 = arith.divf %756, %757 : vector<1x128xf32>
      %759 = math.tanh %753 : vector<1x128xf32>
      %760 = arith.select %5, %759, %758 : vector<1x128xi1>, vector<1x128xf32>
      %761 = vector.extract_strided_slice %760 {offsets = [0, 0], sizes = [1, 32], strides = [1, 1]} : vector<1x128xf32> to vector<1x32xf32>
      %762 = vector.extract_strided_slice %760 {offsets = [0, 32], sizes = [1, 32], strides = [1, 1]} : vector<1x128xf32> to vector<1x32xf32>
      %763 = vector.extract_strided_slice %760 {offsets = [0, 64], sizes = [1, 32], strides = [1, 1]} : vector<1x128xf32> to vector<1x32xf32>
      %764 = vector.extract_strided_slice %760 {offsets = [0, 96], sizes = [1, 32], strides = [1, 1]} : vector<1x128xf32> to vector<1x32xf32>
      %765 = arith.mulf %762, %749 : vector<1x32xf32>
      %766 = arith.mulf %761, %763 : vector<1x32xf32>
      %767 = arith.addf %765, %766 : vector<1x32xf32>
      %768 = math.tanh %767 : vector<1x32xf32>
      %769 = arith.mulf %764, %768 : vector<1x32xf32>
      %770 = arith.select %751, %769, %748 : vector<1x32xf32>
      %771 = arith.select %751, %767, %749 : vector<1x32xf32>
      %772 = vector.extract_strided_slice %460 {offsets = [1, 0], sizes = [1, 128], strides = [1, 1]} : vector<8x128xf32> to vector<1x128xf32>
      %c1_i32_161 = arith.constant 1 : i32
      %773 = arith.cmpi sgt, %13, %c1_i32_161 : i32
      %cst_162 = arith.constant dense<0.000000e+00> : vector<1x128xf32>
      %774 = tpu.matmul %770, %462, %cst_162 {dimension_numbers = #tpu.dot_dimension_numbers<[1], [0], [0], [1], [0, 0, 1, 1], [], []>} : vector<1x32xf32>, vector<32x128xf32>, vector<1x128xf32> -> vector<1x128xf32>
      %775 = arith.addf %772, %774 : vector<1x128xf32>
      %776 = arith.negf %775 : vector<1x128xf32>
      %777 = math.exp %776 : vector<1x128xf32>
      %cst_163 = arith.constant 1.000000e+00 : f32
      %778 = vector.broadcast %cst_163 : f32 to vector<1x128xf32>
      %779 = arith.addf %778, %777 : vector<1x128xf32>
      %780 = arith.divf %778, %779 : vector<1x128xf32>
      %781 = math.tanh %775 : vector<1x128xf32>
      %782 = arith.select %5, %781, %780 : vector<1x128xi1>, vector<1x128xf32>
      %783 = vector.extract_strided_slice %782 {offsets = [0, 0], sizes = [1, 32], strides = [1, 1]} : vector<1x128xf32> to vector<1x32xf32>
      %784 = vector.extract_strided_slice %782 {offsets = [0, 32], sizes = [1, 32], strides = [1, 1]} : vector<1x128xf32> to vector<1x32xf32>
      %785 = vector.extract_strided_slice %782 {offsets = [0, 64], sizes = [1, 32], strides = [1, 1]} : vector<1x128xf32> to vector<1x32xf32>
      %786 = vector.extract_strided_slice %782 {offsets = [0, 96], sizes = [1, 32], strides = [1, 1]} : vector<1x128xf32> to vector<1x32xf32>
      %787 = arith.mulf %784, %771 : vector<1x32xf32>
      %788 = arith.mulf %783, %785 : vector<1x32xf32>
      %789 = arith.addf %787, %788 : vector<1x32xf32>
      %790 = math.tanh %789 : vector<1x32xf32>
      %791 = arith.mulf %786, %790 : vector<1x32xf32>
      %792 = arith.select %773, %791, %770 : vector<1x32xf32>
      %793 = arith.select %773, %789, %771 : vector<1x32xf32>
      %794 = vector.extract_strided_slice %460 {offsets = [0, 0], sizes = [1, 128], strides = [1, 1]} : vector<8x128xf32> to vector<1x128xf32>
      %c0_i32_164 = arith.constant 0 : i32
      %795 = arith.cmpi sgt, %13, %c0_i32_164 : i32
      %cst_165 = arith.constant dense<0.000000e+00> : vector<1x128xf32>
      %796 = tpu.matmul %792, %462, %cst_165 {dimension_numbers = #tpu.dot_dimension_numbers<[1], [0], [0], [1], [0, 0, 1, 1], [], []>} : vector<1x32xf32>, vector<32x128xf32>, vector<1x128xf32> -> vector<1x128xf32>
      %797 = arith.addf %794, %796 : vector<1x128xf32>
      %798 = arith.negf %797 : vector<1x128xf32>
      %799 = math.exp %798 : vector<1x128xf32>
      %cst_166 = arith.constant 1.000000e+00 : f32
      %800 = vector.broadcast %cst_166 : f32 to vector<1x128xf32>
      %801 = arith.addf %800, %799 : vector<1x128xf32>
      %802 = arith.divf %800, %801 : vector<1x128xf32>
      %803 = math.tanh %797 : vector<1x128xf32>
      %804 = arith.select %5, %803, %802 : vector<1x128xi1>, vector<1x128xf32>
      %805 = vector.extract_strided_slice %804 {offsets = [0, 0], sizes = [1, 32], strides = [1, 1]} : vector<1x128xf32> to vector<1x32xf32>
      %806 = vector.extract_strided_slice %804 {offsets = [0, 32], sizes = [1, 32], strides = [1, 1]} : vector<1x128xf32> to vector<1x32xf32>
      %807 = vector.extract_strided_slice %804 {offsets = [0, 64], sizes = [1, 32], strides = [1, 1]} : vector<1x128xf32> to vector<1x32xf32>
      %808 = vector.extract_strided_slice %804 {offsets = [0, 96], sizes = [1, 32], strides = [1, 1]} : vector<1x128xf32> to vector<1x32xf32>
      %809 = arith.mulf %806, %793 : vector<1x32xf32>
      %810 = arith.mulf %805, %807 : vector<1x32xf32>
      %811 = arith.addf %809, %810 : vector<1x32xf32>
      %812 = math.tanh %811 : vector<1x32xf32>
      %813 = arith.mulf %808, %812 : vector<1x32xf32>
      %814 = arith.select %795, %813, %792 : vector<1x32xf32>
      %815 = arith.select %795, %811, %793 : vector<1x32xf32>
      %816 = tpu.concatenate %638, %814 in 1 : vector<1x32xf32>, vector<1x32xf32> -> vector<1x64xf32>
      %c0_167 = arith.constant 0 : index
      %c0_168 = arith.constant 0 : index
      %817 = vector.load %arg17[%c0_167, %c0_168] : memref<64x16xf32, #tpu.memory_space<vmem>>, vector<64x16xf32>
      %cst_169 = arith.constant dense<0.000000e+00> : vector<1x16xf32>
      %818 = tpu.matmul %816, %817, %cst_169 {dimension_numbers = #tpu.dot_dimension_numbers<[1], [0], [0], [1], [0, 0, 1, 1], [], []>} : vector<1x64xf32>, vector<64x16xf32>, vector<1x16xf32> -> vector<1x16xf32>
      %c0_170 = arith.constant 0 : index
      %c0_171 = arith.constant 0 : index
      %819 = vector.load %arg18[%c0_170, %c0_171] : memref<1x16xf32, #tpu.memory_space<vmem>>, vector<1x16xf32>
      %820 = arith.addf %818, %819 : vector<1x16xf32>
      %821 = math.tanh %820 : vector<1x16xf32>
      %822 = arith.index_cast %arg21 : i32 to index
      %c0_172 = arith.constant 0 : index
      %823 = vector.load %arg19[%822, %c0_172] : memref<64x16xf32, #tpu.memory_space<vmem>>, vector<1x16xf32>
      tpu.vector_store %arg19[%822, %c0_172], %821 {strides = array<i32>} : memref<64x16xf32, #tpu.memory_space<vmem>>, vector<1x16xf32>,
    }
    return
  }
}

</mosaic_0001>

<llo_original>
// kernel: tree_fn.1
$region0: #{tree_fn.1}
  #allocation0 [shape = 'u32[]', space=smem, size = 0x4, offset = 0x4, fixed_abs, tag = 'smem constant byte address 0x4 - core index']
  #allocation1 [shape = 'u32[144,128]{1,0:T(1,128)}', space=vmem, size = 0x12000, scoped, tag = 'internal scratch']
  #allocation2 [shape = 'f32[8,16]{1,0:T(8,128)}', space=vmem, size = 0x1000, scoped, tag = 'scratch operand']
  #allocation3 [shape = 's32[1]{0:T(128)S(6)}', space=smem, size = 0x200, scoped, tag = 'scoped memory for tree_fn.1']
  %s0 = inlined_call_operand.<no memory space> [shape: s32[1], index: 0, kind: input, shape index: {}]
  %s1 = inlined_call_operand.hbm [shape: s32[64], index: 1, kind: input, shape index: {}]
  %s2 = inlined_call_operand.hbm [shape: s32[64], index: 2, kind: input, shape index: {}]
  %s3 = inlined_call_operand.hbm [shape: s32[384], index: 3, kind: input, shape index: {}]
  %s4 = inlined_call_operand.vmem [shape: f32[20,16], index: 4, kind: input, shape index: {}]
  %s5 = inlined_call_operand.hbm [shape: f32[16,128], index: 5, kind: input, shape index: {}]
  %s6 = inlined_call_operand.hbm [shape: f32[32,128], index: 6, kind: input, shape index: {}]
  %s7 = inlined_call_operand.hbm [shape: f32[1,128], index: 7, kind: input, shape index: {}]
  %s8 = inlined_call_operand.hbm [shape: f32[16,128], index: 8, kind: input, shape index: {}]
  %s9 = inlined_call_operand.hbm [shape: f32[32,128], index: 9, kind: input, shape index: {}]
  %s10 = inlined_call_operand.hbm [shape: f32[1,128], index: 10, kind: input, shape index: {}]
  %s11 = inlined_call_operand.vmem [shape: f32[64,128], index: 11, kind: input, shape index: {}]
  %s12 = inlined_call_operand.vmem [shape: f32[32,128], index: 12, kind: input, shape index: {}]
  %s13 = inlined_call_operand.hbm [shape: f32[1,128], index: 13, kind: input, shape index: {}]
  %s14 = inlined_call_operand.vmem [shape: f32[64,128], index: 14, kind: input, shape index: {}]
  %s15 = inlined_call_operand.hbm [shape: f32[32,128], index: 15, kind: input, shape index: {}]
  %s16 = inlined_call_operand.vmem [shape: f32[1,128], index: 16, kind: input, shape index: {}]
  %s17 = inlined_call_operand.vmem [shape: f32[64,16], index: 17, kind: input, shape index: {}]
  %s18 = inlined_call_operand.vmem [shape: f32[1,16], index: 18, kind: input, shape index: {}]
  %s19 = inlined_call_operand.vmem [shape: f32[64,16], index: 19, kind: output, shape index: {}]
  %s20 = sld [smem:[#allocation0]]
  $region137: #{tree_fn.1} parent=0
    _
  %s22 = ssub.s32 1, %s20
  %s23 = scalar_select 0, %s22, %s20
  %24 = sst [smem:[#allocation3]] %s0
  $region1: #{tree_fn.1} parent=0
    #allocation4 [shape = 'u8[512]{0}', space=smem, size = 0x200, scoped, tag = 'input window, operand 1, single buffered']
    #allocation5 [shape = 's32[1]{0}', space=sflag, size = 0x4, scoped, tag = 'scoped memory for tree_fn.1']
    #allocation6 [shape = 's32[1]{0}', space=sflag, size = 0x4, scoped, tag = 'scoped memory for tree_fn.1']
    #allocation7 [shape = 'u8[512]{0}', space=smem, size = 0x200, scoped, tag = 'input window, operand 2, single buffered']
    #allocation8 [shape = 's32[1]{0}', space=sflag, size = 0x4, scoped, tag = 'scoped memory for tree_fn.1']
    #allocation9 [shape = 'u8[1536]{0}', space=smem, size = 0x600, scoped, tag = 'input window, operand 3, single buffered']
    #allocation10 [shape = 'u8[8192]{0}', space=vmem, size = 0x2000, scoped, tag = 'input window, operand 5, single buffered']
    #allocation11 [shape = 'u8[16384]{0}', space=vmem, size = 0x4000, scoped, tag = 'input window, operand 6, single buffered']
    #allocation12 [shape = 's32[1]{0}', space=sflag, size = 0x4, scoped, tag = 'scoped memory for tree_fn.1']
    #allocation13 [shape = 'u8[512]{0}', space=vmem, size = 0x400, scoped, tag = 'input window, operand 7, single buffered']
    #allocation14 [shape = 'u8[8192]{0}', space=vmem, size = 0x2000, scoped, tag = 'input window, operand 8, single buffered']
    #allocation15 [shape = 's32[1]{0}', space=sflag, size = 0x4, scoped, tag = 'scoped memory for tree_fn.1']
    #allocation16 [shape = 'u8[16384]{0}', space=vmem, size = 0x4000, scoped, tag = 'input window, operand 9, single buffered']
    #allocation17 [shape = 'u8[512]{0}', space=vmem, size = 0x400, scoped, tag = 'input window, operand 10, single buffered']
    #allocation18 [shape = 's32[1]{0}', space=sflag, size = 0x4, scoped, tag = 'scoped memory for tree_fn.1']
    #allocation19 [shape = 'u8[512]{0}', space=vmem, size = 0x400, scoped, tag = 'input window, operand 13, single buffered']
    #allocation20 [shape = 'u8[16384]{0}', space=vmem, size = 0x4000, scoped, tag = 'input window, operand 15, single buffered']
    #allocation21 [shape = 's32[1]{0}', space=sflag, size = 0x4, scoped, tag = 'scoped memory for tree_fn.1']
    %25 = vsyncpa [#allocation6], 0
    %26 = vsyncpa [#allocation8], 0
    %27 = vsyncpa [#allocation5], 0
    %28 = vsyncpa [#allocation12], 0
    %29 = vsyncpa [#allocation15], 0
    %30 = vsyncpa [#allocation18], 0
    %31 = vsyncpa [#allocation21], 0
    // Predicated region
    $region2: #{tree_fn.1} parent=1 // pred_check
      _
    $region3: #{tree_fn.1} parent=1 // pred_check_branch
      %33 = sbr.rel (0) target = $region5
    $region4: #{tree_fn.1} parent=1 // pred_region
      _
    $region5: #{tree_fn.1} parent=1 // pred_fallthru
      _
    // Predicated region
    $region6: #{tree_fn.1} parent=1 // pred_check
      _
    $region7: #{tree_fn.1} parent=1 // pred_check_branch
      %35 = sbr.rel (0) target = $region9
    $region8: #{tree_fn.1} parent=1 // pred_region
      %s37 = ssub.s32 16, 16
      %38 = vsyncadd [#allocation6], %s37
      %41 = dma.hbm_to_smem %s1, 16, [#allocation4], [#allocation6]
    $region9: #{tree_fn.1} parent=1 // pred_fallthru
      _
    // Predicated region
    $region10: #{tree_fn.1} parent=1 // pred_check
      _
    $region11: #{tree_fn.1} parent=1 // pred_check_branch
      %43 = sbr.rel (0) target = $region13
    $region12: #{tree_fn.1} parent=1 // pred_region
      %s45 = ssub.s32 16, 16
      %46 = vsyncadd [#allocation8], %s45
      %49 = dma.hbm_to_smem %s2, 16, [#allocation7], [#allocation8]
    $region13: #{tree_fn.1} parent=1 // pred_fallthru
      _
    // Predicated region
    $region14: #{tree_fn.1} parent=1 // pred_check
      _
    $region15: #{tree_fn.1} parent=1 // pred_check_branch
      %51 = sbr.rel (0) target = $region17
    $region16: #{tree_fn.1} parent=1 // pred_region
      %s53 = ssub.s32 48, 48
      %54 = vsyncadd [#allocation8], %s53
      %57 = dma.hbm_to_smem %s3, 48, [#allocation9], [#allocation8]
    $region17: #{tree_fn.1} parent=1 // pred_fallthru
      _
    // Predicated region
    $region18: #{tree_fn.1} parent=1 // pred_check
      _
    $region19: #{tree_fn.1} parent=1 // pred_check_branch
      %59 = sbr.rel (0) target = $region21
    $region20: #{tree_fn.1} parent=1 // pred_region
      _
    $region21: #{tree_fn.1} parent=1 // pred_fallthru
      _
    // Predicated region
    $region22: #{tree_fn.1} parent=1 // pred_check
      _
    $region23: #{tree_fn.1} parent=1 // pred_check_branch
      %61 = sbr.rel (0) target = $region25
    $region24: #{tree_fn.1} parent=1 // pred_region
      %s63 = ssub.s32 256, 256
      %64 = vsyncadd [#allocation5], %s63
      %s65 = sshll.u32 [#allocation10], 4
      %s66 = int_to_ptr.vmem [resolvable:$true] %s65
      %71 = dma.hbm_to_vmem [thread:$0]  %s5, 256, %s66, [#allocation5], 128, 128, 8
    $region25: #{tree_fn.1} parent=1 // pred_fallthru
      _
    // Predicated region
    $region26: #{tree_fn.1} parent=1 // pred_check
      _
    $region27: #{tree_fn.1} parent=1 // pred_check_branch
      %73 = sbr.rel (0) target = $region29
    $region28: #{tree_fn.1} parent=1 // pred_region
      %s75 = ssub.s32 512, 512
      %76 = vsyncadd [#allocation12], %s75
      %s77 = sshll.u32 [#allocation11], 4
      %s78 = int_to_ptr.vmem [resolvable:$true] %s77
      %83 = dma.hbm_to_vmem [thread:$0]  %s6, 512, %s78, [#allocation12], 128, 128, 8
    $region29: #{tree_fn.1} parent=1 // pred_fallthru
      _
    // Predicated region
    $region30: #{tree_fn.1} parent=1 // pred_check
      _
    $region31: #{tree_fn.1} parent=1 // pred_check_branch
      %85 = sbr.rel (0) target = $region33
    $region32: #{tree_fn.1} parent=1 // pred_region
      %s87 = ssub.s32 16, 16
      %88 = vsyncadd [#allocation12], %s87
      %s90 = sshll.u32 [#allocation13], 4
      %s91 = int_to_ptr.vmem [resolvable:$true] %s90
      %93 = dma.hbm_to_vmem [thread:$0]  %s7, 16, %s91, [#allocation12]
    $region33: #{tree_fn.1} parent=1 // pred_fallthru
      _
    // Predicated region
    $region34: #{tree_fn.1} parent=1 // pred_check
      _
    $region35: #{tree_fn.1} parent=1 // pred_check_branch
      %95 = sbr.rel (0) target = $region37
    $region36: #{tree_fn.1} parent=1 // pred_region
      %s97 = ssub.s32 256, 256
      %98 = vsyncadd [#allocation15], %s97
      %s99 = sshll.u32 [#allocation14], 4
      %s100 = int_to_ptr.vmem [resolvable:$true] %s99
      %105 = dma.hbm_to_vmem [thread:$0]  %s8, 256, %s100, [#allocation15], 128, 128, 8
    $region37: #{tree_fn.1} parent=1 // pred_fallthru
      _
    // Predicated region
    $region38: #{tree_fn.1} parent=1 // pred_check
      _
    $region39: #{tree_fn.1} parent=1 // pred_check_branch
      %107 = sbr.rel (0) target = $region41
    $region40: #{tree_fn.1} parent=1 // pred_region
      %s109 = ssub.s32 512, 512
      %110 = vsyncadd [#allocation15], %s109
      %s111 = sshll.u32 [#allocation16], 4
      %s112 = int_to_ptr.vmem [resolvable:$true] %s111
      %117 = dma.hbm_to_vmem [thread:$0]  %s9, 512, %s112, [#allocation15], 128, 128, 8
    $region41: #{tree_fn.1} parent=1 // pred_fallthru
      _
    // Predicated region
    $region42: #{tree_fn.1} parent=1 // pred_check
      _
    $region43: #{tree_fn.1} parent=1 // pred_check_branch
      %119 = sbr.rel (0) target = $region45
    $region44: #{tree_fn.1} parent=1 // pred_region
      %s121 = ssub.s32 16, 16
      %122 = vsyncadd [#allocation18], %s121
      %s124 = sshll.u32 [#allocation17], 4
      %s125 = int_to_ptr.vmem [resolvable:$true] %s124
      %127 = dma.hbm_to_vmem [thread:$0]  %s10, 16, %s125, [#allocation18]
    $region45: #{tree_fn.1} parent=1 // pred_fallthru
      _
    // Predicated region
    $region46: #{tree_fn.1} parent=1 // pred_check
      _
    $region47: #{tree_fn.1} parent=1 // pred_check_branch
      %129 = sbr.rel (0) target = $region49
    $region48: #{tree_fn.1} parent=1 // pred_region
      _
    $region49: #{tree_fn.1} parent=1 // pred_fallthru
      _
    // Predicated region
    $region50: #{tree_fn.1} parent=1 // pred_check
      _
    $region51: #{tree_fn.1} parent=1 // pred_check_branch
      %131 = sbr.rel (0) target = $region53
    $region52: #{tree_fn.1} parent=1 // pred_region
      _
    $region53: #{tree_fn.1} parent=1 // pred_fallthru
      _
    // Predicated region
    $region54: #{tree_fn.1} parent=1 // pred_check
      _
    $region55: #{tree_fn.1} parent=1 // pred_check_branch
      %133 = sbr.rel (0) target = $region57
    $region56: #{tree_fn.1} parent=1 // pred_region
      %s135 = ssub.s32 16, 16
      %136 = vsyncadd [#allocation18], %s135
      %s138 = sshll.u32 [#allocation19], 4
      %s139 = int_to_ptr.vmem [resolvable:$true] %s138
      %141 = dma.hbm_to_vmem [thread:$0]  %s13, 16, %s139, [#allocation18]
    $region57: #{tree_fn.1} parent=1 // pred_fallthru
      _
    // Predicated region
    $region58: #{tree_fn.1} parent=1 // pred_check
      _
    $region59: #{tree_fn.1} parent=1 // pred_check_branch
      %143 = sbr.rel (0) target = $region61
    $region60: #{tree_fn.1} parent=1 // pred_region
      _
    $region61: #{tree_fn.1} parent=1 // pred_fallthru
      _
    // Predicated region
    $region62: #{tree_fn.1} parent=1 // pred_check
      _
    $region63: #{tree_fn.1} parent=1 // pred_check_branch
      %145 = sbr.rel (0) target = $region65
    $region64: #{tree_fn.1} parent=1 // pred_region
      %s147 = ssub.s32 512, 512
      %148 = vsyncadd [#allocation21], %s147
      %s149 = sshll.u32 [#allocation20], 4
      %s150 = int_to_ptr.vmem [resolvable:$true] %s149
      %155 = dma.hbm_to_vmem [thread:$0]  %s15, 512, %s150, [#allocation21], 128, 128, 8
    $region65: #{tree_fn.1} parent=1 // pred_fallthru
      _
    // Predicated region
    $region66: #{tree_fn.1} parent=1 // pred_check
      _
    $region67: #{tree_fn.1} parent=1 // pred_check_branch
      %157 = sbr.rel (0) target = $region69
    $region68: #{tree_fn.1} parent=1 // pred_region
      _
    $region69: #{tree_fn.1} parent=1 // pred_fallthru
      _
    // Predicated region
    $region70: #{tree_fn.1} parent=1 // pred_check
      _
    $region71: #{tree_fn.1} parent=1 // pred_check_branch
      %159 = sbr.rel (0) target = $region73
    $region72: #{tree_fn.1} parent=1 // pred_region
      _
    $region73: #{tree_fn.1} parent=1 // pred_fallthru
      _
    // Predicated region
    $region74: #{tree_fn.1} parent=1 // pred_check
      _
    $region75: #{tree_fn.1} parent=1 // pred_check_branch
      %161 = sbr.rel (0) target = $region77
    $region76: #{tree_fn.1} parent=1 // pred_region
      _
    $region77: #{tree_fn.1} parent=1 // pred_fallthru
      _
    // Predicated region
    $region78: #{tree_fn.1} parent=1 // pred_check
      _
    $region79: #{tree_fn.1} parent=1 // pred_check_branch
      %163 = sbr.rel (0) target = $region81
    $region80: #{tree_fn.1} parent=1 // pred_region
      %164 = dma.done [#allocation6], 16
    $region81: #{tree_fn.1} parent=1 // pred_fallthru
      _
    // Predicated region
    $region82: #{tree_fn.1} parent=1 // pred_check
      _
    $region83: #{tree_fn.1} parent=1 // pred_check_branch
      %166 = sbr.rel (0) target = $region85
    $region84: #{tree_fn.1} parent=1 // pred_region
      %167 = dma.done [#allocation8], 16
    $region85: #{tree_fn.1} parent=1 // pred_fallthru
      _
    // Predicated region
    $region86: #{tree_fn.1} parent=1 // pred_check
      _
    $region87: #{tree_fn.1} parent=1 // pred_check_branch
      %169 = sbr.rel (0) target = $region89
    $region88: #{tree_fn.1} parent=1 // pred_region
      %170 = dma.done [#allocation8], 48
    $region89: #{tree_fn.1} parent=1 // pred_fallthru
      _
    // Predicated region
    $region90: #{tree_fn.1} parent=1 // pred_check
      _
    $region91: #{tree_fn.1} parent=1 // pred_check_branch
      %172 = sbr.rel (0) target = $region93
    $region92: #{tree_fn.1} parent=1 // pred_region
      %173 = dma.done [#allocation5], 256
    $region93: #{tree_fn.1} parent=1 // pred_fallthru
      _
    // Predicated region
    $region94: #{tree_fn.1} parent=1 // pred_check
      _
    $region95: #{tree_fn.1} parent=1 // pred_check_branch
      %175 = sbr.rel (0) target = $region97
    $region96: #{tree_fn.1} parent=1 // pred_region
      %176 = dma.done [#allocation12], 512
    $region97: #{tree_fn.1} parent=1 // pred_fallthru
      _
    // Predicated region
    $region98: #{tree_fn.1} parent=1 // pred_check
      _
    $region99: #{tree_fn.1} parent=1 // pred_check_branch
      %178 = sbr.rel (0) target = $region101
    $region100: #{tree_fn.1} parent=1 // pred_region
      %179 = dma.done [#allocation12], 16
    $region101: #{tree_fn.1} parent=1 // pred_fallthru
      _
    // Predicated region
    $region102: #{tree_fn.1} parent=1 // pred_check
      _
    $region103: #{tree_fn.1} parent=1 // pred_check_branch
      %181 = sbr.rel (0) target = $region105
    $region104: #{tree_fn.1} parent=1 // pred_region
      %182 = dma.done [#allocation15], 256
    $region105: #{tree_fn.1} parent=1 // pred_fallthru
      _
    // Predicated region
    $region106: #{tree_fn.1} parent=1 // pred_check
      _
    $region107: #{tree_fn.1} parent=1 // pred_check_branch
      %184 = sbr.rel (0) target = $region109
    $region108: #{tree_fn.1} parent=1 // pred_region
      %185 = dma.done [#allocation15], 512
    $region109: #{tree_fn.1} parent=1 // pred_fallthru
      _
    // Predicated region
    $region110: #{tree_fn.1} parent=1 // pred_check
      _
    $region111: #{tree_fn.1} parent=1 // pred_check_branch
      %187 = sbr.rel (0) target = $region113
    $region112: #{tree_fn.1} parent=1 // pred_region
      %188 = dma.done [#allocation18], 16
    $region113: #{tree_fn.1} parent=1 // pred_fallthru
      _
    // Predicated region
    $region114: #{tree_fn.1} parent=1 // pred_check
      _
    $region115: #{tree_fn.1} parent=1 // pred_check_branch
      %190 = sbr.rel (0) target = $region117
    $region116: #{tree_fn.1} parent=1 // pred_region
      %191 = dma.done [#allocation18], 16
    $region117: #{tree_fn.1} parent=1 // pred_fallthru
      _
    // Predicated region
    $region118: #{tree_fn.1} parent=1 // pred_check
      _
    $region119: #{tree_fn.1} parent=1 // pred_check_branch
      %193 = sbr.rel (0) target = $region121
    $region120: #{tree_fn.1} parent=1 // pred_region
      %194 = dma.done [#allocation21], 512
    $region121: #{tree_fn.1} parent=1 // pred_fallthru
      _
    %195 = sfence
    %v196 = vlaneseq
    %v197 = vand.u32 %v196, 127
    %vm198 = vcmp.ge.s32.totalorder %v197, 64
    %vm199 = vcmp.lt.s32.totalorder %v197, 96
    %vm200 = vmand %vm198, %vm199
    %s201 = sld [smem:[#allocation3]]
    // While loop
    $region122: #{tree_fn.1} parent=1 // loop_pre_header
      _
    $region123: #{tree_fn.1} parent=1 // loop_header
      %s203 = sphi 0, %s205
      %p204 = scmp.ge.s32.totalorder %s203, %s201
    $region124: #{tree_fn.1} parent=1 // loop_header_branch
      %207 = sbr.rel (%p204) target = $region128
    $region125: #{tree_fn.1} parent=1 // loop_body
      %s208 = sld [smem:[#allocation4 + %s203]]
      %s209 = sld [smem:[#allocation7 + %s203]]
      %s210 = sadd.s32 %s209, 2
      %s211 = scalar_lea.vmem %s4, %s208
      %v212 = vld [vmem:[%s211] sm:$0x1]
      %vm213 = vcmask 130048
      %214 = vst.msk [vmem:[#allocation2] sm:$0xff] %vm213, 0.0
      %vm215 = vcmask 122880
      %216 = vst.msk [vmem:[#allocation2] sm:$0x1] %vm215, %v212
      %s217 = smul.u32 %s203, 6
      %s218 = sld [smem:[#allocation9 + %s217]]
      %s219 = scalar_lea.vmem %s19, %s218
      %v220 = vld [vmem:[%s219] sm:$0x1]
      %p221 = scmp.gt.s32.totalorder %s209, 0
      %s222 = scalar_select %p221, 1, 0
      %v223 = vstv %s222
      %vm224 = vcmp.eq.s32.totalorder %v223, 1
      %v225 = vsel %vm224, %v220, 0.0
      %226 = vst.msk [vmem:[#allocation2 + $0x1] sm:$0x1] %vm215, %v225
      %s227 = sadd.s32 %s217, 1
      %s228 = sld [smem:[#allocation9 + %s227]]
      %s229 = scalar_lea.vmem %s19, %s228
      %v230 = vld [vmem:[%s229] sm:$0x1]
      %p231 = scmp.gt.s32.totalorder %s209, 1
      %s232 = scalar_select %p231, 1, 0
      %v233 = vstv %s232
      %vm234 = vcmp.eq.s32.totalorder %v233, 1
      %v235 = vsel %vm234, %v230, 0.0
      %236 = vst.msk [vmem:[#allocation2 + $0x2] sm:$0x1] %vm215, %v235
      %s237 = sadd.s32 %s217, 2
      %s238 = sld [smem:[#allocation9 + %s237]]
      %s239 = scalar_lea.vmem %s19, %s238
      %v240 = vld [vmem:[%s239] sm:$0x1]
      %p241 = scmp.gt.s32.totalorder %s209, 2
      %s242 = scalar_select %p241, 1, 0
      %v243 = vstv %s242
      %vm244 = vcmp.eq.s32.totalorder %v243, 1
      %v245 = vsel %vm244, %v240, 0.0
      %246 = vst.msk [vmem:[#allocation2 + $0x3] sm:$0x1] %vm215, %v245
      %s247 = sadd.s32 %s217, 3
      %s248 = sld [smem:[#allocation9 + %s247]]
      %s249 = scalar_lea.vmem %s19, %s248
      %v250 = vld [vmem:[%s249] sm:$0x1]
      %p251 = scmp.gt.s32.totalorder %s209, 3
      %s252 = scalar_select %p251, 1, 0
      %v253 = vstv %s252
      %vm254 = vcmp.eq.s32.totalorder %v253, 1
      %v255 = vsel %vm254, %v250, 0.0
      %256 = vst.msk [vmem:[#allocation2 + $0x4] sm:$0x1] %vm215, %v255
      %s257 = sadd.s32 %s217, 4
      %s258 = sld [smem:[#allocation9 + %s257]]
      %s259 = scalar_lea.vmem %s19, %s258
      %v260 = vld [vmem:[%s259] sm:$0x1]
      %p261 = scmp.gt.s32.totalorder %s209, 4
      %s262 = scalar_select %p261, 1, 0
      %v263 = vstv %s262
      %vm264 = vcmp.eq.s32.totalorder %v263, 1
      %v265 = vsel %vm264, %v260, 0.0
      %266 = vst.msk [vmem:[#allocation2 + $0x5] sm:$0x1] %vm215, %v265
      %s267 = sadd.s32 %s217, 5
      %s268 = sld [smem:[#allocation9 + %s267]]
      %s269 = scalar_lea.vmem %s19, %s268
      %v270 = vld [vmem:[%s269] sm:$0x1]
      %p271 = scmp.gt.s32.totalorder %s209, 5
      %s272 = scalar_select %p271, 1, 0
      %v273 = vstv %s272
      %vm274 = vcmp.eq.s32.totalorder %v273, 1
      %v275 = vsel %vm274, %v270, 0.0
      %276 = vst.msk [vmem:[#allocation2 + $0x6] sm:$0x1] %vm215, %v275
      %s277 = sadd.s32 %s209, 1
      %s278 = scalar_lea.vmem [#allocation2], %s277
      %279 = vst.msk [vmem:[%s278] sm:$0x1] %vm215, %v212
      %v280 = vld [vmem:[#allocation2] sm:$0xff]
      %v281 = vld [vmem:[#allocation10] sm:$0xff]
      %v282 = vld [vmem:[#allocation10 + $0x8] sm:$0xff]
      %v283 = vld [vmem:[#allocation13] sm:$0x1]
      %v285 = vlaneseq
      %v286 = vshrl.u32 %v285, 7
      %v287 = vsub.s32 0, %v286
      %v288 = vrot.slane %v283, %v287
      %v291 = vsel %vm213, %v280, 0
      %293 = vmatprep.subr.mxu0 0.0
      %294 = vmatpush1.msra.mxu0 %v281
      %295 = vmatprep.subr.mxu0 0.0
      %296 = vmatpush1.msra.mxu0 %v282
      %297 = vmatprep.subr.mxu0 0.0
      %298 = vmatpush1.msra.mxu0 0.0
      %299 = vmatprep.subr.mxu0 0.0
      %300 = vmatpush1.msra.mxu0 0.0
      %301 = vmatprep.subr.mxu0 0.0
      %302 = vmatpush1.msra.mxu0 0.0
      %303 = vmatprep.subr.mxu0 0.0
      %304 = vmatpush1.msra.mxu0 0.0
      %305 = vmatprep.subr.mxu0 0.0
      %306 = vmatpush1.msra.mxu0 0.0
      %307 = vmatprep.subr.mxu0 0.0
      %308 = vmatpush1.msra.mxu0 0.0
      %309 = vmatprep.subr.mxu0 0.0
      %310 = vmatpush1.msra.mxu0 0.0
      %311 = vmatprep.subr.mxu0 0.0
      %312 = vmatpush1.msra.mxu0 0.0
      %313 = vmatprep.subr.mxu0 0.0
      %314 = vmatpush1.msra.mxu0 0.0
      %315 = vmatprep.subr.mxu0 0.0
      %316 = vmatpush1.msra.mxu0 0.0
      %317 = vmatprep.subr.mxu0 0.0
      %318 = vmatpush1.msra.mxu0 0.0
      %319 = vmatprep.subr.mxu0 0.0
      %320 = vmatpush1.msra.mxu0 0.0
      %321 = vmatprep.subr.mxu0 0.0
      %322 = vmatpush1.msra.mxu0 0.0
      %323 = vmatprep.subr.mxu0 0.0
      %324 = vmatpush1.msra.mxu0 0.0
      %325 = vmatprep.subr.mxu0 0.0
      %326 = vmatpush1.msra.mxu0 0.0
      %327 = vmatprep.subr.mxu0 0.0
      %328 = vmatpush1.msra.mxu0 0.0
      %329 = vmatprep.subr.mxu0 0.0
      %330 = vmatpush1.msra.mxu0 0.0
      %331 = vmatprep.subr.mxu0 0.0
      %332 = vmatpush1.msra.mxu0 0.0
      %333 = vmatprep.subr.mxu0 0.0
      %334 = vmatpush1.msra.mxu0 0.0
      %335 = vmatprep.subr.mxu0 0.0
      %336 = vmatpush1.msra.mxu0 0.0
      %337 = vmatprep.subr.mxu0 0.0
      %338 = vmatpush1.msra.mxu0 0.0
      %339 = vmatprep.subr.mxu0 0.0
      %340 = vmatpush1.msra.mxu0 0.0
      %341 = vmatprep.subr.mxu0 0.0
      %342 = vmatpush1.msra.mxu0 0.0
      %343 = vmatprep.subr.mxu0 0.0
      %344 = vmatpush1.msra.mxu0 0.0
      %345 = vmatprep.subr.mxu0 0.0
      %346 = vmatpush1.msra.mxu0 0.0
      %347 = vmatprep.subr.mxu0 0.0
      %348 = vmatpush1.msra.mxu0 0.0
      %349 = vmatprep.subr.mxu0 0.0
      %350 = vmatpush1.msra.mxu0 0.0
      %351 = vmatprep.subr.mxu0 0.0
      %352 = vmatpush1.msra.mxu0 0.0
      %353 = vmatprep.subr.mxu0 0.0
      %354 = vmatpush1.msra.mxu0 0.0
      %355 = vmatprep.subr.mxu0 0.0
      %356 = vmatpush1.msra.mxu0 0.0
      %357 = vmatprep.mubr.f32.mxu0 0.0
      %358 = vmatmul.mubr.f32.gmra.mrb[0].mxu0 %v291
      %v359 = vpop.f32.mrb[0].mxu0
      %v360 = vadd.f32 %v288, %v359
      %v361 = vpop.f32.mrb[0].mxu0
      %362 = vdwg.mxu0
      %v363 = vld [vmem:[#allocation14] sm:$0xff]
      %v364 = vld [vmem:[#allocation14 + $0x8] sm:$0xff]
      %v365 = vld [vmem:[#allocation17] sm:$0x1]
      %v367 = vlaneseq
      %v368 = vshrl.u32 %v367, 7
      %v369 = vsub.s32 0, %v368
      %v370 = vrot.slane %v365, %v369
      %372 = vmatprep.subr.mxu0 0.0
      %373 = vmatpush1.msra.mxu0 %v363
      %374 = vmatprep.subr.mxu0 0.0
      %375 = vmatpush1.msra.mxu0 %v364
      %376 = vmatprep.subr.mxu0 0.0
      %377 = vmatpush1.msra.mxu0 0.0
      %378 = vmatprep.subr.mxu0 0.0
      %379 = vmatpush1.msra.mxu0 0.0
      %380 = vmatprep.subr.mxu0 0.0
      %381 = vmatpush1.msra.mxu0 0.0
      %382 = vmatprep.subr.mxu0 0.0
      %383 = vmatpush1.msra.mxu0 0.0
      %384 = vmatprep.subr.mxu0 0.0
      %385 = vmatpush1.msra.mxu0 0.0
      %386 = vmatprep.subr.mxu0 0.0
      %387 = vmatpush1.msra.mxu0 0.0
      %388 = vmatprep.subr.mxu0 0.0
      %389 = vmatpush1.msra.mxu0 0.0
      %390 = vmatprep.subr.mxu0 0.0
      %391 = vmatpush1.msra.mxu0 0.0
      %392 = vmatprep.subr.mxu0 0.0
      %393 = vmatpush1.msra.mxu0 0.0
      %394 = vmatprep.subr.mxu0 0.0
      %395 = vmatpush1.msra.mxu0 0.0
      %396 = vmatprep.subr.mxu0 0.0
      %397 = vmatpush1.msra.mxu0 0.0
      %398 = vmatprep.subr.mxu0 0.0
      %399 = vmatpush1.msra.mxu0 0.0
      %400 = vmatprep.subr.mxu0 0.0
      %401 = vmatpush1.msra.mxu0 0.0
      %402 = vmatprep.subr.mxu0 0.0
      %403 = vmatpush1.msra.mxu0 0.0
      %404 = vmatprep.subr.mxu0 0.0
      %405 = vmatpush1.msra.mxu0 0.0
      %406 = vmatprep.subr.mxu0 0.0
      %407 = vmatpush1.msra.mxu0 0.0
      %408 = vmatprep.subr.mxu0 0.0
      %409 = vmatpush1.msra.mxu0 0.0
      %410 = vmatprep.subr.mxu0 0.0
      %411 = vmatpush1.msra.mxu0 0.0
      %412 = vmatprep.subr.mxu0 0.0
      %413 = vmatpush1.msra.mxu0 0.0
      %414 = vmatprep.subr.mxu0 0.0
      %415 = vmatpush1.msra.mxu0 0.0
      %416 = vmatprep.subr.mxu0 0.0
      %417 = vmatpush1.msra.mxu0 0.0
      %418 = vmatprep.subr.mxu0 0.0
      %419 = vmatpush1.msra.mxu0 0.0
      %420 = vmatprep.subr.mxu0 0.0
      %421 = vmatpush1.msra.mxu0 0.0
      %422 = vmatprep.subr.mxu0 0.0
      %423 = vmatpush1.msra.mxu0 0.0
      %424 = vmatprep.subr.mxu0 0.0
      %425 = vmatpush1.msra.mxu0 0.0
      %426 = vmatprep.subr.mxu0 0.0
      %427 = vmatpush1.msra.mxu0 0.0
      %428 = vmatprep.subr.mxu0 0.0
      %429 = vmatpush1.msra.mxu0 0.0
      %430 = vmatprep.subr.mxu0 0.0
      %431 = vmatpush1.msra.mxu0 0.0
      %432 = vmatprep.subr.mxu0 0.0
      %433 = vmatpush1.msra.mxu0 0.0
      %434 = vmatprep.subr.mxu0 0.0
      %435 = vmatpush1.msra.mxu0 0.0
      %436 = vmatprep.mubr.f32.mxu0 0.0
      %437 = vmatmul.mubr.f32.gmra.mrb[0].mxu0 %v291
      %v438 = vpop.f32.mrb[0].mxu0
      %v439 = vadd.f32 %v370, %v438
      %v440 = vpop.f32.mrb[0].mxu0
      %441 = vdwg.mxu0
      %v442 = vld [vmem:[#allocation11] sm:$0xff]
      %v443 = vld [vmem:[#allocation11 + $0x8] sm:$0xff]
      %v444 = vld [vmem:[#allocation11 + $0x10] sm:$0xff]
      %v445 = vld [vmem:[#allocation11 + $0x18] sm:$0xff]
      %v446 = vld [vmem:[#allocation16] sm:$0xff]
      %v447 = vld [vmem:[#allocation16 + $0x8] sm:$0xff]
      %v448 = vld [vmem:[#allocation16 + $0x10] sm:$0xff]
      %v449 = vld [vmem:[#allocation16 + $0x18] sm:$0xff]
      %p450 = scmp.gt.s32.totalorder %s210, 0
      %vm451 = vcmask 261120
      %v453 = vsel %vm451, 0.0, 0
      %455 = vmatprep.subr.mxu0 0.0
      %456 = vmatpush1.msra.mxu0 %v442
      %457 = vmatprep.subr.mxu0 0.0
      %458 = vmatpush1.msra.mxu0 %v443
      %459 = vmatprep.subr.mxu0 0.0
      %460 = vmatpush1.msra.mxu0 %v444
      %461 = vmatprep.subr.mxu0 0.0
      %462 = vmatpush1.msra.mxu0 %v445
      %463 = vmatprep.subr.mxu0 0.0
      %464 = vmatpush1.msra.mxu0 0.0
      %465 = vmatprep.subr.mxu0 0.0
      %466 = vmatpush1.msra.mxu0 0.0
      %467 = vmatprep.subr.mxu0 0.0
      %468 = vmatpush1.msra.mxu0 0.0
      %469 = vmatprep.subr.mxu0 0.0
      %470 = vmatpush1.msra.mxu0 0.0
      %471 = vmatprep.subr.mxu0 0.0
      %472 = vmatpush1.msra.mxu0 0.0
      %473 = vmatprep.subr.mxu0 0.0
      %474 = vmatpush1.msra.mxu0 0.0
      %475 = vmatprep.subr.mxu0 0.0
      %476 = vmatpush1.msra.mxu0 0.0
      %477 = vmatprep.subr.mxu0 0.0
      %478 = vmatpush1.msra.mxu0 0.0
      %479 = vmatprep.subr.mxu0 0.0
      %480 = vmatpush1.msra.mxu0 0.0
      %481 = vmatprep.subr.mxu0 0.0
      %482 = vmatpush1.msra.mxu0 0.0
      %483 = vmatprep.subr.mxu0 0.0
      %484 = vmatpush1.msra.mxu0 0.0
      %485 = vmatprep.subr.mxu0 0.0
      %486 = vmatpush1.msra.mxu0 0.0
      %487 = vmatprep.subr.mxu0 0.0
      %488 = vmatpush1.msra.mxu0 0.0
      %489 = vmatprep.subr.mxu0 0.0
      %490 = vmatpush1.msra.mxu0 0.0
      %491 = vmatprep.subr.mxu0 0.0
      %492 = vmatpush1.msra.mxu0 0.0
      %493 = vmatprep.subr.mxu0 0.0
      %494 = vmatpush1.msra.mxu0 0.0
      %495 = vmatprep.subr.mxu0 0.0
      %496 = vmatpush1.msra.mxu0 0.0
      %497 = vmatprep.subr.mxu0 0.0
      %498 = vmatpush1.msra.mxu0 0.0
      %499 = vmatprep.subr.mxu0 0.0
      %500 = vmatpush1.msra.mxu0 0.0
      %501 = vmatprep.subr.mxu0 0.0
      %502 = vmatpush1.msra.mxu0 0.0
      %503 = vmatprep.subr.mxu0 0.0
      %504 = vmatpush1.msra.mxu0 0.0
      %505 = vmatprep.subr.mxu0 0.0
      %506 = vmatpush1.msra.mxu0 0.0
      %507 = vmatprep.subr.mxu0 0.0
      %508 = vmatpush1.msra.mxu0 0.0
      %509 = vmatprep.subr.mxu0 0.0
      %510 = vmatpush1.msra.mxu0 0.0
      %511 = vmatprep.subr.mxu0 0.0
      %512 = vmatpush1.msra.mxu0 0.0
      %513 = vmatprep.subr.mxu0 0.0
      %514 = vmatpush1.msra.mxu0 0.0
      %515 = vmatprep.subr.mxu0 0.0
      %516 = vmatpush1.msra.mxu0 0.0
      %517 = vmatprep.subr.mxu0 0.0
      %518 = vmatpush1.msra.mxu0 0.0
      %519 = vmatprep.mubr.f32.mxu0 0.0
      %520 = vmatmul.mubr.f32.gmra.mrb[0].mxu0 %v453
      %v521 = vpop.f32.mrb[0].mxu0
      %v522 = vadd.f32 0.0, %v521
      %v523 = vpop.f32.mrb[0].mxu0
      %524 = vdwg.mxu0
      %v525 = vadd.f32 %v360, %v522
      %v526 = vxor.u32 %v525, 2147483648
      %v527 = vmul.f32 %v526, 1.442695
      %v528 = vpow.pop %v527
      %v529 = vadd.f32 %v528, 1.0
      %v530 = vrcp.pop %v529
      %v531 = vmul.f32 1.0, %v530
      %v532 = vtanh.pop %v525
      %v533 = vsel %vm200, %v532, %v531
      %v534 = vmul.f32 %v533, 0.0
      %536 = vrot.lane.b32.xlu0 %v533, 64
      %v537 = vpop.permute.xlu0 %536
      %v539 = vmul.f32 %v533, %v537
      %541 = vrot.lane.b32.xlu0 %v539, 32
      %v542 = vpop.permute.xlu0 %541
      %v544 = vadd.f32 %v534, %v542
      %v545 = vtanh.pop %v544
      %547 = vrot.lane.b32.xlu0 %v545, 64
      %v548 = vpop.permute.xlu0 %547
      %v550 = vmul.f32 %v533, %v548
      %s551 = scalar_select %p450, 1, 0
      %v552 = vstv %s551
      %vm553 = vcmp.eq.s32.totalorder %v552, 1
      %v554 = vsel %vm553, %v550, 0.0
      %v555 = vsel %vm553, %v544, 0.0
      %p556 = scmp.gt.s32.totalorder %s210, 1
      %558 = vrot.lane.b32.xlu0 %v554, 32
      %v559 = vpop.permute.xlu0 %558
      %v560 = vsel %vm451, %v559, 0
      %562 = vmatprep.subr.mxu0 0.0
      %563 = vmatpush1.msra.mxu0 %v442
      %564 = vmatprep.subr.mxu0 0.0
      %565 = vmatpush1.msra.mxu0 %v443
      %566 = vmatprep.subr.mxu0 0.0
      %567 = vmatpush1.msra.mxu0 %v444
      %568 = vmatprep.subr.mxu0 0.0
      %569 = vmatpush1.msra.mxu0 %v445
      %570 = vmatprep.subr.mxu0 0.0
      %571 = vmatpush1.msra.mxu0 0.0
      %572 = vmatprep.subr.mxu0 0.0
      %573 = vmatpush1.msra.mxu0 0.0
      %574 = vmatprep.subr.mxu0 0.0
      %575 = vmatpush1.msra.mxu0 0.0
      %576 = vmatprep.subr.mxu0 0.0
      %577 = vmatpush1.msra.mxu0 0.0
      %578 = vmatprep.subr.mxu0 0.0
      %579 = vmatpush1.msra.mxu0 0.0
      %580 = vmatprep.subr.mxu0 0.0
      %581 = vmatpush1.msra.mxu0 0.0
      %582 = vmatprep.subr.mxu0 0.0
      %583 = vmatpush1.msra.mxu0 0.0
      %584 = vmatprep.subr.mxu0 0.0
      %585 = vmatpush1.msra.mxu0 0.0
      %586 = vmatprep.subr.mxu0 0.0
      %587 = vmatpush1.msra.mxu0 0.0
      %588 = vmatprep.subr.mxu0 0.0
      %589 = vmatpush1.msra.mxu0 0.0
      %590 = vmatprep.subr.mxu0 0.0
      %591 = vmatpush1.msra.mxu0 0.0
      %592 = vmatprep.subr.mxu0 0.0
      %593 = vmatpush1.msra.mxu0 0.0
      %594 = vmatprep.subr.mxu0 0.0
      %595 = vmatpush1.msra.mxu0 0.0
      %596 = vmatprep.subr.mxu0 0.0
      %597 = vmatpush1.msra.mxu0 0.0
      %598 = vmatprep.subr.mxu0 0.0
      %599 = vmatpush1.msra.mxu0 0.0
      %600 = vmatprep.subr.mxu0 0.0
      %601 = vmatpush1.msra.mxu0 0.0
      %602 = vmatprep.subr.mxu0 0.0
      %603 = vmatpush1.msra.mxu0 0.0
      %604 = vmatprep.subr.mxu0 0.0
      %605 = vmatpush1.msra.mxu0 0.0
      %606 = vmatprep.subr.mxu0 0.0
      %607 = vmatpush1.msra.mxu0 0.0
      %608 = vmatprep.subr.mxu0 0.0
      %609 = vmatpush1.msra.mxu0 0.0
      %610 = vmatprep.subr.mxu0 0.0
      %611 = vmatpush1.msra.mxu0 0.0
      %612 = vmatprep.subr.mxu0 0.0
      %613 = vmatpush1.msra.mxu0 0.0
      %614 = vmatprep.subr.mxu0 0.0
      %615 = vmatpush1.msra.mxu0 0.0
      %616 = vmatprep.subr.mxu0 0.0
      %617 = vmatpush1.msra.mxu0 0.0
      %618 = vmatprep.subr.mxu0 0.0
      %619 = vmatpush1.msra.mxu0 0.0
      %620 = vmatprep.subr.mxu0 0.0
      %621 = vmatpush1.msra.mxu0 0.0
      %622 = vmatprep.subr.mxu0 0.0
      %623 = vmatpush1.msra.mxu0 0.0
      %624 = vmatprep.subr.mxu0 0.0
      %625 = vmatpush1.msra.mxu0 0.0
      %626 = vmatprep.mubr.f32.mxu0 0.0
      %627 = vmatmul.mubr.f32.gmra.mrb[0].mxu0 %v560
      %v628 = vpop.f32.mrb[0].mxu0
      %v629 = vadd.f32 0.0, %v628
      %v630 = vpop.f32.mrb[0].mxu0
      %631 = vdwg.mxu0
      %v633 = vrot.slane %v629, 7
      %v635 = vadd.f32 %v360, %v633
      %v636 = vxor.u32 %v635, 2147483648
      %v637 = vmul.f32 %v636, 1.442695
      %v638 = vpow.pop %v637
      %v639 = vadd.f32 %v638, 1.0
      %v640 = vrcp.pop %v639
      %v641 = vmul.f32 1.0, %v640
      %v642 = vtanh.pop %v635
      %v643 = vsel %vm200, %v642, %v641
      %v645 = vrot.slane %v555, 7
      %v647 = vmul.f32 %v643, %v645
      %649 = vrot.lane.b32.xlu0 %v643, 64
      %v650 = vpop.permute.xlu0 %649
      %v652 = vmul.f32 %v643, %v650
      %654 = vrot.lane.b32.xlu0 %v652, 32
      %v655 = vpop.permute.xlu0 %654
      %v657 = vadd.f32 %v647, %v655
      %v658 = vtanh.pop %v657
      %660 = vrot.lane.b32.xlu0 %v658, 64
      %v661 = vpop.permute.xlu0 %660
      %v663 = vmul.f32 %v643, %v661
      %s664 = scalar_select %p556, 1, 0
      %v665 = vstv %s664
      %vm666 = vcmp.eq.s32.totalorder %v665, 1
      %v667 = vrot.slane %v554, 7
      %v669 = vsel %vm666, %v663, %v667
      %v670 = vsel %vm666, %v657, %v645
      %p671 = scmp.gt.s32.totalorder %s210, 2
      %v673 = vrot.slane %v669, 1
      %674 = vrot.lane.b32.xlu0 %v673, 32
      %v675 = vpop.permute.xlu0 %674
      %v676 = vsel %vm451, %v675, 0
      %678 = vmatprep.subr.mxu0 0.0
      %679 = vmatpush1.msra.mxu0 %v442
      %680 = vmatprep.subr.mxu0 0.0
      %681 = vmatpush1.msra.mxu0 %v443
      %682 = vmatprep.subr.mxu0 0.0
      %683 = vmatpush1.msra.mxu0 %v444
      %684 = vmatprep.subr.mxu0 0.0
      %685 = vmatpush1.msra.mxu0 %v445
      %686 = vmatprep.subr.mxu0 0.0
      %687 = vmatpush1.msra.mxu0 0.0
      %688 = vmatprep.subr.mxu0 0.0
      %689 = vmatpush1.msra.mxu0 0.0
      %690 = vmatprep.subr.mxu0 0.0
      %691 = vmatpush1.msra.mxu0 0.0
      %692 = vmatprep.subr.mxu0 0.0
      %693 = vmatpush1.msra.mxu0 0.0
      %694 = vmatprep.subr.mxu0 0.0
      %695 = vmatpush1.msra.mxu0 0.0
      %696 = vmatprep.subr.mxu0 0.0
      %697 = vmatpush1.msra.mxu0 0.0
      %698 = vmatprep.subr.mxu0 0.0
      %699 = vmatpush1.msra.mxu0 0.0
      %700 = vmatprep.subr.mxu0 0.0
      %701 = vmatpush1.msra.mxu0 0.0
      %702 = vmatprep.subr.mxu0 0.0
      %703 = vmatpush1.msra.mxu0 0.0
      %704 = vmatprep.subr.mxu0 0.0
      %705 = vmatpush1.msra.mxu0 0.0
      %706 = vmatprep.subr.mxu0 0.0
      %707 = vmatpush1.msra.mxu0 0.0
      %708 = vmatprep.subr.mxu0 0.0
      %709 = vmatpush1.msra.mxu0 0.0
      %710 = vmatprep.subr.mxu0 0.0
      %711 = vmatpush1.msra.mxu0 0.0
      %712 = vmatprep.subr.mxu0 0.0
      %713 = vmatpush1.msra.mxu0 0.0
      %714 = vmatprep.subr.mxu0 0.0
      %715 = vmatpush1.msra.mxu0 0.0
      %716 = vmatprep.subr.mxu0 0.0
      %717 = vmatpush1.msra.mxu0 0.0
      %718 = vmatprep.subr.mxu0 0.0
      %719 = vmatpush1.msra.mxu0 0.0
      %720 = vmatprep.subr.mxu0 0.0
      %721 = vmatpush1.msra.mxu0 0.0
      %722 = vmatprep.subr.mxu0 0.0
      %723 = vmatpush1.msra.mxu0 0.0
      %724 = vmatprep.subr.mxu0 0.0
      %725 = vmatpush1.msra.mxu0 0.0
      %726 = vmatprep.subr.mxu0 0.0
      %727 = vmatpush1.msra.mxu0 0.0
      %728 = vmatprep.subr.mxu0 0.0
      %729 = vmatpush1.msra.mxu0 0.0
      %730 = vmatprep.subr.mxu0 0.0
      %731 = vmatpush1.msra.mxu0 0.0
      %732 = vmatprep.subr.mxu0 0.0
      %733 = vmatpush1.msra.mxu0 0.0
      %734 = vmatprep.subr.mxu0 0.0
      %735 = vmatpush1.msra.mxu0 0.0
      %736 = vmatprep.subr.mxu0 0.0
      %737 = vmatpush1.msra.mxu0 0.0
      %738 = vmatprep.subr.mxu0 0.0
      %739 = vmatpush1.msra.mxu0 0.0
      %740 = vmatprep.subr.mxu0 0.0
      %741 = vmatpush1.msra.mxu0 0.0
      %742 = vmatprep.mubr.f32.mxu0 0.0
      %743 = vmatmul.mubr.f32.gmra.mrb[0].mxu0 %v676
      %v744 = vpop.f32.mrb[0].mxu0
      %v745 = vadd.f32 0.0, %v744
      %v746 = vpop.f32.mrb[0].mxu0
      %747 = vdwg.mxu0
      %v749 = vrot.slane %v745, 6
      %v751 = vadd.f32 %v360, %v749
      %v752 = vxor.u32 %v751, 2147483648
      %v753 = vmul.f32 %v752, 1.442695
      %v754 = vpow.pop %v753
      %v755 = vadd.f32 %v754, 1.0
      %v756 = vrcp.pop %v755
      %v757 = vmul.f32 1.0, %v756
      %v758 = vtanh.pop %v751
      %v759 = vsel %vm200, %v758, %v757
      %v761 = vrot.slane %v670, 7
      %v763 = vmul.f32 %v759, %v761
      %765 = vrot.lane.b32.xlu0 %v759, 64
      %v766 = vpop.permute.xlu0 %765
      %v768 = vmul.f32 %v759, %v766
      %770 = vrot.lane.b32.xlu0 %v768, 32
      %v771 = vpop.permute.xlu0 %770
      %v773 = vadd.f32 %v763, %v771
      %v774 = vtanh.pop %v773
      %776 = vrot.lane.b32.xlu0 %v774, 64
      %v777 = vpop.permute.xlu0 %776
      %v779 = vmul.f32 %v759, %v777
      %s780 = scalar_select %p671, 1, 0
      %v781 = vstv %s780
      %vm782 = vcmp.eq.s32.totalorder %v781, 1
      %v783 = vrot.slane %v669, 7
      %v785 = vsel %vm782, %v779, %v783
      %v786 = vsel %vm782, %v773, %v761
      %p787 = scmp.gt.s32.totalorder %s210, 3
      %v789 = vrot.slane %v785, 2
      %790 = vrot.lane.b32.xlu0 %v789, 32
      %v791 = vpop.permute.xlu0 %790
      %v792 = vsel %vm451, %v791, 0
      %794 = vmatprep.subr.mxu0 0.0
      %795 = vmatpush1.msra.mxu0 %v442
      %796 = vmatprep.subr.mxu0 0.0
      %797 = vmatpush1.msra.mxu0 %v443
      %798 = vmatprep.subr.mxu0 0.0
      %799 = vmatpush1.msra.mxu0 %v444
      %800 = vmatprep.subr.mxu0 0.0
      %801 = vmatpush1.msra.mxu0 %v445
      %802 = vmatprep.subr.mxu0 0.0
      %803 = vmatpush1.msra.mxu0 0.0
      %804 = vmatprep.subr.mxu0 0.0
      %805 = vmatpush1.msra.mxu0 0.0
      %806 = vmatprep.subr.mxu0 0.0
      %807 = vmatpush1.msra.mxu0 0.0
      %808 = vmatprep.subr.mxu0 0.0
      %809 = vmatpush1.msra.mxu0 0.0
      %810 = vmatprep.subr.mxu0 0.0
      %811 = vmatpush1.msra.mxu0 0.0
      %812 = vmatprep.subr.mxu0 0.0
      %813 = vmatpush1.msra.mxu0 0.0
      %814 = vmatprep.subr.mxu0 0.0
      %815 = vmatpush1.msra.mxu0 0.0
      %816 = vmatprep.subr.mxu0 0.0
      %817 = vmatpush1.msra.mxu0 0.0
      %818 = vmatprep.subr.mxu0 0.0
      %819 = vmatpush1.msra.mxu0 0.0
      %820 = vmatprep.subr.mxu0 0.0
      %821 = vmatpush1.msra.mxu0 0.0
      %822 = vmatprep.subr.mxu0 0.0
      %823 = vmatpush1.msra.mxu0 0.0
      %824 = vmatprep.subr.mxu0 0.0
      %825 = vmatpush1.msra.mxu0 0.0
      %826 = vmatprep.subr.mxu0 0.0
      %827 = vmatpush1.msra.mxu0 0.0
      %828 = vmatprep.subr.mxu0 0.0
      %829 = vmatpush1.msra.mxu0 0.0
      %830 = vmatprep.subr.mxu0 0.0
      %831 = vmatpush1.msra.mxu0 0.0
      %832 = vmatprep.subr.mxu0 0.0
      %833 = vmatpush1.msra.mxu0 0.0
      %834 = vmatprep.subr.mxu0 0.0
      %835 = vmatpush1.msra.mxu0 0.0
      %836 = vmatprep.subr.mxu0 0.0
      %837 = vmatpush1.msra.mxu0 0.0
      %838 = vmatprep.subr.mxu0 0.0
      %839 = vmatpush1.msra.mxu0 0.0
      %840 = vmatprep.subr.mxu0 0.0
      %841 = vmatpush1.msra.mxu0 0.0
      %842 = vmatprep.subr.mxu0 0.0
      %843 = vmatpush1.msra.mxu0 0.0
      %844 = vmatprep.subr.mxu0 0.0
      %845 = vmatpush1.msra.mxu0 0.0
      %846 = vmatprep.subr.mxu0 0.0
      %847 = vmatpush1.msra.mxu0 0.0
      %848 = vmatprep.subr.mxu0 0.0
      %849 = vmatpush1.msra.mxu0 0.0
      %850 = vmatprep.subr.mxu0 0.0
      %851 = vmatpush1.msra.mxu0 0.0
      %852 = vmatprep.subr.mxu0 0.0
      %853 = vmatpush1.msra.mxu0 0.0
      %854 = vmatprep.subr.mxu0 0.0
      %855 = vmatpush1.msra.mxu0 0.0
      %856 = vmatprep.subr.mxu0 0.0
      %857 = vmatpush1.msra.mxu0 0.0
      %858 = vmatprep.mubr.f32.mxu0 0.0
      %859 = vmatmul.mubr.f32.gmra.mrb[0].mxu0 %v792
      %v860 = vpop.f32.mrb[0].mxu0
      %v861 = vadd.f32 0.0, %v860
      %v862 = vpop.f32.mrb[0].mxu0
      %863 = vdwg.mxu0
      %v865 = vrot.slane %v861, 5
      %v867 = vadd.f32 %v360, %v865
      %v868 = vxor.u32 %v867, 2147483648
      %v869 = vmul.f32 %v868, 1.442695
      %v870 = vpow.pop %v869
      %v871 = vadd.f32 %v870, 1.0
      %v872 = vrcp.pop %v871
      %v873 = vmul.f32 1.0, %v872
      %v874 = vtanh.pop %v867
      %v875 = vsel %vm200, %v874, %v873
      %v877 = vrot.slane %v786, 7
      %v879 = vmul.f32 %v875, %v877
      %881 = vrot.lane.b32.xlu0 %v875, 64
      %v882 = vpop.permute.xlu0 %881
      %v884 = vmul.f32 %v875, %v882
      %886 = vrot.lane.b32.xlu0 %v884, 32
      %v887 = vpop.permute.xlu0 %886
      %v889 = vadd.f32 %v879, %v887
      %v890 = vtanh.pop %v889
      %892 = vrot.lane.b32.xlu0 %v890, 64
      %v893 = vpop.permute.xlu0 %892
      %v895 = vmul.f32 %v875, %v893
      %s896 = scalar_select %p787, 1, 0
      %v897 = vstv %s896
      %vm898 = vcmp.eq.s32.totalorder %v897, 1
      %v899 = vrot.slane %v785, 7
      %v901 = vsel %vm898, %v895, %v899
      %v902 = vsel %vm898, %v889, %v877
      %p903 = scmp.gt.s32.totalorder %s210, 4
      %v905 = vrot.slane %v901, 3
      %906 = vrot.lane.b32.xlu0 %v905, 32
      %v907 = vpop.permute.xlu0 %906
      %v908 = vsel %vm451, %v907, 0
      %910 = vmatprep.subr.mxu0 0.0
      %911 = vmatpush1.msra.mxu0 %v442
      %912 = vmatprep.subr.mxu0 0.0
      %913 = vmatpush1.msra.mxu0 %v443
      %914 = vmatprep.subr.mxu0 0.0
      %915 = vmatpush1.msra.mxu0 %v444
      %916 = vmatprep.subr.mxu0 0.0
      %917 = vmatpush1.msra.mxu0 %v445
      %918 = vmatprep.subr.mxu0 0.0
      %919 = vmatpush1.msra.mxu0 0.0
      %920 = vmatprep.subr.mxu0 0.0
      %921 = vmatpush1.msra.mxu0 0.0
      %922 = vmatprep.subr.mxu0 0.0
      %923 = vmatpush1.msra.mxu0 0.0
      %924 = vmatprep.subr.mxu0 0.0
      %925 = vmatpush1.msra.mxu0 0.0
      %926 = vmatprep.subr.mxu0 0.0
      %927 = vmatpush1.msra.mxu0 0.0
      %928 = vmatprep.subr.mxu0 0.0
      %929 = vmatpush1.msra.mxu0 0.0
      %930 = vmatprep.subr.mxu0 0.0
      %931 = vmatpush1.msra.mxu0 0.0
      %932 = vmatprep.subr.mxu0 0.0
      %933 = vmatpush1.msra.mxu0 0.0
      %934 = vmatprep.subr.mxu0 0.0
      %935 = vmatpush1.msra.mxu0 0.0
      %936 = vmatprep.subr.mxu0 0.0
      %937 = vmatpush1.msra.mxu0 0.0
      %938 = vmatprep.subr.mxu0 0.0
      %939 = vmatpush1.msra.mxu0 0.0
      %940 = vmatprep.subr.mxu0 0.0
      %941 = vmatpush1.msra.mxu0 0.0
      %942 = vmatprep.subr.mxu0 0.0
      %943 = vmatpush1.msra.mxu0 0.0
      %944 = vmatprep.subr.mxu0 0.0
      %945 = vmatpush1.msra.mxu0 0.0
      %946 = vmatprep.subr.mxu0 0.0
      %947 = vmatpush1.msra.mxu0 0.0
      %948 = vmatprep.subr.mxu0 0.0
      %949 = vmatpush1.msra.mxu0 0.0
      %950 = vmatprep.subr.mxu0 0.0
      %951 = vmatpush1.msra.mxu0 0.0
      %952 = vmatprep.subr.mxu0 0.0
      %953 = vmatpush1.msra.mxu0 0.0
      %954 = vmatprep.subr.mxu0 0.0
      %955 = vmatpush1.msra.mxu0 0.0
      %956 = vmatprep.subr.mxu0 0.0
      %957 = vmatpush1.msra.mxu0 0.0
      %958 = vmatprep.subr.mxu0 0.0
      %959 = vmatpush1.msra.mxu0 0.0
      %960 = vmatprep.subr.mxu0 0.0
      %961 = vmatpush1.msra.mxu0 0.0
      %962 = vmatprep.subr.mxu0 0.0
      %963 = vmatpush1.msra.mxu0 0.0
      %964 = vmatprep.subr.mxu0 0.0
      %965 = vmatpush1.msra.mxu0 0.0
      %966 = vmatprep.subr.mxu0 0.0
      %967 = vmatpush1.msra.mxu0 0.0
      %968 = vmatprep.subr.mxu0 0.0
      %969 = vmatpush1.msra.mxu0 0.0
      %970 = vmatprep.subr.mxu0 0.0
      %971 = vmatpush1.msra.mxu0 0.0
      %972 = vmatprep.subr.mxu0 0.0
      %973 = vmatpush1.msra.mxu0 0.0
      %974 = vmatprep.mubr.f32.mxu0 0.0
      %975 = vmatmul.mubr.f32.gmra.mrb[0].mxu0 %v908
      %v976 = vpop.f32.mrb[0].mxu0
      %v977 = vadd.f32 0.0, %v976
      %v978 = vpop.f32.mrb[0].mxu0
      %979 = vdwg.mxu0
      %v981 = vrot.slane %v977, 4
      %v983 = vadd.f32 %v360, %v981
      %v984 = vxor.u32 %v983, 2147483648
      %v985 = vmul.f32 %v984, 1.442695
      %v986 = vpow.pop %v985
      %v987 = vadd.f32 %v986, 1.0
      %v988 = vrcp.pop %v987
      %v989 = vmul.f32 1.0, %v988
      %v990 = vtanh.pop %v983
      %v991 = vsel %vm200, %v990, %v989
      %v993 = vrot.slane %v902, 7
      %v995 = vmul.f32 %v991, %v993
      %997 = vrot.lane.b32.xlu0 %v991, 64
      %v998 = vpop.permute.xlu0 %997
      %v1000 = vmul.f32 %v991, %v998
      %1002 = vrot.lane.b32.xlu0 %v1000, 32
      %v1003 = vpop.permute.xlu0 %1002
      %v1005 = vadd.f32 %v995, %v1003
      %v1006 = vtanh.pop %v1005
      %1008 = vrot.lane.b32.xlu0 %v1006, 64
      %v1009 = vpop.permute.xlu0 %1008
      %v1011 = vmul.f32 %v991, %v1009
      %s1012 = scalar_select %p903, 1, 0
      %v1013 = vstv %s1012
      %vm1014 = vcmp.eq.s32.totalorder %v1013, 1
      %v1015 = vrot.slane %v901, 7
      %v1017 = vsel %vm1014, %v1011, %v1015
      %v1018 = vsel %vm1014, %v1005, %v993
      %p1019 = scmp.gt.s32.totalorder %s210, 5
      %v1021 = vrot.slane %v1017, 4
      %1022 = vrot.lane.b32.xlu0 %v1021, 32
      %v1023 = vpop.permute.xlu0 %1022
      %v1024 = vsel %vm451, %v1023, 0
      %1026 = vmatprep.subr.mxu0 0.0
      %1027 = vmatpush1.msra.mxu0 %v442
      %1028 = vmatprep.subr.mxu0 0.0
      %1029 = vmatpush1.msra.mxu0 %v443
      %1030 = vmatprep.subr.mxu0 0.0
      %1031 = vmatpush1.msra.mxu0 %v444
      %1032 = vmatprep.subr.mxu0 0.0
      %1033 = vmatpush1.msra.mxu0 %v445
      %1034 = vmatprep.subr.mxu0 0.0
      %1035 = vmatpush1.msra.mxu0 0.0
      %1036 = vmatprep.subr.mxu0 0.0
      %1037 = vmatpush1.msra.mxu0 0.0
      %1038 = vmatprep.subr.mxu0 0.0
      %1039 = vmatpush1.msra.mxu0 0.0
      %1040 = vmatprep.subr.mxu0 0.0
      %1041 = vmatpush1.msra.mxu0 0.0
      %1042 = vmatprep.subr.mxu0 0.0
      %1043 = vmatpush1.msra.mxu0 0.0
      %1044 = vmatprep.subr.mxu0 0.0
      %1045 = vmatpush1.msra.mxu0 0.0
      %1046 = vmatprep.subr.mxu0 0.0
      %1047 = vmatpush1.msra.mxu0 0.0
      %1048 = vmatprep.subr.mxu0 0.0
      %1049 = vmatpush1.msra.mxu0 0.0
      %1050 = vmatprep.subr.mxu0 0.0
      %1051 = vmatpush1.msra.mxu0 0.0
      %1052 = vmatprep.subr.mxu0 0.0
      %1053 = vmatpush1.msra.mxu0 0.0
      %1054 = vmatprep.subr.mxu0 0.0
      %1055 = vmatpush1.msra.mxu0 0.0
      %1056 = vmatprep.subr.mxu0 0.0
      %1057 = vmatpush1.msra.mxu0 0.0
      %1058 = vmatprep.subr.mxu0 0.0
      %1059 = vmatpush1.msra.mxu0 0.0
      %1060 = vmatprep.subr.mxu0 0.0
      %1061 = vmatpush1.msra.mxu0 0.0
      %1062 = vmatprep.subr.mxu0 0.0
      %1063 = vmatpush1.msra.mxu0 0.0
      %1064 = vmatprep.subr.mxu0 0.0
      %1065 = vmatpush1.msra.mxu0 0.0
      %1066 = vmatprep.subr.mxu0 0.0
      %1067 = vmatpush1.msra.mxu0 0.0
      %1068 = vmatprep.subr.mxu0 0.0
      %1069 = vmatpush1.msra.mxu0 0.0
      %1070 = vmatprep.subr.mxu0 0.0
      %1071 = vmatpush1.msra.mxu0 0.0
      %1072 = vmatprep.subr.mxu0 0.0
      %1073 = vmatpush1.msra.mxu0 0.0
      %1074 = vmatprep.subr.mxu0 0.0
      %1075 = vmatpush1.msra.mxu0 0.0
      %1076 = vmatprep.subr.mxu0 0.0
      %1077 = vmatpush1.msra.mxu0 0.0
      %1078 = vmatprep.subr.mxu0 0.0
      %1079 = vmatpush1.msra.mxu0 0.0
      %1080 = vmatprep.subr.mxu0 0.0
      %1081 = vmatpush1.msra.mxu0 0.0
      %1082 = vmatprep.subr.mxu0 0.0
      %1083 = vmatpush1.msra.mxu0 0.0
      %1084 = vmatprep.subr.mxu0 0.0
      %1085 = vmatpush1.msra.mxu0 0.0
      %1086 = vmatprep.subr.mxu0 0.0
      %1087 = vmatpush1.msra.mxu0 0.0
      %1088 = vmatprep.subr.mxu0 0.0
      %1089 = vmatpush1.msra.mxu0 0.0
      %1090 = vmatprep.mubr.f32.mxu0 0.0
      %1091 = vmatmul.mubr.f32.gmra.mrb[0].mxu0 %v1024
      %v1092 = vpop.f32.mrb[0].mxu0
      %v1093 = vadd.f32 0.0, %v1092
      %v1094 = vpop.f32.mrb[0].mxu0
      %1095 = vdwg.mxu0
      %v1097 = vrot.slane %v1093, 3
      %v1099 = vadd.f32 %v360, %v1097
      %v1100 = vxor.u32 %v1099, 2147483648
      %v1101 = vmul.f32 %v1100, 1.442695
      %v1102 = vpow.pop %v1101
      %v1103 = vadd.f32 %v1102, 1.0
      %v1104 = vrcp.pop %v1103
      %v1105 = vmul.f32 1.0, %v1104
      %v1106 = vtanh.pop %v1099
      %v1107 = vsel %vm200, %v1106, %v1105
      %v1109 = vrot.slane %v1018, 7
      %v1111 = vmul.f32 %v1107, %v1109
      %1113 = vrot.lane.b32.xlu0 %v1107, 64
      %v1114 = vpop.permute.xlu0 %1113
      %v1116 = vmul.f32 %v1107, %v1114
      %1118 = vrot.lane.b32.xlu0 %v1116, 32
      %v1119 = vpop.permute.xlu0 %1118
      %v1121 = vadd.f32 %v1111, %v1119
      %v1122 = vtanh.pop %v1121
      %1124 = vrot.lane.b32.xlu0 %v1122, 64
      %v1125 = vpop.permute.xlu0 %1124
      %v1127 = vmul.f32 %v1107, %v1125
      %s1128 = scalar_select %p1019, 1, 0
      %v1129 = vstv %s1128
      %vm1130 = vcmp.eq.s32.totalorder %v1129, 1
      %v1131 = vrot.slane %v1017, 7
      %v1133 = vsel %vm1130, %v1127, %v1131
      %v1134 = vsel %vm1130, %v1121, %v1109
      %p1135 = scmp.gt.s32.totalorder %s210, 6
      %v1137 = vrot.slane %v1133, 5
      %1138 = vrot.lane.b32.xlu0 %v1137, 32
      %v1139 = vpop.permute.xlu0 %1138
      %v1140 = vsel %vm451, %v1139, 0
      %1142 = vmatprep.subr.mxu0 0.0
      %1143 = vmatpush1.msra.mxu0 %v442
      %1144 = vmatprep.subr.mxu0 0.0
      %1145 = vmatpush1.msra.mxu0 %v443
      %1146 = vmatprep.subr.mxu0 0.0
      %1147 = vmatpush1.msra.mxu0 %v444
      %1148 = vmatprep.subr.mxu0 0.0
      %1149 = vmatpush1.msra.mxu0 %v445
      %1150 = vmatprep.subr.mxu0 0.0
      %1151 = vmatpush1.msra.mxu0 0.0
      %1152 = vmatprep.subr.mxu0 0.0
      %1153 = vmatpush1.msra.mxu0 0.0
      %1154 = vmatprep.subr.mxu0 0.0
      %1155 = vmatpush1.msra.mxu0 0.0
      %1156 = vmatprep.subr.mxu0 0.0
      %1157 = vmatpush1.msra.mxu0 0.0
      %1158 = vmatprep.subr.mxu0 0.0
      %1159 = vmatpush1.msra.mxu0 0.0
      %1160 = vmatprep.subr.mxu0 0.0
      %1161 = vmatpush1.msra.mxu0 0.0
      %1162 = vmatprep.subr.mxu0 0.0
      %1163 = vmatpush1.msra.mxu0 0.0
      %1164 = vmatprep.subr.mxu0 0.0
      %1165 = vmatpush1.msra.mxu0 0.0
      %1166 = vmatprep.subr.mxu0 0.0
      %1167 = vmatpush1.msra.mxu0 0.0
      %1168 = vmatprep.subr.mxu0 0.0
      %1169 = vmatpush1.msra.mxu0 0.0
      %1170 = vmatprep.subr.mxu0 0.0
      %1171 = vmatpush1.msra.mxu0 0.0
      %1172 = vmatprep.subr.mxu0 0.0
      %1173 = vmatpush1.msra.mxu0 0.0
      %1174 = vmatprep.subr.mxu0 0.0
      %1175 = vmatpush1.msra.mxu0 0.0
      %1176 = vmatprep.subr.mxu0 0.0
      %1177 = vmatpush1.msra.mxu0 0.0
      %1178 = vmatprep.subr.mxu0 0.0
      %1179 = vmatpush1.msra.mxu0 0.0
      %1180 = vmatprep.subr.mxu0 0.0
      %1181 = vmatpush1.msra.mxu0 0.0
      %1182 = vmatprep.subr.mxu0 0.0
      %1183 = vmatpush1.msra.mxu0 0.0
      %1184 = vmatprep.subr.mxu0 0.0
      %1185 = vmatpush1.msra.mxu0 0.0
      %1186 = vmatprep.subr.mxu0 0.0
      %1187 = vmatpush1.msra.mxu0 0.0
      %1188 = vmatprep.subr.mxu0 0.0
      %1189 = vmatpush1.msra.mxu0 0.0
      %1190 = vmatprep.subr.mxu0 0.0
      %1191 = vmatpush1.msra.mxu0 0.0
      %1192 = vmatprep.subr.mxu0 0.0
      %1193 = vmatpush1.msra.mxu0 0.0
      %1194 = vmatprep.subr.mxu0 0.0
      %1195 = vmatpush1.msra.mxu0 0.0
      %1196 = vmatprep.subr.mxu0 0.0
      %1197 = vmatpush1.msra.mxu0 0.0
      %1198 = vmatprep.subr.mxu0 0.0
      %1199 = vmatpush1.msra.mxu0 0.0
      %1200 = vmatprep.subr.mxu0 0.0
      %1201 = vmatpush1.msra.mxu0 0.0
      %1202 = vmatprep.subr.mxu0 0.0
      %1203 = vmatpush1.msra.mxu0 0.0
      %1204 = vmatprep.subr.mxu0 0.0
      %1205 = vmatpush1.msra.mxu0 0.0
      %1206 = vmatprep.mubr.f32.mxu0 0.0
      %1207 = vmatmul.mubr.f32.gmra.mrb[0].mxu0 %v1140
      %v1208 = vpop.f32.mrb[0].mxu0
      %v1209 = vadd.f32 0.0, %v1208
      %v1210 = vpop.f32.mrb[0].mxu0
      %1211 = vdwg.mxu0
      %v1213 = vrot.slane %v1209, 2
      %v1215 = vadd.f32 %v360, %v1213
      %v1216 = vxor.u32 %v1215, 2147483648
      %v1217 = vmul.f32 %v1216, 1.442695
      %v1218 = vpow.pop %v1217
      %v1219 = vadd.f32 %v1218, 1.0
      %v1220 = vrcp.pop %v1219
      %v1221 = vmul.f32 1.0, %v1220
      %v1222 = vtanh.pop %v1215
      %v1223 = vsel %vm200, %v1222, %v1221
      %v1225 = vrot.slane %v1134, 7
      %v1227 = vmul.f32 %v1223, %v1225
      %1229 = vrot.lane.b32.xlu0 %v1223, 64
      %v1230 = vpop.permute.xlu0 %1229
      %v1232 = vmul.f32 %v1223, %v1230
      %1234 = vrot.lane.b32.xlu0 %v1232, 32
      %v1235 = vpop.permute.xlu0 %1234
      %v1237 = vadd.f32 %v1227, %v1235
      %v1238 = vtanh.pop %v1237
      %1240 = vrot.lane.b32.xlu0 %v1238, 64
      %v1241 = vpop.permute.xlu0 %1240
      %v1243 = vmul.f32 %v1223, %v1241
      %s1244 = scalar_select %p1135, 1, 0
      %v1245 = vstv %s1244
      %vm1246 = vcmp.eq.s32.totalorder %v1245, 1
      %v1247 = vrot.slane %v1133, 7
      %v1249 = vsel %vm1246, %v1243, %v1247
      %v1250 = vsel %vm1246, %v1237, %v1225
      %p1251 = scmp.gt.s32.totalorder %s210, 7
      %v1253 = vrot.slane %v1249, 6
      %1254 = vrot.lane.b32.xlu0 %v1253, 32
      %v1255 = vpop.permute.xlu0 %1254
      %v1256 = vsel %vm451, %v1255, 0
      %1258 = vmatprep.subr.mxu0 0.0
      %1259 = vmatpush1.msra.mxu0 %v442
      %1260 = vmatprep.subr.mxu0 0.0
      %1261 = vmatpush1.msra.mxu0 %v443
      %1262 = vmatprep.subr.mxu0 0.0
      %1263 = vmatpush1.msra.mxu0 %v444
      %1264 = vmatprep.subr.mxu0 0.0
      %1265 = vmatpush1.msra.mxu0 %v445
      %1266 = vmatprep.subr.mxu0 0.0
      %1267 = vmatpush1.msra.mxu0 0.0
      %1268 = vmatprep.subr.mxu0 0.0
      %1269 = vmatpush1.msra.mxu0 0.0
      %1270 = vmatprep.subr.mxu0 0.0
      %1271 = vmatpush1.msra.mxu0 0.0
      %1272 = vmatprep.subr.mxu0 0.0
      %1273 = vmatpush1.msra.mxu0 0.0
      %1274 = vmatprep.subr.mxu0 0.0
      %1275 = vmatpush1.msra.mxu0 0.0
      %1276 = vmatprep.subr.mxu0 0.0
      %1277 = vmatpush1.msra.mxu0 0.0
      %1278 = vmatprep.subr.mxu0 0.0
      %1279 = vmatpush1.msra.mxu0 0.0
      %1280 = vmatprep.subr.mxu0 0.0
      %1281 = vmatpush1.msra.mxu0 0.0
      %1282 = vmatprep.subr.mxu0 0.0
      %1283 = vmatpush1.msra.mxu0 0.0
      %1284 = vmatprep.subr.mxu0 0.0
      %1285 = vmatpush1.msra.mxu0 0.0
      %1286 = vmatprep.subr.mxu0 0.0
      %1287 = vmatpush1.msra.mxu0 0.0
      %1288 = vmatprep.subr.mxu0 0.0
      %1289 = vmatpush1.msra.mxu0 0.0
      %1290 = vmatprep.subr.mxu0 0.0
      %1291 = vmatpush1.msra.mxu0 0.0
      %1292 = vmatprep.subr.mxu0 0.0
      %1293 = vmatpush1.msra.mxu0 0.0
      %1294 = vmatprep.subr.mxu0 0.0
      %1295 = vmatpush1.msra.mxu0 0.0
      %1296 = vmatprep.subr.mxu0 0.0
      %1297 = vmatpush1.msra.mxu0 0.0
      %1298 = vmatprep.subr.mxu0 0.0
      %1299 = vmatpush1.msra.mxu0 0.0
      %1300 = vmatprep.subr.mxu0 0.0
      %1301 = vmatpush1.msra.mxu0 0.0
      %1302 = vmatprep.subr.mxu0 0.0
      %1303 = vmatpush1.msra.mxu0 0.0
      %1304 = vmatprep.subr.mxu0 0.0
      %1305 = vmatpush1.msra.mxu0 0.0
      %1306 = vmatprep.subr.mxu0 0.0
      %1307 = vmatpush1.msra.mxu0 0.0
      %1308 = vmatprep.subr.mxu0 0.0
      %1309 = vmatpush1.msra.mxu0 0.0
      %1310 = vmatprep.subr.mxu0 0.0
      %1311 = vmatpush1.msra.mxu0 0.0
      %1312 = vmatprep.subr.mxu0 0.0
      %1313 = vmatpush1.msra.mxu0 0.0
      %1314 = vmatprep.subr.mxu0 0.0
      %1315 = vmatpush1.msra.mxu0 0.0
      %1316 = vmatprep.subr.mxu0 0.0
      %1317 = vmatpush1.msra.mxu0 0.0
      %1318 = vmatprep.subr.mxu0 0.0
      %1319 = vmatpush1.msra.mxu0 0.0
      %1320 = vmatprep.subr.mxu0 0.0
      %1321 = vmatpush1.msra.mxu0 0.0
      %1322 = vmatprep.mubr.f32.mxu0 0.0
      %1323 = vmatmul.mubr.f32.gmra.mrb[0].mxu0 %v1256
      %v1324 = vpop.f32.mrb[0].mxu0
      %v1325 = vadd.f32 0.0, %v1324
      %v1326 = vpop.f32.mrb[0].mxu0
      %1327 = vdwg.mxu0
      %v1329 = vrot.slane %v1325, 1
      %v1331 = vadd.f32 %v360, %v1329
      %v1332 = vxor.u32 %v1331, 2147483648
      %v1333 = vmul.f32 %v1332, 1.442695
      %v1334 = vpow.pop %v1333
      %v1335 = vadd.f32 %v1334, 1.0
      %v1336 = vrcp.pop %v1335
      %v1337 = vmul.f32 1.0, %v1336
      %v1338 = vtanh.pop %v1331
      %v1339 = vsel %vm200, %v1338, %v1337
      %v1341 = vrot.slane %v1250, 7
      %v1343 = vmul.f32 %v1339, %v1341
      %1345 = vrot.lane.b32.xlu0 %v1339, 64
      %v1346 = vpop.permute.xlu0 %1345
      %v1348 = vmul.f32 %v1339, %v1346
      %1350 = vrot.lane.b32.xlu0 %v1348, 32
      %v1351 = vpop.permute.xlu0 %1350
      %v1353 = vadd.f32 %v1343, %v1351
      %v1354 = vtanh.pop %v1353
      %1356 = vrot.lane.b32.xlu0 %v1354, 64
      %v1357 = vpop.permute.xlu0 %1356
      %v1359 = vmul.f32 %v1339, %v1357
      %s1360 = scalar_select %p1251, 1, 0
      %v1361 = vstv %s1360
      %vm1362 = vcmp.eq.s32.totalorder %v1361, 1
      %v1363 = vrot.slane %v1249, 7
      %v1365 = vsel %vm1362, %v1359, %v1363
      %1366 = vmatprep.subr.mxu0 0.0
      %1367 = vmatpush1.msra.mxu0 %v446
      %1368 = vmatprep.subr.mxu0 0.0
      %1369 = vmatpush1.msra.mxu0 %v447
      %1370 = vmatprep.subr.mxu0 0.0
      %1371 = vmatpush1.msra.mxu0 %v448
      %1372 = vmatprep.subr.mxu0 0.0
      %1373 = vmatpush1.msra.mxu0 %v449
      %1374 = vmatprep.subr.mxu0 0.0
      %1375 = vmatpush1.msra.mxu0 0.0
      %1376 = vmatprep.subr.mxu0 0.0
      %1377 = vmatpush1.msra.mxu0 0.0
      %1378 = vmatprep.subr.mxu0 0.0
      %1379 = vmatpush1.msra.mxu0 0.0
      %1380 = vmatprep.subr.mxu0 0.0
      %1381 = vmatpush1.msra.mxu0 0.0
      %1382 = vmatprep.subr.mxu0 0.0
      %1383 = vmatpush1.msra.mxu0 0.0
      %1384 = vmatprep.subr.mxu0 0.0
      %1385 = vmatpush1.msra.mxu0 0.0
      %1386 = vmatprep.subr.mxu0 0.0
      %1387 = vmatpush1.msra.mxu0 0.0
      %1388 = vmatprep.subr.mxu0 0.0
      %1389 = vmatpush1.msra.mxu0 0.0
      %1390 = vmatprep.subr.mxu0 0.0
      %1391 = vmatpush1.msra.mxu0 0.0
      %1392 = vmatprep.subr.mxu0 0.0
      %1393 = vmatpush1.msra.mxu0 0.0
      %1394 = vmatprep.subr.mxu0 0.0
      %1395 = vmatpush1.msra.mxu0 0.0
      %1396 = vmatprep.subr.mxu0 0.0
      %1397 = vmatpush1.msra.mxu0 0.0
      %1398 = vmatprep.subr.mxu0 0.0
      %1399 = vmatpush1.msra.mxu0 0.0
      %1400 = vmatprep.subr.mxu0 0.0
      %1401 = vmatpush1.msra.mxu0 0.0
      %1402 = vmatprep.subr.mxu0 0.0
      %1403 = vmatpush1.msra.mxu0 0.0
      %1404 = vmatprep.subr.mxu0 0.0
      %1405 = vmatpush1.msra.mxu0 0.0
      %1406 = vmatprep.subr.mxu0 0.0
      %1407 = vmatpush1.msra.mxu0 0.0
      %1408 = vmatprep.subr.mxu0 0.0
      %1409 = vmatpush1.msra.mxu0 0.0
      %1410 = vmatprep.subr.mxu0 0.0
      %1411 = vmatpush1.msra.mxu0 0.0
      %1412 = vmatprep.subr.mxu0 0.0
      %1413 = vmatpush1.msra.mxu0 0.0
      %1414 = vmatprep.subr.mxu0 0.0
      %1415 = vmatpush1.msra.mxu0 0.0
      %1416 = vmatprep.subr.mxu0 0.0
      %1417 = vmatpush1.msra.mxu0 0.0
      %1418 = vmatprep.subr.mxu0 0.0
      %1419 = vmatpush1.msra.mxu0 0.0
      %1420 = vmatprep.subr.mxu0 0.0
      %1421 = vmatpush1.msra.mxu0 0.0
      %1422 = vmatprep.subr.mxu0 0.0
      %1423 = vmatpush1.msra.mxu0 0.0
      %1424 = vmatprep.subr.mxu0 0.0
      %1425 = vmatpush1.msra.mxu0 0.0
      %1426 = vmatprep.subr.mxu0 0.0
      %1427 = vmatpush1.msra.mxu0 0.0
      %1428 = vmatprep.subr.mxu0 0.0
      %1429 = vmatpush1.msra.mxu0 0.0
      %1430 = vmatprep.mubr.f32.mxu0 0.0
      %1431 = vmatmul.mubr.f32.gmra.mrb[0].mxu0 %v453
      %v1432 = vpop.f32.mrb[0].mxu0
      %v1433 = vadd.f32 0.0, %v1432
      %v1434 = vpop.f32.mrb[0].mxu0
      %1435 = vdwg.mxu0
      %v1437 = vrot.slane %v1433, 1
      %v1439 = vadd.f32 %v439, %v1437
      %v1440 = vxor.u32 %v1439, 2147483648
      %v1441 = vmul.f32 %v1440, 1.442695
      %v1442 = vpow.pop %v1441
      %v1443 = vadd.f32 %v1442, 1.0
      %v1444 = vrcp.pop %v1443
      %v1445 = vmul.f32 1.0, %v1444
      %v1446 = vtanh.pop %v1439
      %v1447 = vsel %vm200, %v1446, %v1445
      %v1448 = vmul.f32 %v1447, 0.0
      %1450 = vrot.lane.b32.xlu0 %v1447, 64
      %v1451 = vpop.permute.xlu0 %1450
      %v1453 = vmul.f32 %v1447, %v1451
      %1455 = vrot.lane.b32.xlu0 %v1453, 32
      %v1456 = vpop.permute.xlu0 %1455
      %v1458 = vadd.f32 %v1448, %v1456
      %v1459 = vtanh.pop %v1458
      %1461 = vrot.lane.b32.xlu0 %v1459, 64
      %v1462 = vpop.permute.xlu0 %1461
      %v1464 = vmul.f32 %v1447, %v1462
      %v1465 = vsel %vm1362, %v1464, 0.0
      %v1466 = vsel %vm1362, %v1458, 0.0
      %v1468 = vrot.slane %v1465, 7
      %1469 = vrot.lane.b32.xlu0 %v1468, 32
      %v1470 = vpop.permute.xlu0 %1469
      %v1471 = vsel %vm451, %v1470, 0
      %1473 = vmatprep.subr.mxu0 0.0
      %1474 = vmatpush1.msra.mxu0 %v446
      %1475 = vmatprep.subr.mxu0 0.0
      %1476 = vmatpush1.msra.mxu0 %v447
      %1477 = vmatprep.subr.mxu0 0.0
      %1478 = vmatpush1.msra.mxu0 %v448
      %1479 = vmatprep.subr.mxu0 0.0
      %1480 = vmatpush1.msra.mxu0 %v449
      %1481 = vmatprep.subr.mxu0 0.0
      %1482 = vmatpush1.msra.mxu0 0.0
      %1483 = vmatprep.subr.mxu0 0.0
      %1484 = vmatpush1.msra.mxu0 0.0
      %1485 = vmatprep.subr.mxu0 0.0
      %1486 = vmatpush1.msra.mxu0 0.0
      %1487 = vmatprep.subr.mxu0 0.0
      %1488 = vmatpush1.msra.mxu0 0.0
      %1489 = vmatprep.subr.mxu0 0.0
      %1490 = vmatpush1.msra.mxu0 0.0
      %1491 = vmatprep.subr.mxu0 0.0
      %1492 = vmatpush1.msra.mxu0 0.0
      %1493 = vmatprep.subr.mxu0 0.0
      %1494 = vmatpush1.msra.mxu0 0.0
      %1495 = vmatprep.subr.mxu0 0.0
      %1496 = vmatpush1.msra.mxu0 0.0
      %1497 = vmatprep.subr.mxu0 0.0
      %1498 = vmatpush1.msra.mxu0 0.0
      %1499 = vmatprep.subr.mxu0 0.0
      %1500 = vmatpush1.msra.mxu0 0.0
      %1501 = vmatprep.subr.mxu0 0.0
      %1502 = vmatpush1.msra.mxu0 0.0
      %1503 = vmatprep.subr.mxu0 0.0
      %1504 = vmatpush1.msra.mxu0 0.0
      %1505 = vmatprep.subr.mxu0 0.0
      %1506 = vmatpush1.msra.mxu0 0.0
      %1507 = vmatprep.subr.mxu0 0.0
      %1508 = vmatpush1.msra.mxu0 0.0
      %1509 = vmatprep.subr.mxu0 0.0
      %1510 = vmatpush1.msra.mxu0 0.0
      %1511 = vmatprep.subr.mxu0 0.0
      %1512 = vmatpush1.msra.mxu0 0.0
      %1513 = vmatprep.subr.mxu0 0.0
      %1514 = vmatpush1.msra.mxu0 0.0
      %1515 = vmatprep.subr.mxu0 0.0
      %1516 = vmatpush1.msra.mxu0 0.0
      %1517 = vmatprep.subr.mxu0 0.0
      %1518 = vmatpush1.msra.mxu0 0.0
      %1519 = vmatprep.subr.mxu0 0.0
      %1520 = vmatpush1.msra.mxu0 0.0
      %1521 = vmatprep.subr.mxu0 0.0
      %1522 = vmatpush1.msra.mxu0 0.0
      %1523 = vmatprep.subr.mxu0 0.0
      %1524 = vmatpush1.msra.mxu0 0.0
      %1525 = vmatprep.subr.mxu0 0.0
      %1526 = vmatpush1.msra.mxu0 0.0
      %1527 = vmatprep.subr.mxu0 0.0
      %1528 = vmatpush1.msra.mxu0 0.0
      %1529 = vmatprep.subr.mxu0 0.0
      %1530 = vmatpush1.msra.mxu0 0.0
      %1531 = vmatprep.subr.mxu0 0.0
      %1532 = vmatpush1.msra.mxu0 0.0
      %1533 = vmatprep.subr.mxu0 0.0
      %1534 = vmatpush1.msra.mxu0 0.0
      %1535 = vmatprep.subr.mxu0 0.0
      %1536 = vmatpush1.msra.mxu0 0.0
      %1537 = vmatprep.mubr.f32.mxu0 0.0
      %1538 = vmatmul.mubr.f32.gmra.mrb[0].mxu0 %v1471
      %v1539 = vpop.f32.mrb[0].mxu0
      %v1540 = vadd.f32 0.0, %v1539
      %v1541 = vpop.f32.mrb[0].mxu0
      %1542 = vdwg.mxu0
      %v1544 = vrot.slane %v1540, 2
      %v1546 = vadd.f32 %v439, %v1544
      %v1547 = vxor.u32 %v1546, 2147483648
      %v1548 = vmul.f32 %v1547, 1.442695
      %v1549 = vpow.pop %v1548
      %v1550 = vadd.f32 %v1549, 1.0
      %v1551 = vrcp.pop %v1550
      %v1552 = vmul.f32 1.0, %v1551
      %v1553 = vtanh.pop %v1546
      %v1554 = vsel %vm200, %v1553, %v1552
      %v1556 = vrot.slane %v1466, 1
      %v1558 = vmul.f32 %v1554, %v1556
      %1560 = vrot.lane.b32.xlu0 %v1554, 64
      %v1561 = vpop.permute.xlu0 %1560
      %v1563 = vmul.f32 %v1554, %v1561
      %1565 = vrot.lane.b32.xlu0 %v1563, 32
      %v1566 = vpop.permute.xlu0 %1565
      %v1568 = vadd.f32 %v1558, %v1566
      %v1569 = vtanh.pop %v1568
      %1571 = vrot.lane.b32.xlu0 %v1569, 64
      %v1572 = vpop.permute.xlu0 %1571
      %v1574 = vmul.f32 %v1554, %v1572
      %v1575 = vrot.slane %v1465, 1
      %v1577 = vsel %vm1246, %v1574, %v1575
      %v1578 = vsel %vm1246, %v1568, %v1556
      %v1580 = vrot.slane %v1577, 6
      %1581 = vrot.lane.b32.xlu0 %v1580, 32
      %v1582 = vpop.permute.xlu0 %1581
      %v1583 = vsel %vm451, %v1582, 0
      %1585 = vmatprep.subr.mxu0 0.0
      %1586 = vmatpush1.msra.mxu0 %v446
      %1587 = vmatprep.subr.mxu0 0.0
      %1588 = vmatpush1.msra.mxu0 %v447
      %1589 = vmatprep.subr.mxu0 0.0
      %1590 = vmatpush1.msra.mxu0 %v448
      %1591 = vmatprep.subr.mxu0 0.0
      %1592 = vmatpush1.msra.mxu0 %v449
      %1593 = vmatprep.subr.mxu0 0.0
      %1594 = vmatpush1.msra.mxu0 0.0
      %1595 = vmatprep.subr.mxu0 0.0
      %1596 = vmatpush1.msra.mxu0 0.0
      %1597 = vmatprep.subr.mxu0 0.0
      %1598 = vmatpush1.msra.mxu0 0.0
      %1599 = vmatprep.subr.mxu0 0.0
      %1600 = vmatpush1.msra.mxu0 0.0
      %1601 = vmatprep.subr.mxu0 0.0
      %1602 = vmatpush1.msra.mxu0 0.0
      %1603 = vmatprep.subr.mxu0 0.0
      %1604 = vmatpush1.msra.mxu0 0.0
      %1605 = vmatprep.subr.mxu0 0.0
      %1606 = vmatpush1.msra.mxu0 0.0
      %1607 = vmatprep.subr.mxu0 0.0
      %1608 = vmatpush1.msra.mxu0 0.0
      %1609 = vmatprep.subr.mxu0 0.0
      %1610 = vmatpush1.msra.mxu0 0.0
      %1611 = vmatprep.subr.mxu0 0.0
      %1612 = vmatpush1.msra.mxu0 0.0
      %1613 = vmatprep.subr.mxu0 0.0
      %1614 = vmatpush1.msra.mxu0 0.0
      %1615 = vmatprep.subr.mxu0 0.0
      %1616 = vmatpush1.msra.mxu0 0.0
      %1617 = vmatprep.subr.mxu0 0.0
      %1618 = vmatpush1.msra.mxu0 0.0
      %1619 = vmatprep.subr.mxu0 0.0
      %1620 = vmatpush1.msra.mxu0 0.0
      %1621 = vmatprep.subr.mxu0 0.0
      %1622 = vmatpush1.msra.mxu0 0.0
      %1623 = vmatprep.subr.mxu0 0.0
      %1624 = vmatpush1.msra.mxu0 0.0
      %1625 = vmatprep.subr.mxu0 0.0
      %1626 = vmatpush1.msra.mxu0 0.0
      %1627 = vmatprep.subr.mxu0 0.0
      %1628 = vmatpush1.msra.mxu0 0.0
      %1629 = vmatprep.subr.mxu0 0.0
      %1630 = vmatpush1.msra.mxu0 0.0
      %1631 = vmatprep.subr.mxu0 0.0
      %1632 = vmatpush1.msra.mxu0 0.0
      %1633 = vmatprep.subr.mxu0 0.0
      %1634 = vmatpush1.msra.mxu0 0.0
      %1635 = vmatprep.subr.mxu0 0.0
      %1636 = vmatpush1.msra.mxu0 0.0
      %1637 = vmatprep.subr.mxu0 0.0
      %1638 = vmatpush1.msra.mxu0 0.0
      %1639 = vmatprep.subr.mxu0 0.0
      %1640 = vmatpush1.msra.mxu0 0.0
      %1641 = vmatprep.subr.mxu0 0.0
      %1642 = vmatpush1.msra.mxu0 0.0
      %1643 = vmatprep.subr.mxu0 0.0
      %1644 = vmatpush1.msra.mxu0 0.0
      %1645 = vmatprep.subr.mxu0 0.0
      %1646 = vmatpush1.msra.mxu0 0.0
      %1647 = vmatprep.subr.mxu0 0.0
      %1648 = vmatpush1.msra.mxu0 0.0
      %1649 = vmatprep.mubr.f32.mxu0 0.0
      %1650 = vmatmul.mubr.f32.gmra.mrb[0].mxu0 %v1583
      %v1651 = vpop.f32.mrb[0].mxu0
      %v1652 = vadd.f32 0.0, %v1651
      %v1653 = vpop.f32.mrb[0].mxu0
      %1654 = vdwg.mxu0
      %v1656 = vrot.slane %v1652, 3
      %v1658 = vadd.f32 %v439, %v1656
      %v1659 = vxor.u32 %v1658, 2147483648
      %v1660 = vmul.f32 %v1659, 1.442695
      %v1661 = vpow.pop %v1660
      %v1662 = vadd.f32 %v1661, 1.0
      %v1663 = vrcp.pop %v1662
      %v1664 = vmul.f32 1.0, %v1663
      %v1665 = vtanh.pop %v1658
      %v1666 = vsel %vm200, %v1665, %v1664
      %v1668 = vrot.slane %v1578, 1
      %v1670 = vmul.f32 %v1666, %v1668
      %1672 = vrot.lane.b32.xlu0 %v1666, 64
      %v1673 = vpop.permute.xlu0 %1672
      %v1675 = vmul.f32 %v1666, %v1673
      %1677 = vrot.lane.b32.xlu0 %v1675, 32
      %v1678 = vpop.permute.xlu0 %1677
      %v1680 = vadd.f32 %v1670, %v1678
      %v1681 = vtanh.pop %v1680
      %1683 = vrot.lane.b32.xlu0 %v1681, 64
      %v1684 = vpop.permute.xlu0 %1683
      %v1686 = vmul.f32 %v1666, %v1684
      %v1687 = vrot.slane %v1577, 1
      %v1689 = vsel %vm1130, %v1686, %v1687
      %v1690 = vsel %vm1130, %v1680, %v1668
      %v1692 = vrot.slane %v1689, 5
      %1693 = vrot.lane.b32.xlu0 %v1692, 32
      %v1694 = vpop.permute.xlu0 %1693
      %v1695 = vsel %vm451, %v1694, 0
      %1697 = vmatprep.subr.mxu0 0.0
      %1698 = vmatpush1.msra.mxu0 %v446
      %1699 = vmatprep.subr.mxu0 0.0
      %1700 = vmatpush1.msra.mxu0 %v447
      %1701 = vmatprep.subr.mxu0 0.0
      %1702 = vmatpush1.msra.mxu0 %v448
      %1703 = vmatprep.subr.mxu0 0.0
      %1704 = vmatpush1.msra.mxu0 %v449
      %1705 = vmatprep.subr.mxu0 0.0
      %1706 = vmatpush1.msra.mxu0 0.0
      %1707 = vmatprep.subr.mxu0 0.0
      %1708 = vmatpush1.msra.mxu0 0.0
      %1709 = vmatprep.subr.mxu0 0.0
      %1710 = vmatpush1.msra.mxu0 0.0
      %1711 = vmatprep.subr.mxu0 0.0
      %1712 = vmatpush1.msra.mxu0 0.0
      %1713 = vmatprep.subr.mxu0 0.0
      %1714 = vmatpush1.msra.mxu0 0.0
      %1715 = vmatprep.subr.mxu0 0.0
      %1716 = vmatpush1.msra.mxu0 0.0
      %1717 = vmatprep.subr.mxu0 0.0
      %1718 = vmatpush1.msra.mxu0 0.0
      %1719 = vmatprep.subr.mxu0 0.0
      %1720 = vmatpush1.msra.mxu0 0.0
      %1721 = vmatprep.subr.mxu0 0.0
      %1722 = vmatpush1.msra.mxu0 0.0
      %1723 = vmatprep.subr.mxu0 0.0
      %1724 = vmatpush1.msra.mxu0 0.0
      %1725 = vmatprep.subr.mxu0 0.0
      %1726 = vmatpush1.msra.mxu0 0.0
      %1727 = vmatprep.subr.mxu0 0.0
      %1728 = vmatpush1.msra.mxu0 0.0
      %1729 = vmatprep.subr.mxu0 0.0
      %1730 = vmatpush1.msra.mxu0 0.0
      %1731 = vmatprep.subr.mxu0 0.0
      %1732 = vmatpush1.msra.mxu0 0.0
      %1733 = vmatprep.subr.mxu0 0.0
      %1734 = vmatpush1.msra.mxu0 0.0
      %1735 = vmatprep.subr.mxu0 0.0
      %1736 = vmatpush1.msra.mxu0 0.0
      %1737 = vmatprep.subr.mxu0 0.0
      %1738 = vmatpush1.msra.mxu0 0.0
      %1739 = vmatprep.subr.mxu0 0.0
      %1740 = vmatpush1.msra.mxu0 0.0
      %1741 = vmatprep.subr.mxu0 0.0
      %1742 = vmatpush1.msra.mxu0 0.0
      %1743 = vmatprep.subr.mxu0 0.0
      %1744 = vmatpush1.msra.mxu0 0.0
      %1745 = vmatprep.subr.mxu0 0.0
      %1746 = vmatpush1.msra.mxu0 0.0
      %1747 = vmatprep.subr.mxu0 0.0
      %1748 = vmatpush1.msra.mxu0 0.0
      %1749 = vmatprep.subr.mxu0 0.0
      %1750 = vmatpush1.msra.mxu0 0.0
      %1751 = vmatprep.subr.mxu0 0.0
      %1752 = vmatpush1.msra.mxu0 0.0
      %1753 = vmatprep.subr.mxu0 0.0
      %1754 = vmatpush1.msra.mxu0 0.0
      %1755 = vmatprep.subr.mxu0 0.0
      %1756 = vmatpush1.msra.mxu0 0.0
      %1757 = vmatprep.subr.mxu0 0.0
      %1758 = vmatpush1.msra.mxu0 0.0
      %1759 = vmatprep.subr.mxu0 0.0
      %1760 = vmatpush1.msra.mxu0 0.0
      %1761 = vmatprep.mubr.f32.mxu0 0.0
      %1762 = vmatmul.mubr.f32.gmra.mrb[0].mxu0 %v1695
      %v1763 = vpop.f32.mrb[0].mxu0
      %v1764 = vadd.f32 0.0, %v1763
      %v1765 = vpop.f32.mrb[0].mxu0
      %1766 = vdwg.mxu0
      %v1768 = vrot.slane %v1764, 4
      %v1770 = vadd.f32 %v439, %v1768
      %v1771 = vxor.u32 %v1770, 2147483648
      %v1772 = vmul.f32 %v1771, 1.442695
      %v1773 = vpow.pop %v1772
      %v1774 = vadd.f32 %v1773, 1.0
      %v1775 = vrcp.pop %v1774
      %v1776 = vmul.f32 1.0, %v1775
      %v1777 = vtanh.pop %v1770
      %v1778 = vsel %vm200, %v1777, %v1776
      %v1780 = vrot.slane %v1690, 1
      %v1782 = vmul.f32 %v1778, %v1780
      %1784 = vrot.lane.b32.xlu0 %v1778, 64
      %v1785 = vpop.permute.xlu0 %1784
      %v1787 = vmul.f32 %v1778, %v1785
      %1789 = vrot.lane.b32.xlu0 %v1787, 32
      %v1790 = vpop.permute.xlu0 %1789
      %v1792 = vadd.f32 %v1782, %v1790
      %v1793 = vtanh.pop %v1792
      %1795 = vrot.lane.b32.xlu0 %v1793, 64
      %v1796 = vpop.permute.xlu0 %1795
      %v1798 = vmul.f32 %v1778, %v1796
      %v1799 = vrot.slane %v1689, 1
      %v1801 = vsel %vm1014, %v1798, %v1799
      %v1802 = vsel %vm1014, %v1792, %v1780
      %v1804 = vrot.slane %v1801, 4
      %1805 = vrot.lane.b32.xlu0 %v1804, 32
      %v1806 = vpop.permute.xlu0 %1805
      %v1807 = vsel %vm451, %v1806, 0
      %1809 = vmatprep.subr.mxu0 0.0
      %1810 = vmatpush1.msra.mxu0 %v446
      %1811 = vmatprep.subr.mxu0 0.0
      %1812 = vmatpush1.msra.mxu0 %v447
      %1813 = vmatprep.subr.mxu0 0.0
      %1814 = vmatpush1.msra.mxu0 %v448
      %1815 = vmatprep.subr.mxu0 0.0
      %1816 = vmatpush1.msra.mxu0 %v449
      %1817 = vmatprep.subr.mxu0 0.0
      %1818 = vmatpush1.msra.mxu0 0.0
      %1819 = vmatprep.subr.mxu0 0.0
      %1820 = vmatpush1.msra.mxu0 0.0
      %1821 = vmatprep.subr.mxu0 0.0
      %1822 = vmatpush1.msra.mxu0 0.0
      %1823 = vmatprep.subr.mxu0 0.0
      %1824 = vmatpush1.msra.mxu0 0.0
      %1825 = vmatprep.subr.mxu0 0.0
      %1826 = vmatpush1.msra.mxu0 0.0
      %1827 = vmatprep.subr.mxu0 0.0
      %1828 = vmatpush1.msra.mxu0 0.0
      %1829 = vmatprep.subr.mxu0 0.0
      %1830 = vmatpush1.msra.mxu0 0.0
      %1831 = vmatprep.subr.mxu0 0.0
      %1832 = vmatpush1.msra.mxu0 0.0
      %1833 = vmatprep.subr.mxu0 0.0
      %1834 = vmatpush1.msra.mxu0 0.0
      %1835 = vmatprep.subr.mxu0 0.0
      %1836 = vmatpush1.msra.mxu0 0.0
      %1837 = vmatprep.subr.mxu0 0.0
      %1838 = vmatpush1.msra.mxu0 0.0
      %1839 = vmatprep.subr.mxu0 0.0
      %1840 = vmatpush1.msra.mxu0 0.0
      %1841 = vmatprep.subr.mxu0 0.0
      %1842 = vmatpush1.msra.mxu0 0.0
      %1843 = vmatprep.subr.mxu0 0.0
      %1844 = vmatpush1.msra.mxu0 0.0
      %1845 = vmatprep.subr.mxu0 0.0
      %1846 = vmatpush1.msra.mxu0 0.0
      %1847 = vmatprep.subr.mxu0 0.0
      %1848 = vmatpush1.msra.mxu0 0.0
      %1849 = vmatprep.subr.mxu0 0.0
      %1850 = vmatpush1.msra.mxu0 0.0
      %1851 = vmatprep.subr.mxu0 0.0
      %1852 = vmatpush1.msra.mxu0 0.0
      %1853 = vmatprep.subr.mxu0 0.0
      %1854 = vmatpush1.msra.mxu0 0.0
      %1855 = vmatprep.subr.mxu0 0.0
      %1856 = vmatpush1.msra.mxu0 0.0
      %1857 = vmatprep.subr.mxu0 0.0
      %1858 = vmatpush1.msra.mxu0 0.0
      %1859 = vmatprep.subr.mxu0 0.0
      %1860 = vmatpush1.msra.mxu0 0.0
      %1861 = vmatprep.subr.mxu0 0.0
      %1862 = vmatpush1.msra.mxu0 0.0
      %1863 = vmatprep.subr.mxu0 0.0
      %1864 = vmatpush1.msra.mxu0 0.0
      %1865 = vmatprep.subr.mxu0 0.0
      %1866 = vmatpush1.msra.mxu0 0.0
      %1867 = vmatprep.subr.mxu0 0.0
      %1868 = vmatpush1.msra.mxu0 0.0
      %1869 = vmatprep.subr.mxu0 0.0
      %1870 = vmatpush1.msra.mxu0 0.0
      %1871 = vmatprep.subr.mxu0 0.0
      %1872 = vmatpush1.msra.mxu0 0.0
      %1873 = vmatprep.mubr.f32.mxu0 0.0
      %1874 = vmatmul.mubr.f32.gmra.mrb[0].mxu0 %v1807
      %v1875 = vpop.f32.mrb[0].mxu0
      %v1876 = vadd.f32 0.0, %v1875
      %v1877 = vpop.f32.mrb[0].mxu0
      %1878 = vdwg.mxu0
      %v1880 = vrot.slane %v1876, 5
      %v1882 = vadd.f32 %v439, %v1880
      %v1883 = vxor.u32 %v1882, 2147483648
      %v1884 = vmul.f32 %v1883, 1.442695
      %v1885 = vpow.pop %v1884
      %v1886 = vadd.f32 %v1885, 1.0
      %v1887 = vrcp.pop %v1886
      %v1888 = vmul.f32 1.0, %v1887
      %v1889 = vtanh.pop %v1882
      %v1890 = vsel %vm200, %v1889, %v1888
      %v1892 = vrot.slane %v1802, 1
      %v1894 = vmul.f32 %v1890, %v1892
      %1896 = vrot.lane.b32.xlu0 %v1890, 64
      %v1897 = vpop.permute.xlu0 %1896
      %v1899 = vmul.f32 %v1890, %v1897
      %1901 = vrot.lane.b32.xlu0 %v1899, 32
      %v1902 = vpop.permute.xlu0 %1901
      %v1904 = vadd.f32 %v1894, %v1902
      %v1905 = vtanh.pop %v1904
      %1907 = vrot.lane.b32.xlu0 %v1905, 64
      %v1908 = vpop.permute.xlu0 %1907
      %v1910 = vmul.f32 %v1890, %v1908
      %v1911 = vrot.slane %v1801, 1
      %v1913 = vsel %vm898, %v1910, %v1911
      %v1914 = vsel %vm898, %v1904, %v1892
      %v1916 = vrot.slane %v1913, 3
      %1917 = vrot.lane.b32.xlu0 %v1916, 32
      %v1918 = vpop.permute.xlu0 %1917
      %v1919 = vsel %vm451, %v1918, 0
      %1921 = vmatprep.subr.mxu0 0.0
      %1922 = vmatpush1.msra.mxu0 %v446
      %1923 = vmatprep.subr.mxu0 0.0
      %1924 = vmatpush1.msra.mxu0 %v447
      %1925 = vmatprep.subr.mxu0 0.0
      %1926 = vmatpush1.msra.mxu0 %v448
      %1927 = vmatprep.subr.mxu0 0.0
      %1928 = vmatpush1.msra.mxu0 %v449
      %1929 = vmatprep.subr.mxu0 0.0
      %1930 = vmatpush1.msra.mxu0 0.0
      %1931 = vmatprep.subr.mxu0 0.0
      %1932 = vmatpush1.msra.mxu0 0.0
      %1933 = vmatprep.subr.mxu0 0.0
      %1934 = vmatpush1.msra.mxu0 0.0
      %1935 = vmatprep.subr.mxu0 0.0
      %1936 = vmatpush1.msra.mxu0 0.0
      %1937 = vmatprep.subr.mxu0 0.0
      %1938 = vmatpush1.msra.mxu0 0.0
      %1939 = vmatprep.subr.mxu0 0.0
      %1940 = vmatpush1.msra.mxu0 0.0
      %1941 = vmatprep.subr.mxu0 0.0
      %1942 = vmatpush1.msra.mxu0 0.0
      %1943 = vmatprep.subr.mxu0 0.0
      %1944 = vmatpush1.msra.mxu0 0.0
      %1945 = vmatprep.subr.mxu0 0.0
      %1946 = vmatpush1.msra.mxu0 0.0
      %1947 = vmatprep.subr.mxu0 0.0
      %1948 = vmatpush1.msra.mxu0 0.0
      %1949 = vmatprep.subr.mxu0 0.0
      %1950 = vmatpush1.msra.mxu0 0.0
      %1951 = vmatprep.subr.mxu0 0.0
      %1952 = vmatpush1.msra.mxu0 0.0
      %1953 = vmatprep.subr.mxu0 0.0
      %1954 = vmatpush1.msra.mxu0 0.0
      %1955 = vmatprep.subr.mxu0 0.0
      %1956 = vmatpush1.msra.mxu0 0.0
      %1957 = vmatprep.subr.mxu0 0.0
      %1958 = vmatpush1.msra.mxu0 0.0
      %1959 = vmatprep.subr.mxu0 0.0
      %1960 = vmatpush1.msra.mxu0 0.0
      %1961 = vmatprep.subr.mxu0 0.0
      %1962 = vmatpush1.msra.mxu0 0.0
      %1963 = vmatprep.subr.mxu0 0.0
      %1964 = vmatpush1.msra.mxu0 0.0
      %1965 = vmatprep.subr.mxu0 0.0
      %1966 = vmatpush1.msra.mxu0 0.0
      %1967 = vmatprep.subr.mxu0 0.0
      %1968 = vmatpush1.msra.mxu0 0.0
      %1969 = vmatprep.subr.mxu0 0.0
      %1970 = vmatpush1.msra.mxu0 0.0
      %1971 = vmatprep.subr.mxu0 0.0
      %1972 = vmatpush1.msra.mxu0 0.0
      %1973 = vmatprep.subr.mxu0 0.0
      %1974 = vmatpush1.msra.mxu0 0.0
      %1975 = vmatprep.subr.mxu0 0.0
      %1976 = vmatpush1.msra.mxu0 0.0
      %1977 = vmatprep.subr.mxu0 0.0
      %1978 = vmatpush1.msra.mxu0 0.0
      %1979 = vmatprep.subr.mxu0 0.0
      %1980 = vmatpush1.msra.mxu0 0.0
      %1981 = vmatprep.subr.mxu0 0.0
      %1982 = vmatpush1.msra.mxu0 0.0
      %1983 = vmatprep.subr.mxu0 0.0
      %1984 = vmatpush1.msra.mxu0 0.0
      %1985 = vmatprep.mubr.f32.mxu0 0.0
      %1986 = vmatmul.mubr.f32.gmra.mrb[0].mxu0 %v1919
      %v1987 = vpop.f32.mrb[0].mxu0
      %v1988 = vadd.f32 0.0, %v1987
      %v1989 = vpop.f32.mrb[0].mxu0
      %1990 = vdwg.mxu0
      %v1992 = vrot.slane %v1988, 6
      %v1994 = vadd.f32 %v439, %v1992
      %v1995 = vxor.u32 %v1994, 2147483648
      %v1996 = vmul.f32 %v1995, 1.442695
      %v1997 = vpow.pop %v1996
      %v1998 = vadd.f32 %v1997, 1.0
      %v1999 = vrcp.pop %v1998
      %v2000 = vmul.f32 1.0, %v1999
      %v2001 = vtanh.pop %v1994
      %v2002 = vsel %vm200, %v2001, %v2000
      %v2004 = vrot.slane %v1914, 1
      %v2006 = vmul.f32 %v2002, %v2004
      %2008 = vrot.lane.b32.xlu0 %v2002, 64
      %v2009 = vpop.permute.xlu0 %2008
      %v2011 = vmul.f32 %v2002, %v2009
      %2013 = vrot.lane.b32.xlu0 %v2011, 32
      %v2014 = vpop.permute.xlu0 %2013
      %v2016 = vadd.f32 %v2006, %v2014
      %v2017 = vtanh.pop %v2016
      %2019 = vrot.lane.b32.xlu0 %v2017, 64
      %v2020 = vpop.permute.xlu0 %2019
      %v2022 = vmul.f32 %v2002, %v2020
      %v2023 = vrot.slane %v1913, 1
      %v2025 = vsel %vm782, %v2022, %v2023
      %v2026 = vsel %vm782, %v2016, %v2004
      %v2028 = vrot.slane %v2025, 2
      %2029 = vrot.lane.b32.xlu0 %v2028, 32
      %v2030 = vpop.permute.xlu0 %2029
      %v2031 = vsel %vm451, %v2030, 0
      %2033 = vmatprep.subr.mxu0 0.0
      %2034 = vmatpush1.msra.mxu0 %v446
      %2035 = vmatprep.subr.mxu0 0.0
      %2036 = vmatpush1.msra.mxu0 %v447
      %2037 = vmatprep.subr.mxu0 0.0
      %2038 = vmatpush1.msra.mxu0 %v448
      %2039 = vmatprep.subr.mxu0 0.0
      %2040 = vmatpush1.msra.mxu0 %v449
      %2041 = vmatprep.subr.mxu0 0.0
      %2042 = vmatpush1.msra.mxu0 0.0
      %2043 = vmatprep.subr.mxu0 0.0
      %2044 = vmatpush1.msra.mxu0 0.0
      %2045 = vmatprep.subr.mxu0 0.0
      %2046 = vmatpush1.msra.mxu0 0.0
      %2047 = vmatprep.subr.mxu0 0.0
      %2048 = vmatpush1.msra.mxu0 0.0
      %2049 = vmatprep.subr.mxu0 0.0
      %2050 = vmatpush1.msra.mxu0 0.0
      %2051 = vmatprep.subr.mxu0 0.0
      %2052 = vmatpush1.msra.mxu0 0.0
      %2053 = vmatprep.subr.mxu0 0.0
      %2054 = vmatpush1.msra.mxu0 0.0
      %2055 = vmatprep.subr.mxu0 0.0
      %2056 = vmatpush1.msra.mxu0 0.0
      %2057 = vmatprep.subr.mxu0 0.0
      %2058 = vmatpush1.msra.mxu0 0.0
      %2059 = vmatprep.subr.mxu0 0.0
      %2060 = vmatpush1.msra.mxu0 0.0
      %2061 = vmatprep.subr.mxu0 0.0
      %2062 = vmatpush1.msra.mxu0 0.0
      %2063 = vmatprep.subr.mxu0 0.0
      %2064 = vmatpush1.msra.mxu0 0.0
      %2065 = vmatprep.subr.mxu0 0.0
      %2066 = vmatpush1.msra.mxu0 0.0
      %2067 = vmatprep.subr.mxu0 0.0
      %2068 = vmatpush1.msra.mxu0 0.0
      %2069 = vmatprep.subr.mxu0 0.0
      %2070 = vmatpush1.msra.mxu0 0.0
      %2071 = vmatprep.subr.mxu0 0.0
      %2072 = vmatpush1.msra.mxu0 0.0
      %2073 = vmatprep.subr.mxu0 0.0
      %2074 = vmatpush1.msra.mxu0 0.0
      %2075 = vmatprep.subr.mxu0 0.0
      %2076 = vmatpush1.msra.mxu0 0.0
      %2077 = vmatprep.subr.mxu0 0.0
      %2078 = vmatpush1.msra.mxu0 0.0
      %2079 = vmatprep.subr.mxu0 0.0
      %2080 = vmatpush1.msra.mxu0 0.0
      %2081 = vmatprep.subr.mxu0 0.0
      %2082 = vmatpush1.msra.mxu0 0.0
      %2083 = vmatprep.subr.mxu0 0.0
      %2084 = vmatpush1.msra.mxu0 0.0
      %2085 = vmatprep.subr.mxu0 0.0
      %2086 = vmatpush1.msra.mxu0 0.0
      %2087 = vmatprep.subr.mxu0 0.0
      %2088 = vmatpush1.msra.mxu0 0.0
      %2089 = vmatprep.subr.mxu0 0.0
      %2090 = vmatpush1.msra.mxu0 0.0
      %2091 = vmatprep.subr.mxu0 0.0
      %2092 = vmatpush1.msra.mxu0 0.0
      %2093 = vmatprep.subr.mxu0 0.0
      %2094 = vmatpush1.msra.mxu0 0.0
      %2095 = vmatprep.subr.mxu0 0.0
      %2096 = vmatpush1.msra.mxu0 0.0
      %2097 = vmatprep.mubr.f32.mxu0 0.0
      %2098 = vmatmul.mubr.f32.gmra.mrb[0].mxu0 %v2031
      %v2099 = vpop.f32.mrb[0].mxu0
      %v2100 = vadd.f32 0.0, %v2099
      %v2101 = vpop.f32.mrb[0].mxu0
      %2102 = vdwg.mxu0
      %v2104 = vrot.slane %v2100, 7
      %v2106 = vadd.f32 %v439, %v2104
      %v2107 = vxor.u32 %v2106, 2147483648
      %v2108 = vmul.f32 %v2107, 1.442695
      %v2109 = vpow.pop %v2108
      %v2110 = vadd.f32 %v2109, 1.0
      %v2111 = vrcp.pop %v2110
      %v2112 = vmul.f32 1.0, %v2111
      %v2113 = vtanh.pop %v2106
      %v2114 = vsel %vm200, %v2113, %v2112
      %v2116 = vrot.slane %v2026, 1
      %v2118 = vmul.f32 %v2114, %v2116
      %2120 = vrot.lane.b32.xlu0 %v2114, 64
      %v2121 = vpop.permute.xlu0 %2120
      %v2123 = vmul.f32 %v2114, %v2121
      %2125 = vrot.lane.b32.xlu0 %v2123, 32
      %v2126 = vpop.permute.xlu0 %2125
      %v2128 = vadd.f32 %v2118, %v2126
      %v2129 = vtanh.pop %v2128
      %2131 = vrot.lane.b32.xlu0 %v2129, 64
      %v2132 = vpop.permute.xlu0 %2131
      %v2134 = vmul.f32 %v2114, %v2132
      %v2135 = vrot.slane %v2025, 1
      %v2137 = vsel %vm666, %v2134, %v2135
      %v2138 = vsel %vm666, %v2128, %v2116
      %v2140 = vrot.slane %v2137, 1
      %2141 = vrot.lane.b32.xlu0 %v2140, 32
      %v2142 = vpop.permute.xlu0 %2141
      %v2143 = vsel %vm451, %v2142, 0
      %2145 = vmatprep.subr.mxu0 0.0
      %2146 = vmatpush1.msra.mxu0 %v446
      %2147 = vmatprep.subr.mxu0 0.0
      %2148 = vmatpush1.msra.mxu0 %v447
      %2149 = vmatprep.subr.mxu0 0.0
      %2150 = vmatpush1.msra.mxu0 %v448
      %2151 = vmatprep.subr.mxu0 0.0
      %2152 = vmatpush1.msra.mxu0 %v449
      %2153 = vmatprep.subr.mxu0 0.0
      %2154 = vmatpush1.msra.mxu0 0.0
      %2155 = vmatprep.subr.mxu0 0.0
      %2156 = vmatpush1.msra.mxu0 0.0
      %2157 = vmatprep.subr.mxu0 0.0
      %2158 = vmatpush1.msra.mxu0 0.0
      %2159 = vmatprep.subr.mxu0 0.0
      %2160 = vmatpush1.msra.mxu0 0.0
      %2161 = vmatprep.subr.mxu0 0.0
      %2162 = vmatpush1.msra.mxu0 0.0
      %2163 = vmatprep.subr.mxu0 0.0
      %2164 = vmatpush1.msra.mxu0 0.0
      %2165 = vmatprep.subr.mxu0 0.0
      %2166 = vmatpush1.msra.mxu0 0.0
      %2167 = vmatprep.subr.mxu0 0.0
      %2168 = vmatpush1.msra.mxu0 0.0
      %2169 = vmatprep.subr.mxu0 0.0
      %2170 = vmatpush1.msra.mxu0 0.0
      %2171 = vmatprep.subr.mxu0 0.0
      %2172 = vmatpush1.msra.mxu0 0.0
      %2173 = vmatprep.subr.mxu0 0.0
      %2174 = vmatpush1.msra.mxu0 0.0
      %2175 = vmatprep.subr.mxu0 0.0
      %2176 = vmatpush1.msra.mxu0 0.0
      %2177 = vmatprep.subr.mxu0 0.0
      %2178 = vmatpush1.msra.mxu0 0.0
      %2179 = vmatprep.subr.mxu0 0.0
      %2180 = vmatpush1.msra.mxu0 0.0
      %2181 = vmatprep.subr.mxu0 0.0
      %2182 = vmatpush1.msra.mxu0 0.0
      %2183 = vmatprep.subr.mxu0 0.0
      %2184 = vmatpush1.msra.mxu0 0.0
      %2185 = vmatprep.subr.mxu0 0.0
      %2186 = vmatpush1.msra.mxu0 0.0
      %2187 = vmatprep.subr.mxu0 0.0
      %2188 = vmatpush1.msra.mxu0 0.0
      %2189 = vmatprep.subr.mxu0 0.0
      %2190 = vmatpush1.msra.mxu0 0.0
      %2191 = vmatprep.subr.mxu0 0.0
      %2192 = vmatpush1.msra.mxu0 0.0
      %2193 = vmatprep.subr.mxu0 0.0
      %2194 = vmatpush1.msra.mxu0 0.0
      %2195 = vmatprep.subr.mxu0 0.0
      %2196 = vmatpush1.msra.mxu0 0.0
      %2197 = vmatprep.subr.mxu0 0.0
      %2198 = vmatpush1.msra.mxu0 0.0
      %2199 = vmatprep.subr.mxu0 0.0
      %2200 = vmatpush1.msra.mxu0 0.0
      %2201 = vmatprep.subr.mxu0 0.0
      %2202 = vmatpush1.msra.mxu0 0.0
      %2203 = vmatprep.subr.mxu0 0.0
      %2204 = vmatpush1.msra.mxu0 0.0
      %2205 = vmatprep.subr.mxu0 0.0
      %2206 = vmatpush1.msra.mxu0 0.0
      %2207 = vmatprep.subr.mxu0 0.0
      %2208 = vmatpush1.msra.mxu0 0.0
      %2209 = vmatprep.mubr.f32.mxu0 0.0
      %2210 = vmatmul.mubr.f32.gmra.mrb[0].mxu0 %v2143
      %v2211 = vpop.f32.mrb[0].mxu0
      %v2212 = vadd.f32 0.0, %v2211
      %v2213 = vpop.f32.mrb[0].mxu0
      %2214 = vdwg.mxu0
      %v2215 = vadd.f32 %v439, %v2212
      %v2216 = vxor.u32 %v2215, 2147483648
      %v2217 = vmul.f32 %v2216, 1.442695
      %v2218 = vpow.pop %v2217
      %v2219 = vadd.f32 %v2218, 1.0
      %v2220 = vrcp.pop %v2219
      %v2221 = vmul.f32 1.0, %v2220
      %v2222 = vtanh.pop %v2215
      %v2223 = vsel %vm200, %v2222, %v2221
      %v2225 = vrot.slane %v2138, 1
      %v2227 = vmul.f32 %v2223, %v2225
      %2229 = vrot.lane.b32.xlu0 %v2223, 64
      %v2230 = vpop.permute.xlu0 %2229
      %v2232 = vmul.f32 %v2223, %v2230
      %2234 = vrot.lane.b32.xlu0 %v2232, 32
      %v2235 = vpop.permute.xlu0 %2234
      %v2237 = vadd.f32 %v2227, %v2235
      %v2238 = vtanh.pop %v2237
      %2240 = vrot.lane.b32.xlu0 %v2238, 64
      %v2241 = vpop.permute.xlu0 %2240
      %v2243 = vmul.f32 %v2223, %v2241
      %v2245 = vsel %vm553, %v2243, %v2140
      %vm2246 = vcmask 1040384
      %v2247 = vsel %vm2246, %v554, %v669
      %vm2248 = vcmask 1041408
      %v2249 = vsel %vm2248, %v2247, %v785
      %vm2250 = vcmask 1042432
      %v2251 = vsel %vm2250, %v2249, %v901
      %vm2252 = vcmask 1043456
      %v2253 = vsel %vm2252, %v2251, %v1017
      %vm2254 = vcmask 1044480
      %v2255 = vsel %vm2254, %v2253, %v1133
      %vm2256 = vcmask 1045504
      %v2257 = vsel %vm2256, %v2255, %v1249
      %vm2258 = vcmask 1046528
      %v2259 = vsel %vm2258, %v2257, %v1365
      %v2260 = vsel %vm2246, %v2245, %v2137
      %v2261 = vsel %vm2248, %v2260, %v2025
      %v2262 = vsel %vm2250, %v2261, %v1913
      %v2263 = vsel %vm2252, %v2262, %v1801
      %v2264 = vsel %vm2254, %v2263, %v1689
      %v2265 = vsel %vm2256, %v2264, %v1577
      %v2266 = vsel %vm2258, %v2265, %v1465
      %2268 = vrot.lane.b32.xlu0 %v2259, 32
      %v2269 = vpop.permute.xlu0 %2268
      %2272 = vrot.lane.b32.xlu0 %v2266, 64
      %v2273 = vpop.permute.xlu0 %2272
      %v2275 = vsel %vm451, %v2269, %v2273
      %v2276 = vld [vmem:[%s11] sm:$0xff]
      %v2277 = vld [vmem:[%s11 + $0x8] sm:$0xff]
      %v2278 = vld [vmem:[%s11 + $0x10] sm:$0xff]
      %v2279 = vld [vmem:[%s11 + $0x18] sm:$0xff]
      %v2280 = vld [vmem:[%s11 + $0x20] sm:$0xff]
      %v2281 = vld [vmem:[%s11 + $0x28] sm:$0xff]
      %v2282 = vld [vmem:[%s11 + $0x30] sm:$0xff]
      %v2283 = vld [vmem:[%s11 + $0x38] sm:$0xff]
      %v2284 = vld [vmem:[#allocation19] sm:$0x1]
      %v2286 = vlaneseq
      %v2287 = vshrl.u32 %v2286, 7
      %v2288 = vsub.s32 0, %v2287
      %v2289 = vrot.slane %v2284, %v2288
      %vm2291 = vcmask 523264
      %v2293 = vsel %vm2291, %v2275, 0
      %2295 = vmatprep.subr.mxu0 0.0
      %2296 = vmatpush1.msra.mxu0 %v2276
      %2297 = vmatprep.subr.mxu0 0.0
      %2298 = vmatpush1.msra.mxu0 %v2277
      %2299 = vmatprep.subr.mxu0 0.0
      %2300 = vmatpush1.msra.mxu0 %v2278
      %2301 = vmatprep.subr.mxu0 0.0
      %2302 = vmatpush1.msra.mxu0 %v2279
      %2303 = vmatprep.subr.mxu0 0.0
      %2304 = vmatpush1.msra.mxu0 %v2280
      %2305 = vmatprep.subr.mxu0 0.0
      %2306 = vmatpush1.msra.mxu0 %v2281
      %2307 = vmatprep.subr.mxu0 0.0
      %2308 = vmatpush1.msra.mxu0 %v2282
      %2309 = vmatprep.subr.mxu0 0.0
      %2310 = vmatpush1.msra.mxu0 %v2283
      %2311 = vmatprep.subr.mxu0 0.0
      %2312 = vmatpush1.msra.mxu0 0.0
      %2313 = vmatprep.subr.mxu0 0.0
      %2314 = vmatpush1.msra.mxu0 0.0
      %2315 = vmatprep.subr.mxu0 0.0
      %2316 = vmatpush1.msra.mxu0 0.0
      %2317 = vmatprep.subr.mxu0 0.0
      %2318 = vmatpush1.msra.mxu0 0.0
      %2319 = vmatprep.subr.mxu0 0.0
      %2320 = vmatpush1.msra.mxu0 0.0
      %2321 = vmatprep.subr.mxu0 0.0
      %2322 = vmatpush1.msra.mxu0 0.0
      %2323 = vmatprep.subr.mxu0 0.0
      %2324 = vmatpush1.msra.mxu0 0.0
      %2325 = vmatprep.subr.mxu0 0.0
      %2326 = vmatpush1.msra.mxu0 0.0
      %2327 = vmatprep.subr.mxu0 0.0
      %2328 = vmatpush1.msra.mxu0 0.0
      %2329 = vmatprep.subr.mxu0 0.0
      %2330 = vmatpush1.msra.mxu0 0.0
      %2331 = vmatprep.subr.mxu0 0.0
      %2332 = vmatpush1.msra.mxu0 0.0
      %2333 = vmatprep.subr.mxu0 0.0
      %2334 = vmatpush1.msra.mxu0 0.0
      %2335 = vmatprep.subr.mxu0 0.0
      %2336 = vmatpush1.msra.mxu0 0.0
      %2337 = vmatprep.subr.mxu0 0.0
      %2338 = vmatpush1.msra.mxu0 0.0
      %2339 = vmatprep.subr.mxu0 0.0
      %2340 = vmatpush1.msra.mxu0 0.0
      %2341 = vmatprep.subr.mxu0 0.0
      %2342 = vmatpush1.msra.mxu0 0.0
      %2343 = vmatprep.subr.mxu0 0.0
      %2344 = vmatpush1.msra.mxu0 0.0
      %2345 = vmatprep.subr.mxu0 0.0
      %2346 = vmatpush1.msra.mxu0 0.0
      %2347 = vmatprep.subr.mxu0 0.0
      %2348 = vmatpush1.msra.mxu0 0.0
      %2349 = vmatprep.subr.mxu0 0.0
      %2350 = vmatpush1.msra.mxu0 0.0
      %2351 = vmatprep.subr.mxu0 0.0
      %2352 = vmatpush1.msra.mxu0 0.0
      %2353 = vmatprep.subr.mxu0 0.0
      %2354 = vmatpush1.msra.mxu0 0.0
      %2355 = vmatprep.subr.mxu0 0.0
      %2356 = vmatpush1.msra.mxu0 0.0
      %2357 = vmatprep.subr.mxu0 0.0
      %2358 = vmatpush1.msra.mxu0 0.0
      %2359 = vmatprep.mubr.f32.mxu0 0.0
      %2360 = vmatmul.mubr.f32.gmra.mrb[0].mxu0 %v2293
      %v2361 = vpop.f32.mrb[0].mxu0
      %v2362 = vadd.f32 %v2289, %v2361
      %v2363 = vpop.f32.mrb[0].mxu0
      %2364 = vdwg.mxu0
      %v2365 = vld [vmem:[%s14] sm:$0xff]
      %v2366 = vld [vmem:[%s14 + $0x8] sm:$0xff]
      %v2367 = vld [vmem:[%s14 + $0x10] sm:$0xff]
      %v2368 = vld [vmem:[%s14 + $0x18] sm:$0xff]
      %v2369 = vld [vmem:[%s14 + $0x20] sm:$0xff]
      %v2370 = vld [vmem:[%s14 + $0x28] sm:$0xff]
      %v2371 = vld [vmem:[%s14 + $0x30] sm:$0xff]
      %v2372 = vld [vmem:[%s14 + $0x38] sm:$0xff]
      %v2373 = vld [vmem:[%s16] sm:$0x1]
      %v2375 = vlaneseq
      %v2376 = vshrl.u32 %v2375, 7
      %v2377 = vsub.s32 0, %v2376
      %v2378 = vrot.slane %v2373, %v2377
      %2380 = vmatprep.subr.mxu0 0.0
      %2381 = vmatpush1.msra.mxu0 %v2365
      %2382 = vmatprep.subr.mxu0 0.0
      %2383 = vmatpush1.msra.mxu0 %v2366
      %2384 = vmatprep.subr.mxu0 0.0
      %2385 = vmatpush1.msra.mxu0 %v2367
      %2386 = vmatprep.subr.mxu0 0.0
      %2387 = vmatpush1.msra.mxu0 %v2368
      %2388 = vmatprep.subr.mxu0 0.0
      %2389 = vmatpush1.msra.mxu0 %v2369
      %2390 = vmatprep.subr.mxu0 0.0
      %2391 = vmatpush1.msra.mxu0 %v2370
      %2392 = vmatprep.subr.mxu0 0.0
      %2393 = vmatpush1.msra.mxu0 %v2371
      %2394 = vmatprep.subr.mxu0 0.0
      %2395 = vmatpush1.msra.mxu0 %v2372
      %2396 = vmatprep.subr.mxu0 0.0
      %2397 = vmatpush1.msra.mxu0 0.0
      %2398 = vmatprep.subr.mxu0 0.0
      %2399 = vmatpush1.msra.mxu0 0.0
      %2400 = vmatprep.subr.mxu0 0.0
      %2401 = vmatpush1.msra.mxu0 0.0
      %2402 = vmatprep.subr.mxu0 0.0
      %2403 = vmatpush1.msra.mxu0 0.0
      %2404 = vmatprep.subr.mxu0 0.0
      %2405 = vmatpush1.msra.mxu0 0.0
      %2406 = vmatprep.subr.mxu0 0.0
      %2407 = vmatpush1.msra.mxu0 0.0
      %2408 = vmatprep.subr.mxu0 0.0
      %2409 = vmatpush1.msra.mxu0 0.0
      %2410 = vmatprep.subr.mxu0 0.0
      %2411 = vmatpush1.msra.mxu0 0.0
      %2412 = vmatprep.subr.mxu0 0.0
      %2413 = vmatpush1.msra.mxu0 0.0
      %2414 = vmatprep.subr.mxu0 0.0
      %2415 = vmatpush1.msra.mxu0 0.0
      %2416 = vmatprep.subr.mxu0 0.0
      %2417 = vmatpush1.msra.mxu0 0.0
      %2418 = vmatprep.subr.mxu0 0.0
      %2419 = vmatpush1.msra.mxu0 0.0
      %2420 = vmatprep.subr.mxu0 0.0
      %2421 = vmatpush1.msra.mxu0 0.0
      %2422 = vmatprep.subr.mxu0 0.0
      %2423 = vmatpush1.msra.mxu0 0.0
      %2424 = vmatprep.subr.mxu0 0.0
      %2425 = vmatpush1.msra.mxu0 0.0
      %2426 = vmatprep.subr.mxu0 0.0
      %2427 = vmatpush1.msra.mxu0 0.0
      %2428 = vmatprep.subr.mxu0 0.0
      %2429 = vmatpush1.msra.mxu0 0.0
      %2430 = vmatprep.subr.mxu0 0.0
      %2431 = vmatpush1.msra.mxu0 0.0
      %2432 = vmatprep.subr.mxu0 0.0
      %2433 = vmatpush1.msra.mxu0 0.0
      %2434 = vmatprep.subr.mxu0 0.0
      %2435 = vmatpush1.msra.mxu0 0.0
      %2436 = vmatprep.subr.mxu0 0.0
      %2437 = vmatpush1.msra.mxu0 0.0
      %2438 = vmatprep.subr.mxu0 0.0
      %2439 = vmatpush1.msra.mxu0 0.0
      %2440 = vmatprep.subr.mxu0 0.0
      %2441 = vmatpush1.msra.mxu0 0.0
      %2442 = vmatprep.subr.mxu0 0.0
      %2443 = vmatpush1.msra.mxu0 0.0
      %2444 = vmatprep.mubr.f32.mxu0 0.0
      %2445 = vmatmul.mubr.f32.gmra.mrb[0].mxu0 %v2293
      %v2446 = vpop.f32.mrb[0].mxu0
      %v2447 = vadd.f32 %v2378, %v2446
      %v2448 = vpop.f32.mrb[0].mxu0
      %2449 = vdwg.mxu0
      %v2450 = vld [vmem:[%s12] sm:$0xff]
      %v2451 = vld [vmem:[%s12 + $0x8] sm:$0xff]
      %v2452 = vld [vmem:[%s12 + $0x10] sm:$0xff]
      %v2453 = vld [vmem:[%s12 + $0x18] sm:$0xff]
      %v2454 = vld [vmem:[#allocation20] sm:$0xff]
      %v2455 = vld [vmem:[#allocation20 + $0x8] sm:$0xff]
      %v2456 = vld [vmem:[#allocation20 + $0x10] sm:$0xff]
      %v2457 = vld [vmem:[#allocation20 + $0x18] sm:$0xff]
      %2458 = vmatprep.subr.mxu0 0.0
      %2459 = vmatpush1.msra.mxu0 %v2450
      %2460 = vmatprep.subr.mxu0 0.0
      %2461 = vmatpush1.msra.mxu0 %v2451
      %2462 = vmatprep.subr.mxu0 0.0
      %2463 = vmatpush1.msra.mxu0 %v2452
      %2464 = vmatprep.subr.mxu0 0.0
      %2465 = vmatpush1.msra.mxu0 %v2453
      %2466 = vmatprep.subr.mxu0 0.0
      %2467 = vmatpush1.msra.mxu0 0.0
      %2468 = vmatprep.subr.mxu0 0.0
      %2469 = vmatpush1.msra.mxu0 0.0
      %2470 = vmatprep.subr.mxu0 0.0
      %2471 = vmatpush1.msra.mxu0 0.0
      %2472 = vmatprep.subr.mxu0 0.0
      %2473 = vmatpush1.msra.mxu0 0.0
      %2474 = vmatprep.subr.mxu0 0.0
      %2475 = vmatpush1.msra.mxu0 0.0
      %2476 = vmatprep.subr.mxu0 0.0
      %2477 = vmatpush1.msra.mxu0 0.0
      %2478 = vmatprep.subr.mxu0 0.0
      %2479 = vmatpush1.msra.mxu0 0.0
      %2480 = vmatprep.subr.mxu0 0.0
      %2481 = vmatpush1.msra.mxu0 0.0
      %2482 = vmatprep.subr.mxu0 0.0
      %2483 = vmatpush1.msra.mxu0 0.0
      %2484 = vmatprep.subr.mxu0 0.0
      %2485 = vmatpush1.msra.mxu0 0.0
      %2486 = vmatprep.subr.mxu0 0.0
      %2487 = vmatpush1.msra.mxu0 0.0
      %2488 = vmatprep.subr.mxu0 0.0
      %2489 = vmatpush1.msra.mxu0 0.0
      %2490 = vmatprep.subr.mxu0 0.0
      %2491 = vmatpush1.msra.mxu0 0.0
      %2492 = vmatprep.subr.mxu0 0.0
      %2493 = vmatpush1.msra.mxu0 0.0
      %2494 = vmatprep.subr.mxu0 0.0
      %2495 = vmatpush1.msra.mxu0 0.0
      %2496 = vmatprep.subr.mxu0 0.0
      %2497 = vmatpush1.msra.mxu0 0.0
      %2498 = vmatprep.subr.mxu0 0.0
      %2499 = vmatpush1.msra.mxu0 0.0
      %2500 = vmatprep.subr.mxu0 0.0
      %2501 = vmatpush1.msra.mxu0 0.0
      %2502 = vmatprep.subr.mxu0 0.0
      %2503 = vmatpush1.msra.mxu0 0.0
      %2504 = vmatprep.subr.mxu0 0.0
      %2505 = vmatpush1.msra.mxu0 0.0
      %2506 = vmatprep.subr.mxu0 0.0
      %2507 = vmatpush1.msra.mxu0 0.0
      %2508 = vmatprep.subr.mxu0 0.0
      %2509 = vmatpush1.msra.mxu0 0.0
      %2510 = vmatprep.subr.mxu0 0.0
      %2511 = vmatpush1.msra.mxu0 0.0
      %2512 = vmatprep.subr.mxu0 0.0
      %2513 = vmatpush1.msra.mxu0 0.0
      %2514 = vmatprep.subr.mxu0 0.0
      %2515 = vmatpush1.msra.mxu0 0.0
      %2516 = vmatprep.subr.mxu0 0.0
      %2517 = vmatpush1.msra.mxu0 0.0
      %2518 = vmatprep.subr.mxu0 0.0
      %2519 = vmatpush1.msra.mxu0 0.0
      %2520 = vmatprep.subr.mxu0 0.0
      %2521 = vmatpush1.msra.mxu0 0.0
      %2522 = vmatprep.mubr.f32.mxu0 0.0
      %2523 = vmatmul.mubr.f32.gmra.mrb[0].mxu0 %v453
      %v2524 = vpop.f32.mrb[0].mxu0
      %v2525 = vadd.f32 0.0, %v2524
      %v2526 = vpop.f32.mrb[0].mxu0
      %2527 = vdwg.mxu0
      %v2528 = vadd.f32 %v2362, %v2525
      %v2529 = vxor.u32 %v2528, 2147483648
      %v2530 = vmul.f32 %v2529, 1.442695
      %v2531 = vpow.pop %v2530
      %v2532 = vadd.f32 %v2531, 1.0
      %v2533 = vrcp.pop %v2532
      %v2534 = vmul.f32 1.0, %v2533
      %v2535 = vtanh.pop %v2528
      %v2536 = vsel %vm200, %v2535, %v2534
      %v2537 = vmul.f32 %v2536, 0.0
      %2539 = vrot.lane.b32.xlu0 %v2536, 64
      %v2540 = vpop.permute.xlu0 %2539
      %v2542 = vmul.f32 %v2536, %v2540
      %2544 = vrot.lane.b32.xlu0 %v2542, 32
      %v2545 = vpop.permute.xlu0 %2544
      %v2547 = vadd.f32 %v2537, %v2545
      %v2548 = vtanh.pop %v2547
      %2550 = vrot.lane.b32.xlu0 %v2548, 64
      %v2551 = vpop.permute.xlu0 %2550
      %v2553 = vmul.f32 %v2536, %v2551
      %v2554 = vsel %vm553, %v2553, 0.0
      %v2555 = vsel %vm553, %v2547, 0.0
      %2557 = vrot.lane.b32.xlu0 %v2554, 32
      %v2558 = vpop.permute.xlu0 %2557
      %v2559 = vsel %vm451, %v2558, 0
      %2561 = vmatprep.subr.mxu0 0.0
      %2562 = vmatpush1.msra.mxu0 %v2450
      %2563 = vmatprep.subr.mxu0 0.0
      %2564 = vmatpush1.msra.mxu0 %v2451
      %2565 = vmatprep.subr.mxu0 0.0
      %2566 = vmatpush1.msra.mxu0 %v2452
      %2567 = vmatprep.subr.mxu0 0.0
      %2568 = vmatpush1.msra.mxu0 %v2453
      %2569 = vmatprep.subr.mxu0 0.0
      %2570 = vmatpush1.msra.mxu0 0.0
      %2571 = vmatprep.subr.mxu0 0.0
      %2572 = vmatpush1.msra.mxu0 0.0
      %2573 = vmatprep.subr.mxu0 0.0
      %2574 = vmatpush1.msra.mxu0 0.0
      %2575 = vmatprep.subr.mxu0 0.0
      %2576 = vmatpush1.msra.mxu0 0.0
      %2577 = vmatprep.subr.mxu0 0.0
      %2578 = vmatpush1.msra.mxu0 0.0
      %2579 = vmatprep.subr.mxu0 0.0
      %2580 = vmatpush1.msra.mxu0 0.0
      %2581 = vmatprep.subr.mxu0 0.0
      %2582 = vmatpush1.msra.mxu0 0.0
      %2583 = vmatprep.subr.mxu0 0.0
      %2584 = vmatpush1.msra.mxu0 0.0
      %2585 = vmatprep.subr.mxu0 0.0
      %2586 = vmatpush1.msra.mxu0 0.0
      %2587 = vmatprep.subr.mxu0 0.0
      %2588 = vmatpush1.msra.mxu0 0.0
      %2589 = vmatprep.subr.mxu0 0.0
      %2590 = vmatpush1.msra.mxu0 0.0
      %2591 = vmatprep.subr.mxu0 0.0
      %2592 = vmatpush1.msra.mxu0 0.0
      %2593 = vmatprep.subr.mxu0 0.0
      %2594 = vmatpush1.msra.mxu0 0.0
      %2595 = vmatprep.subr.mxu0 0.0
      %2596 = vmatpush1.msra.mxu0 0.0
      %2597 = vmatprep.subr.mxu0 0.0
      %2598 = vmatpush1.msra.mxu0 0.0
      %2599 = vmatprep.subr.mxu0 0.0
      %2600 = vmatpush1.msra.mxu0 0.0
      %2601 = vmatprep.subr.mxu0 0.0
      %2602 = vmatpush1.msra.mxu0 0.0
      %2603 = vmatprep.subr.mxu0 0.0
      %2604 = vmatpush1.msra.mxu0 0.0
      %2605 = vmatprep.subr.mxu0 0.0
      %2606 = vmatpush1.msra.mxu0 0.0
      %2607 = vmatprep.subr.mxu0 0.0
      %2608 = vmatpush1.msra.mxu0 0.0
      %2609 = vmatprep.subr.mxu0 0.0
      %2610 = vmatpush1.msra.mxu0 0.0
      %2611 = vmatprep.subr.mxu0 0.0
      %2612 = vmatpush1.msra.mxu0 0.0
      %2613 = vmatprep.subr.mxu0 0.0
      %2614 = vmatpush1.msra.mxu0 0.0
      %2615 = vmatprep.subr.mxu0 0.0
      %2616 = vmatpush1.msra.mxu0 0.0
      %2617 = vmatprep.subr.mxu0 0.0
      %2618 = vmatpush1.msra.mxu0 0.0
      %2619 = vmatprep.subr.mxu0 0.0
      %2620 = vmatpush1.msra.mxu0 0.0
      %2621 = vmatprep.subr.mxu0 0.0
      %2622 = vmatpush1.msra.mxu0 0.0
      %2623 = vmatprep.subr.mxu0 0.0
      %2624 = vmatpush1.msra.mxu0 0.0
      %2625 = vmatprep.mubr.f32.mxu0 0.0
      %2626 = vmatmul.mubr.f32.gmra.mrb[0].mxu0 %v2559
      %v2627 = vpop.f32.mrb[0].mxu0
      %v2628 = vadd.f32 0.0, %v2627
      %v2629 = vpop.f32.mrb[0].mxu0
      %2630 = vdwg.mxu0
      %v2632 = vrot.slane %v2628, 7
      %v2634 = vadd.f32 %v2362, %v2632
      %v2635 = vxor.u32 %v2634, 2147483648
      %v2636 = vmul.f32 %v2635, 1.442695
      %v2637 = vpow.pop %v2636
      %v2638 = vadd.f32 %v2637, 1.0
      %v2639 = vrcp.pop %v2638
      %v2640 = vmul.f32 1.0, %v2639
      %v2641 = vtanh.pop %v2634
      %v2642 = vsel %vm200, %v2641, %v2640
      %v2644 = vrot.slane %v2555, 7
      %v2646 = vmul.f32 %v2642, %v2644
      %2648 = vrot.lane.b32.xlu0 %v2642, 64
      %v2649 = vpop.permute.xlu0 %2648
      %v2651 = vmul.f32 %v2642, %v2649
      %2653 = vrot.lane.b32.xlu0 %v2651, 32
      %v2654 = vpop.permute.xlu0 %2653
      %v2656 = vadd.f32 %v2646, %v2654
      %v2657 = vtanh.pop %v2656
      %2659 = vrot.lane.b32.xlu0 %v2657, 64
      %v2660 = vpop.permute.xlu0 %2659
      %v2662 = vmul.f32 %v2642, %v2660
      %v2663 = vrot.slane %v2554, 7
      %v2665 = vsel %vm666, %v2662, %v2663
      %v2666 = vsel %vm666, %v2656, %v2644
      %v2668 = vrot.slane %v2665, 1
      %2669 = vrot.lane.b32.xlu0 %v2668, 32
      %v2670 = vpop.permute.xlu0 %2669
      %v2671 = vsel %vm451, %v2670, 0
      %2673 = vmatprep.subr.mxu0 0.0
      %2674 = vmatpush1.msra.mxu0 %v2450
      %2675 = vmatprep.subr.mxu0 0.0
      %2676 = vmatpush1.msra.mxu0 %v2451
      %2677 = vmatprep.subr.mxu0 0.0
      %2678 = vmatpush1.msra.mxu0 %v2452
      %2679 = vmatprep.subr.mxu0 0.0
      %2680 = vmatpush1.msra.mxu0 %v2453
      %2681 = vmatprep.subr.mxu0 0.0
      %2682 = vmatpush1.msra.mxu0 0.0
      %2683 = vmatprep.subr.mxu0 0.0
      %2684 = vmatpush1.msra.mxu0 0.0
      %2685 = vmatprep.subr.mxu0 0.0
      %2686 = vmatpush1.msra.mxu0 0.0
      %2687 = vmatprep.subr.mxu0 0.0
      %2688 = vmatpush1.msra.mxu0 0.0
      %2689 = vmatprep.subr.mxu0 0.0
      %2690 = vmatpush1.msra.mxu0 0.0
      %2691 = vmatprep.subr.mxu0 0.0
      %2692 = vmatpush1.msra.mxu0 0.0
      %2693 = vmatprep.subr.mxu0 0.0
      %2694 = vmatpush1.msra.mxu0 0.0
      %2695 = vmatprep.subr.mxu0 0.0
      %2696 = vmatpush1.msra.mxu0 0.0
      %2697 = vmatprep.subr.mxu0 0.0
      %2698 = vmatpush1.msra.mxu0 0.0
      %2699 = vmatprep.subr.mxu0 0.0
      %2700 = vmatpush1.msra.mxu0 0.0
      %2701 = vmatprep.subr.mxu0 0.0
      %2702 = vmatpush1.msra.mxu0 0.0
      %2703 = vmatprep.subr.mxu0 0.0
      %2704 = vmatpush1.msra.mxu0 0.0
      %2705 = vmatprep.subr.mxu0 0.0
      %2706 = vmatpush1.msra.mxu0 0.0
      %2707 = vmatprep.subr.mxu0 0.0
      %2708 = vmatpush1.msra.mxu0 0.0
      %2709 = vmatprep.subr.mxu0 0.0
      %2710 = vmatpush1.msra.mxu0 0.0
      %2711 = vmatprep.subr.mxu0 0.0
      %2712 = vmatpush1.msra.mxu0 0.0
      %2713 = vmatprep.subr.mxu0 0.0
      %2714 = vmatpush1.msra.mxu0 0.0
      %2715 = vmatprep.subr.mxu0 0.0
      %2716 = vmatpush1.msra.mxu0 0.0
      %2717 = vmatprep.subr.mxu0 0.0
      %2718 = vmatpush1.msra.mxu0 0.0
      %2719 = vmatprep.subr.mxu0 0.0
      %2720 = vmatpush1.msra.mxu0 0.0
      %2721 = vmatprep.subr.mxu0 0.0
      %2722 = vmatpush1.msra.mxu0 0.0
      %2723 = vmatprep.subr.mxu0 0.0
      %2724 = vmatpush1.msra.mxu0 0.0
      %2725 = vmatprep.subr.mxu0 0.0
      %2726 = vmatpush1.msra.mxu0 0.0
      %2727 = vmatprep.subr.mxu0 0.0
      %2728 = vmatpush1.msra.mxu0 0.0
      %2729 = vmatprep.subr.mxu0 0.0
      %2730 = vmatpush1.msra.mxu0 0.0
      %2731 = vmatprep.subr.mxu0 0.0
      %2732 = vmatpush1.msra.mxu0 0.0
      %2733 = vmatprep.subr.mxu0 0.0
      %2734 = vmatpush1.msra.mxu0 0.0
      %2735 = vmatprep.subr.mxu0 0.0
      %2736 = vmatpush1.msra.mxu0 0.0
      %2737 = vmatprep.mubr.f32.mxu0 0.0
      %2738 = vmatmul.mubr.f32.gmra.mrb[0].mxu0 %v2671
      %v2739 = vpop.f32.mrb[0].mxu0
      %v2740 = vadd.f32 0.0, %v2739
      %v2741 = vpop.f32.mrb[0].mxu0
      %2742 = vdwg.mxu0
      %v2744 = vrot.slane %v2740, 6
      %v2746 = vadd.f32 %v2362, %v2744
      %v2747 = vxor.u32 %v2746, 2147483648
      %v2748 = vmul.f32 %v2747, 1.442695
      %v2749 = vpow.pop %v2748
      %v2750 = vadd.f32 %v2749, 1.0
      %v2751 = vrcp.pop %v2750
      %v2752 = vmul.f32 1.0, %v2751
      %v2753 = vtanh.pop %v2746
      %v2754 = vsel %vm200, %v2753, %v2752
      %v2756 = vrot.slane %v2666, 7
      %v2758 = vmul.f32 %v2754, %v2756
      %2760 = vrot.lane.b32.xlu0 %v2754, 64
      %v2761 = vpop.permute.xlu0 %2760
      %v2763 = vmul.f32 %v2754, %v2761
      %2765 = vrot.lane.b32.xlu0 %v2763, 32
      %v2766 = vpop.permute.xlu0 %2765
      %v2768 = vadd.f32 %v2758, %v2766
      %v2769 = vtanh.pop %v2768
      %2771 = vrot.lane.b32.xlu0 %v2769, 64
      %v2772 = vpop.permute.xlu0 %2771
      %v2774 = vmul.f32 %v2754, %v2772
      %v2775 = vrot.slane %v2665, 7
      %v2777 = vsel %vm782, %v2774, %v2775
      %v2778 = vsel %vm782, %v2768, %v2756
      %v2780 = vrot.slane %v2777, 2
      %2781 = vrot.lane.b32.xlu0 %v2780, 32
      %v2782 = vpop.permute.xlu0 %2781
      %v2783 = vsel %vm451, %v2782, 0
      %2785 = vmatprep.subr.mxu0 0.0
      %2786 = vmatpush1.msra.mxu0 %v2450
      %2787 = vmatprep.subr.mxu0 0.0
      %2788 = vmatpush1.msra.mxu0 %v2451
      %2789 = vmatprep.subr.mxu0 0.0
      %2790 = vmatpush1.msra.mxu0 %v2452
      %2791 = vmatprep.subr.mxu0 0.0
      %2792 = vmatpush1.msra.mxu0 %v2453
      %2793 = vmatprep.subr.mxu0 0.0
      %2794 = vmatpush1.msra.mxu0 0.0
      %2795 = vmatprep.subr.mxu0 0.0
      %2796 = vmatpush1.msra.mxu0 0.0
      %2797 = vmatprep.subr.mxu0 0.0
      %2798 = vmatpush1.msra.mxu0 0.0
      %2799 = vmatprep.subr.mxu0 0.0
      %2800 = vmatpush1.msra.mxu0 0.0
      %2801 = vmatprep.subr.mxu0 0.0
      %2802 = vmatpush1.msra.mxu0 0.0
      %2803 = vmatprep.subr.mxu0 0.0
      %2804 = vmatpush1.msra.mxu0 0.0
      %2805 = vmatprep.subr.mxu0 0.0
      %2806 = vmatpush1.msra.mxu0 0.0
      %2807 = vmatprep.subr.mxu0 0.0
      %2808 = vmatpush1.msra.mxu0 0.0
      %2809 = vmatprep.subr.mxu0 0.0
      %2810 = vmatpush1.msra.mxu0 0.0
      %2811 = vmatprep.subr.mxu0 0.0
      %2812 = vmatpush1.msra.mxu0 0.0
      %2813 = vmatprep.subr.mxu0 0.0
      %2814 = vmatpush1.msra.mxu0 0.0
      %2815 = vmatprep.subr.mxu0 0.0
      %2816 = vmatpush1.msra.mxu0 0.0
      %2817 = vmatprep.subr.mxu0 0.0
      %2818 = vmatpush1.msra.mxu0 0.0
      %2819 = vmatprep.subr.mxu0 0.0
      %2820 = vmatpush1.msra.mxu0 0.0
      %2821 = vmatprep.subr.mxu0 0.0
      %2822 = vmatpush1.msra.mxu0 0.0
      %2823 = vmatprep.subr.mxu0 0.0
      %2824 = vmatpush1.msra.mxu0 0.0
      %2825 = vmatprep.subr.mxu0 0.0
      %2826 = vmatpush1.msra.mxu0 0.0
      %2827 = vmatprep.subr.mxu0 0.0
      %2828 = vmatpush1.msra.mxu0 0.0
      %2829 = vmatprep.subr.mxu0 0.0
      %2830 = vmatpush1.msra.mxu0 0.0
      %2831 = vmatprep.subr.mxu0 0.0
      %2832 = vmatpush1.msra.mxu0 0.0
      %2833 = vmatprep.subr.mxu0 0.0
      %2834 = vmatpush1.msra.mxu0 0.0
      %2835 = vmatprep.subr.mxu0 0.0
      %2836 = vmatpush1.msra.mxu0 0.0
      %2837 = vmatprep.subr.mxu0 0.0
      %2838 = vmatpush1.msra.mxu0 0.0
      %2839 = vmatprep.subr.mxu0 0.0
      %2840 = vmatpush1.msra.mxu0 0.0
      %2841 = vmatprep.subr.mxu0 0.0
      %2842 = vmatpush1.msra.mxu0 0.0
      %2843 = vmatprep.subr.mxu0 0.0
      %2844 = vmatpush1.msra.mxu0 0.0
      %2845 = vmatprep.subr.mxu0 0.0
      %2846 = vmatpush1.msra.mxu0 0.0
      %2847 = vmatprep.subr.mxu0 0.0
      %2848 = vmatpush1.msra.mxu0 0.0
      %2849 = vmatprep.mubr.f32.mxu0 0.0
      %2850 = vmatmul.mubr.f32.gmra.mrb[0].mxu0 %v2783
      %v2851 = vpop.f32.mrb[0].mxu0
      %v2852 = vadd.f32 0.0, %v2851
      %v2853 = vpop.f32.mrb[0].mxu0
      %2854 = vdwg.mxu0
      %v2856 = vrot.slane %v2852, 5
      %v2858 = vadd.f32 %v2362, %v2856
      %v2859 = vxor.u32 %v2858, 2147483648
      %v2860 = vmul.f32 %v2859, 1.442695
      %v2861 = vpow.pop %v2860
      %v2862 = vadd.f32 %v2861, 1.0
      %v2863 = vrcp.pop %v2862
      %v2864 = vmul.f32 1.0, %v2863
      %v2865 = vtanh.pop %v2858
      %v2866 = vsel %vm200, %v2865, %v2864
      %v2868 = vrot.slane %v2778, 7
      %v2870 = vmul.f32 %v2866, %v2868
      %2872 = vrot.lane.b32.xlu0 %v2866, 64
      %v2873 = vpop.permute.xlu0 %2872
      %v2875 = vmul.f32 %v2866, %v2873
      %2877 = vrot.lane.b32.xlu0 %v2875, 32
      %v2878 = vpop.permute.xlu0 %2877
      %v2880 = vadd.f32 %v2870, %v2878
      %v2881 = vtanh.pop %v2880
      %2883 = vrot.lane.b32.xlu0 %v2881, 64
      %v2884 = vpop.permute.xlu0 %2883
      %v2886 = vmul.f32 %v2866, %v2884
      %v2887 = vrot.slane %v2777, 7
      %v2889 = vsel %vm898, %v2886, %v2887
      %v2890 = vsel %vm898, %v2880, %v2868
      %v2892 = vrot.slane %v2889, 3
      %2893 = vrot.lane.b32.xlu0 %v2892, 32
      %v2894 = vpop.permute.xlu0 %2893
      %v2895 = vsel %vm451, %v2894, 0
      %2897 = vmatprep.subr.mxu0 0.0
      %2898 = vmatpush1.msra.mxu0 %v2450
      %2899 = vmatprep.subr.mxu0 0.0
      %2900 = vmatpush1.msra.mxu0 %v2451
      %2901 = vmatprep.subr.mxu0 0.0
      %2902 = vmatpush1.msra.mxu0 %v2452
      %2903 = vmatprep.subr.mxu0 0.0
      %2904 = vmatpush1.msra.mxu0 %v2453
      %2905 = vmatprep.subr.mxu0 0.0
      %2906 = vmatpush1.msra.mxu0 0.0
      %2907 = vmatprep.subr.mxu0 0.0
      %2908 = vmatpush1.msra.mxu0 0.0
      %2909 = vmatprep.subr.mxu0 0.0
      %2910 = vmatpush1.msra.mxu0 0.0
      %2911 = vmatprep.subr.mxu0 0.0
      %2912 = vmatpush1.msra.mxu0 0.0
      %2913 = vmatprep.subr.mxu0 0.0
      %2914 = vmatpush1.msra.mxu0 0.0
      %2915 = vmatprep.subr.mxu0 0.0
      %2916 = vmatpush1.msra.mxu0 0.0
      %2917 = vmatprep.subr.mxu0 0.0
      %2918 = vmatpush1.msra.mxu0 0.0
      %2919 = vmatprep.subr.mxu0 0.0
      %2920 = vmatpush1.msra.mxu0 0.0
      %2921 = vmatprep.subr.mxu0 0.0
      %2922 = vmatpush1.msra.mxu0 0.0
      %2923 = vmatprep.subr.mxu0 0.0
      %2924 = vmatpush1.msra.mxu0 0.0
      %2925 = vmatprep.subr.mxu0 0.0
      %2926 = vmatpush1.msra.mxu0 0.0
      %2927 = vmatprep.subr.mxu0 0.0
      %2928 = vmatpush1.msra.mxu0 0.0
      %2929 = vmatprep.subr.mxu0 0.0
      %2930 = vmatpush1.msra.mxu0 0.0
      %2931 = vmatprep.subr.mxu0 0.0
      %2932 = vmatpush1.msra.mxu0 0.0
      %2933 = vmatprep.subr.mxu0 0.0
      %2934 = vmatpush1.msra.mxu0 0.0
      %2935 = vmatprep.subr.mxu0 0.0
      %2936 = vmatpush1.msra.mxu0 0.0
      %2937 = vmatprep.subr.mxu0 0.0
      %2938 = vmatpush1.msra.mxu0 0.0
      %2939 = vmatprep.subr.mxu0 0.0
      %2940 = vmatpush1.msra.mxu0 0.0
      %2941 = vmatprep.subr.mxu0 0.0
      %2942 = vmatpush1.msra.mxu0 0.0
      %2943 = vmatprep.subr.mxu0 0.0
      %2944 = vmatpush1.msra.mxu0 0.0
      %2945 = vmatprep.subr.mxu0 0.0
      %2946 = vmatpush1.msra.mxu0 0.0
      %2947 = vmatprep.subr.mxu0 0.0
      %2948 = vmatpush1.msra.mxu0 0.0
      %2949 = vmatprep.subr.mxu0 0.0
      %2950 = vmatpush1.msra.mxu0 0.0
      %2951 = vmatprep.subr.mxu0 0.0
      %2952 = vmatpush1.msra.mxu0 0.0
      %2953 = vmatprep.subr.mxu0 0.0
      %2954 = vmatpush1.msra.mxu0 0.0
      %2955 = vmatprep.subr.mxu0 0.0
      %2956 = vmatpush1.msra.mxu0 0.0
      %2957 = vmatprep.subr.mxu0 0.0
      %2958 = vmatpush1.msra.mxu0 0.0
      %2959 = vmatprep.subr.mxu0 0.0
      %2960 = vmatpush1.msra.mxu0 0.0
      %2961 = vmatprep.mubr.f32.mxu0 0.0
      %2962 = vmatmul.mubr.f32.gmra.mrb[0].mxu0 %v2895
      %v2963 = vpop.f32.mrb[0].mxu0
      %v2964 = vadd.f32 0.0, %v2963
      %v2965 = vpop.f32.mrb[0].mxu0
      %2966 = vdwg.mxu0
      %v2968 = vrot.slane %v2964, 4
      %v2970 = vadd.f32 %v2362, %v2968
      %v2971 = vxor.u32 %v2970, 2147483648
      %v2972 = vmul.f32 %v2971, 1.442695
      %v2973 = vpow.pop %v2972
      %v2974 = vadd.f32 %v2973, 1.0
      %v2975 = vrcp.pop %v2974
      %v2976 = vmul.f32 1.0, %v2975
      %v2977 = vtanh.pop %v2970
      %v2978 = vsel %vm200, %v2977, %v2976
      %v2980 = vrot.slane %v2890, 7
      %v2982 = vmul.f32 %v2978, %v2980
      %2984 = vrot.lane.b32.xlu0 %v2978, 64
      %v2985 = vpop.permute.xlu0 %2984
      %v2987 = vmul.f32 %v2978, %v2985
      %2989 = vrot.lane.b32.xlu0 %v2987, 32
      %v2990 = vpop.permute.xlu0 %2989
      %v2992 = vadd.f32 %v2982, %v2990
      %v2993 = vtanh.pop %v2992
      %2995 = vrot.lane.b32.xlu0 %v2993, 64
      %v2996 = vpop.permute.xlu0 %2995
      %v2998 = vmul.f32 %v2978, %v2996
      %v2999 = vrot.slane %v2889, 7
      %v3001 = vsel %vm1014, %v2998, %v2999
      %v3002 = vsel %vm1014, %v2992, %v2980
      %v3004 = vrot.slane %v3001, 4
      %3005 = vrot.lane.b32.xlu0 %v3004, 32
      %v3006 = vpop.permute.xlu0 %3005
      %v3007 = vsel %vm451, %v3006, 0
      %3009 = vmatprep.subr.mxu0 0.0
      %3010 = vmatpush1.msra.mxu0 %v2450
      %3011 = vmatprep.subr.mxu0 0.0
      %3012 = vmatpush1.msra.mxu0 %v2451
      %3013 = vmatprep.subr.mxu0 0.0
      %3014 = vmatpush1.msra.mxu0 %v2452
      %3015 = vmatprep.subr.mxu0 0.0
      %3016 = vmatpush1.msra.mxu0 %v2453
      %3017 = vmatprep.subr.mxu0 0.0
      %3018 = vmatpush1.msra.mxu0 0.0
      %3019 = vmatprep.subr.mxu0 0.0
      %3020 = vmatpush1.msra.mxu0 0.0
      %3021 = vmatprep.subr.mxu0 0.0
      %3022 = vmatpush1.msra.mxu0 0.0
      %3023 = vmatprep.subr.mxu0 0.0
      %3024 = vmatpush1.msra.mxu0 0.0
      %3025 = vmatprep.subr.mxu0 0.0
      %3026 = vmatpush1.msra.mxu0 0.0
      %3027 = vmatprep.subr.mxu0 0.0
      %3028 = vmatpush1.msra.mxu0 0.0
      %3029 = vmatprep.subr.mxu0 0.0
      %3030 = vmatpush1.msra.mxu0 0.0
      %3031 = vmatprep.subr.mxu0 0.0
      %3032 = vmatpush1.msra.mxu0 0.0
      %3033 = vmatprep.subr.mxu0 0.0
      %3034 = vmatpush1.msra.mxu0 0.0
      %3035 = vmatprep.subr.mxu0 0.0
      %3036 = vmatpush1.msra.mxu0 0.0
      %3037 = vmatprep.subr.mxu0 0.0
      %3038 = vmatpush1.msra.mxu0 0.0
      %3039 = vmatprep.subr.mxu0 0.0
      %3040 = vmatpush1.msra.mxu0 0.0
      %3041 = vmatprep.subr.mxu0 0.0
      %3042 = vmatpush1.msra.mxu0 0.0
      %3043 = vmatprep.subr.mxu0 0.0
      %3044 = vmatpush1.msra.mxu0 0.0
      %3045 = vmatprep.subr.mxu0 0.0
      %3046 = vmatpush1.msra.mxu0 0.0
      %3047 = vmatprep.subr.mxu0 0.0
      %3048 = vmatpush1.msra.mxu0 0.0
      %3049 = vmatprep.subr.mxu0 0.0
      %3050 = vmatpush1.msra.mxu0 0.0
      %3051 = vmatprep.subr.mxu0 0.0
      %3052 = vmatpush1.msra.mxu0 0.0
      %3053 = vmatprep.subr.mxu0 0.0
      %3054 = vmatpush1.msra.mxu0 0.0
      %3055 = vmatprep.subr.mxu0 0.0
      %3056 = vmatpush1.msra.mxu0 0.0
      %3057 = vmatprep.subr.mxu0 0.0
      %3058 = vmatpush1.msra.mxu0 0.0
      %3059 = vmatprep.subr.mxu0 0.0
      %3060 = vmatpush1.msra.mxu0 0.0
      %3061 = vmatprep.subr.mxu0 0.0
      %3062 = vmatpush1.msra.mxu0 0.0
      %3063 = vmatprep.subr.mxu0 0.0
      %3064 = vmatpush1.msra.mxu0 0.0
      %3065 = vmatprep.subr.mxu0 0.0
      %3066 = vmatpush1.msra.mxu0 0.0
      %3067 = vmatprep.subr.mxu0 0.0
      %3068 = vmatpush1.msra.mxu0 0.0
      %3069 = vmatprep.subr.mxu0 0.0
      %3070 = vmatpush1.msra.mxu0 0.0
      %3071 = vmatprep.subr.mxu0 0.0
      %3072 = vmatpush1.msra.mxu0 0.0
      %3073 = vmatprep.mubr.f32.mxu0 0.0
      %3074 = vmatmul.mubr.f32.gmra.mrb[0].mxu0 %v3007
      %v3075 = vpop.f32.mrb[0].mxu0
      %v3076 = vadd.f32 0.0, %v3075
      %v3077 = vpop.f32.mrb[0].mxu0
      %3078 = vdwg.mxu0
      %v3080 = vrot.slane %v3076, 3
      %v3082 = vadd.f32 %v2362, %v3080
      %v3083 = vxor.u32 %v3082, 2147483648
      %v3084 = vmul.f32 %v3083, 1.442695
      %v3085 = vpow.pop %v3084
      %v3086 = vadd.f32 %v3085, 1.0
      %v3087 = vrcp.pop %v3086
      %v3088 = vmul.f32 1.0, %v3087
      %v3089 = vtanh.pop %v3082
      %v3090 = vsel %vm200, %v3089, %v3088
      %v3092 = vrot.slane %v3002, 7
      %v3094 = vmul.f32 %v3090, %v3092
      %3096 = vrot.lane.b32.xlu0 %v3090, 64
      %v3097 = vpop.permute.xlu0 %3096
      %v3099 = vmul.f32 %v3090, %v3097
      %3101 = vrot.lane.b32.xlu0 %v3099, 32
      %v3102 = vpop.permute.xlu0 %3101
      %v3104 = vadd.f32 %v3094, %v3102
      %v3105 = vtanh.pop %v3104
      %3107 = vrot.lane.b32.xlu0 %v3105, 64
      %v3108 = vpop.permute.xlu0 %3107
      %v3110 = vmul.f32 %v3090, %v3108
      %v3111 = vrot.slane %v3001, 7
      %v3113 = vsel %vm1130, %v3110, %v3111
      %v3114 = vsel %vm1130, %v3104, %v3092
      %v3116 = vrot.slane %v3113, 5
      %3117 = vrot.lane.b32.xlu0 %v3116, 32
      %v3118 = vpop.permute.xlu0 %3117
      %v3119 = vsel %vm451, %v3118, 0
      %3121 = vmatprep.subr.mxu0 0.0
      %3122 = vmatpush1.msra.mxu0 %v2450
      %3123 = vmatprep.subr.mxu0 0.0
      %3124 = vmatpush1.msra.mxu0 %v2451
      %3125 = vmatprep.subr.mxu0 0.0
      %3126 = vmatpush1.msra.mxu0 %v2452
      %3127 = vmatprep.subr.mxu0 0.0
      %3128 = vmatpush1.msra.mxu0 %v2453
      %3129 = vmatprep.subr.mxu0 0.0
      %3130 = vmatpush1.msra.mxu0 0.0
      %3131 = vmatprep.subr.mxu0 0.0
      %3132 = vmatpush1.msra.mxu0 0.0
      %3133 = vmatprep.subr.mxu0 0.0
      %3134 = vmatpush1.msra.mxu0 0.0
      %3135 = vmatprep.subr.mxu0 0.0
      %3136 = vmatpush1.msra.mxu0 0.0
      %3137 = vmatprep.subr.mxu0 0.0
      %3138 = vmatpush1.msra.mxu0 0.0
      %3139 = vmatprep.subr.mxu0 0.0
      %3140 = vmatpush1.msra.mxu0 0.0
      %3141 = vmatprep.subr.mxu0 0.0
      %3142 = vmatpush1.msra.mxu0 0.0
      %3143 = vmatprep.subr.mxu0 0.0
      %3144 = vmatpush1.msra.mxu0 0.0
      %3145 = vmatprep.subr.mxu0 0.0
      %3146 = vmatpush1.msra.mxu0 0.0
      %3147 = vmatprep.subr.mxu0 0.0
      %3148 = vmatpush1.msra.mxu0 0.0
      %3149 = vmatprep.subr.mxu0 0.0
      %3150 = vmatpush1.msra.mxu0 0.0
      %3151 = vmatprep.subr.mxu0 0.0
      %3152 = vmatpush1.msra.mxu0 0.0
      %3153 = vmatprep.subr.mxu0 0.0
      %3154 = vmatpush1.msra.mxu0 0.0
      %3155 = vmatprep.subr.mxu0 0.0
      %3156 = vmatpush1.msra.mxu0 0.0
      %3157 = vmatprep.subr.mxu0 0.0
      %3158 = vmatpush1.msra.mxu0 0.0
      %3159 = vmatprep.subr.mxu0 0.0
      %3160 = vmatpush1.msra.mxu0 0.0
      %3161 = vmatprep.subr.mxu0 0.0
      %3162 = vmatpush1.msra.mxu0 0.0
      %3163 = vmatprep.subr.mxu0 0.0
      %3164 = vmatpush1.msra.mxu0 0.0
      %3165 = vmatprep.subr.mxu0 0.0
      %3166 = vmatpush1.msra.mxu0 0.0
      %3167 = vmatprep.subr.mxu0 0.0
      %3168 = vmatpush1.msra.mxu0 0.0
      %3169 = vmatprep.subr.mxu0 0.0
      %3170 = vmatpush1.msra.mxu0 0.0
      %3171 = vmatprep.subr.mxu0 0.0
      %3172 = vmatpush1.msra.mxu0 0.0
      %3173 = vmatprep.subr.mxu0 0.0
      %3174 = vmatpush1.msra.mxu0 0.0
      %3175 = vmatprep.subr.mxu0 0.0
      %3176 = vmatpush1.msra.mxu0 0.0
      %3177 = vmatprep.subr.mxu0 0.0
      %3178 = vmatpush1.msra.mxu0 0.0
      %3179 = vmatprep.subr.mxu0 0.0
      %3180 = vmatpush1.msra.mxu0 0.0
      %3181 = vmatprep.subr.mxu0 0.0
      %3182 = vmatpush1.msra.mxu0 0.0
      %3183 = vmatprep.subr.mxu0 0.0
      %3184 = vmatpush1.msra.mxu0 0.0
      %3185 = vmatprep.mubr.f32.mxu0 0.0
      %3186 = vmatmul.mubr.f32.gmra.mrb[0].mxu0 %v3119
      %v3187 = vpop.f32.mrb[0].mxu0
      %v3188 = vadd.f32 0.0, %v3187
      %v3189 = vpop.f32.mrb[0].mxu0
      %3190 = vdwg.mxu0
      %v3192 = vrot.slane %v3188, 2
      %v3194 = vadd.f32 %v2362, %v3192
      %v3195 = vxor.u32 %v3194, 2147483648
      %v3196 = vmul.f32 %v3195, 1.442695
      %v3197 = vpow.pop %v3196
      %v3198 = vadd.f32 %v3197, 1.0
      %v3199 = vrcp.pop %v3198
      %v3200 = vmul.f32 1.0, %v3199
      %v3201 = vtanh.pop %v3194
      %v3202 = vsel %vm200, %v3201, %v3200
      %v3204 = vrot.slane %v3114, 7
      %v3206 = vmul.f32 %v3202, %v3204
      %3208 = vrot.lane.b32.xlu0 %v3202, 64
      %v3209 = vpop.permute.xlu0 %3208
      %v3211 = vmul.f32 %v3202, %v3209
      %3213 = vrot.lane.b32.xlu0 %v3211, 32
      %v3214 = vpop.permute.xlu0 %3213
      %v3216 = vadd.f32 %v3206, %v3214
      %v3217 = vtanh.pop %v3216
      %3219 = vrot.lane.b32.xlu0 %v3217, 64
      %v3220 = vpop.permute.xlu0 %3219
      %v3222 = vmul.f32 %v3202, %v3220
      %v3223 = vrot.slane %v3113, 7
      %v3225 = vsel %vm1246, %v3222, %v3223
      %v3226 = vsel %vm1246, %v3216, %v3204
      %v3228 = vrot.slane %v3225, 6
      %3229 = vrot.lane.b32.xlu0 %v3228, 32
      %v3230 = vpop.permute.xlu0 %3229
      %v3231 = vsel %vm451, %v3230, 0
      %3233 = vmatprep.subr.mxu0 0.0
      %3234 = vmatpush1.msra.mxu0 %v2450
      %3235 = vmatprep.subr.mxu0 0.0
      %3236 = vmatpush1.msra.mxu0 %v2451
      %3237 = vmatprep.subr.mxu0 0.0
      %3238 = vmatpush1.msra.mxu0 %v2452
      %3239 = vmatprep.subr.mxu0 0.0
      %3240 = vmatpush1.msra.mxu0 %v2453
      %3241 = vmatprep.subr.mxu0 0.0
      %3242 = vmatpush1.msra.mxu0 0.0
      %3243 = vmatprep.subr.mxu0 0.0
      %3244 = vmatpush1.msra.mxu0 0.0
      %3245 = vmatprep.subr.mxu0 0.0
      %3246 = vmatpush1.msra.mxu0 0.0
      %3247 = vmatprep.subr.mxu0 0.0
      %3248 = vmatpush1.msra.mxu0 0.0
      %3249 = vmatprep.subr.mxu0 0.0
      %3250 = vmatpush1.msra.mxu0 0.0
      %3251 = vmatprep.subr.mxu0 0.0
      %3252 = vmatpush1.msra.mxu0 0.0
      %3253 = vmatprep.subr.mxu0 0.0
      %3254 = vmatpush1.msra.mxu0 0.0
      %3255 = vmatprep.subr.mxu0 0.0
      %3256 = vmatpush1.msra.mxu0 0.0
      %3257 = vmatprep.subr.mxu0 0.0
      %3258 = vmatpush1.msra.mxu0 0.0
      %3259 = vmatprep.subr.mxu0 0.0
      %3260 = vmatpush1.msra.mxu0 0.0
      %3261 = vmatprep.subr.mxu0 0.0
      %3262 = vmatpush1.msra.mxu0 0.0
      %3263 = vmatprep.subr.mxu0 0.0
      %3264 = vmatpush1.msra.mxu0 0.0
      %3265 = vmatprep.subr.mxu0 0.0
      %3266 = vmatpush1.msra.mxu0 0.0
      %3267 = vmatprep.subr.mxu0 0.0
      %3268 = vmatpush1.msra.mxu0 0.0
      %3269 = vmatprep.subr.mxu0 0.0
      %3270 = vmatpush1.msra.mxu0 0.0
      %3271 = vmatprep.subr.mxu0 0.0
      %3272 = vmatpush1.msra.mxu0 0.0
      %3273 = vmatprep.subr.mxu0 0.0
      %3274 = vmatpush1.msra.mxu0 0.0
      %3275 = vmatprep.subr.mxu0 0.0
      %3276 = vmatpush1.msra.mxu0 0.0
      %3277 = vmatprep.subr.mxu0 0.0
      %3278 = vmatpush1.msra.mxu0 0.0
      %3279 = vmatprep.subr.mxu0 0.0
      %3280 = vmatpush1.msra.mxu0 0.0
      %3281 = vmatprep.subr.mxu0 0.0
      %3282 = vmatpush1.msra.mxu0 0.0
      %3283 = vmatprep.subr.mxu0 0.0
      %3284 = vmatpush1.msra.mxu0 0.0
      %3285 = vmatprep.subr.mxu0 0.0
      %3286 = vmatpush1.msra.mxu0 0.0
      %3287 = vmatprep.subr.mxu0 0.0
      %3288 = vmatpush1.msra.mxu0 0.0
      %3289 = vmatprep.subr.mxu0 0.0
      %3290 = vmatpush1.msra.mxu0 0.0
      %3291 = vmatprep.subr.mxu0 0.0
      %3292 = vmatpush1.msra.mxu0 0.0
      %3293 = vmatprep.subr.mxu0 0.0
      %3294 = vmatpush1.msra.mxu0 0.0
      %3295 = vmatprep.subr.mxu0 0.0
      %3296 = vmatpush1.msra.mxu0 0.0
      %3297 = vmatprep.mubr.f32.mxu0 0.0
      %3298 = vmatmul.mubr.f32.gmra.mrb[0].mxu0 %v3231
      %v3299 = vpop.f32.mrb[0].mxu0
      %v3300 = vadd.f32 0.0, %v3299
      %v3301 = vpop.f32.mrb[0].mxu0
      %3302 = vdwg.mxu0
      %v3304 = vrot.slane %v3300, 1
      %v3306 = vadd.f32 %v2362, %v3304
      %v3307 = vxor.u32 %v3306, 2147483648
      %v3308 = vmul.f32 %v3307, 1.442695
      %v3309 = vpow.pop %v3308
      %v3310 = vadd.f32 %v3309, 1.0
      %v3311 = vrcp.pop %v3310
      %v3312 = vmul.f32 1.0, %v3311
      %v3313 = vtanh.pop %v3306
      %v3314 = vsel %vm200, %v3313, %v3312
      %v3316 = vrot.slane %v3226, 7
      %v3318 = vmul.f32 %v3314, %v3316
      %3320 = vrot.lane.b32.xlu0 %v3314, 64
      %v3321 = vpop.permute.xlu0 %3320
      %v3323 = vmul.f32 %v3314, %v3321
      %3325 = vrot.lane.b32.xlu0 %v3323, 32
      %v3326 = vpop.permute.xlu0 %3325
      %v3328 = vadd.f32 %v3318, %v3326
      %v3329 = vtanh.pop %v3328
      %3331 = vrot.lane.b32.xlu0 %v3329, 64
      %v3332 = vpop.permute.xlu0 %3331
      %v3334 = vmul.f32 %v3314, %v3332
      %v3335 = vrot.slane %v3225, 7
      %v3337 = vsel %vm1362, %v3334, %v3335
      %3338 = vmatprep.subr.mxu0 0.0
      %3339 = vmatpush1.msra.mxu0 %v2454
      %3340 = vmatprep.subr.mxu0 0.0
      %3341 = vmatpush1.msra.mxu0 %v2455
      %3342 = vmatprep.subr.mxu0 0.0
      %3343 = vmatpush1.msra.mxu0 %v2456
      %3344 = vmatprep.subr.mxu0 0.0
      %3345 = vmatpush1.msra.mxu0 %v2457
      %3346 = vmatprep.subr.mxu0 0.0
      %3347 = vmatpush1.msra.mxu0 0.0
      %3348 = vmatprep.subr.mxu0 0.0
      %3349 = vmatpush1.msra.mxu0 0.0
      %3350 = vmatprep.subr.mxu0 0.0
      %3351 = vmatpush1.msra.mxu0 0.0
      %3352 = vmatprep.subr.mxu0 0.0
      %3353 = vmatpush1.msra.mxu0 0.0
      %3354 = vmatprep.subr.mxu0 0.0
      %3355 = vmatpush1.msra.mxu0 0.0
      %3356 = vmatprep.subr.mxu0 0.0
      %3357 = vmatpush1.msra.mxu0 0.0
      %3358 = vmatprep.subr.mxu0 0.0
      %3359 = vmatpush1.msra.mxu0 0.0
      %3360 = vmatprep.subr.mxu0 0.0
      %3361 = vmatpush1.msra.mxu0 0.0
      %3362 = vmatprep.subr.mxu0 0.0
      %3363 = vmatpush1.msra.mxu0 0.0
      %3364 = vmatprep.subr.mxu0 0.0
      %3365 = vmatpush1.msra.mxu0 0.0
      %3366 = vmatprep.subr.mxu0 0.0
      %3367 = vmatpush1.msra.mxu0 0.0
      %3368 = vmatprep.subr.mxu0 0.0
      %3369 = vmatpush1.msra.mxu0 0.0
      %3370 = vmatprep.subr.mxu0 0.0
      %3371 = vmatpush1.msra.mxu0 0.0
      %3372 = vmatprep.subr.mxu0 0.0
      %3373 = vmatpush1.msra.mxu0 0.0
      %3374 = vmatprep.subr.mxu0 0.0
      %3375 = vmatpush1.msra.mxu0 0.0
      %3376 = vmatprep.subr.mxu0 0.0
      %3377 = vmatpush1.msra.mxu0 0.0
      %3378 = vmatprep.subr.mxu0 0.0
      %3379 = vmatpush1.msra.mxu0 0.0
      %3380 = vmatprep.subr.mxu0 0.0
      %3381 = vmatpush1.msra.mxu0 0.0
      %3382 = vmatprep.subr.mxu0 0.0
      %3383 = vmatpush1.msra.mxu0 0.0
      %3384 = vmatprep.subr.mxu0 0.0
      %3385 = vmatpush1.msra.mxu0 0.0
      %3386 = vmatprep.subr.mxu0 0.0
      %3387 = vmatpush1.msra.mxu0 0.0
      %3388 = vmatprep.subr.mxu0 0.0
      %3389 = vmatpush1.msra.mxu0 0.0
      %3390 = vmatprep.subr.mxu0 0.0
      %3391 = vmatpush1.msra.mxu0 0.0
      %3392 = vmatprep.subr.mxu0 0.0
      %3393 = vmatpush1.msra.mxu0 0.0
      %3394 = vmatprep.subr.mxu0 0.0
      %3395 = vmatpush1.msra.mxu0 0.0
      %3396 = vmatprep.subr.mxu0 0.0
      %3397 = vmatpush1.msra.mxu0 0.0
      %3398 = vmatprep.subr.mxu0 0.0
      %3399 = vmatpush1.msra.mxu0 0.0
      %3400 = vmatprep.subr.mxu0 0.0
      %3401 = vmatpush1.msra.mxu0 0.0
      %3402 = vmatprep.mubr.f32.mxu0 0.0
      %3403 = vmatmul.mubr.f32.gmra.mrb[0].mxu0 %v453
      %v3404 = vpop.f32.mrb[0].mxu0
      %v3405 = vadd.f32 0.0, %v3404
      %v3406 = vpop.f32.mrb[0].mxu0
      %3407 = vdwg.mxu0
      %v3409 = vrot.slane %v3405, 1
      %v3411 = vadd.f32 %v2447, %v3409
      %v3412 = vxor.u32 %v3411, 2147483648
      %v3413 = vmul.f32 %v3412, 1.442695
      %v3414 = vpow.pop %v3413
      %v3415 = vadd.f32 %v3414, 1.0
      %v3416 = vrcp.pop %v3415
      %v3417 = vmul.f32 1.0, %v3416
      %v3418 = vtanh.pop %v3411
      %v3419 = vsel %vm200, %v3418, %v3417
      %v3420 = vmul.f32 %v3419, 0.0
      %3422 = vrot.lane.b32.xlu0 %v3419, 64
      %v3423 = vpop.permute.xlu0 %3422
      %v3425 = vmul.f32 %v3419, %v3423
      %3427 = vrot.lane.b32.xlu0 %v3425, 32
      %v3428 = vpop.permute.xlu0 %3427
      %v3430 = vadd.f32 %v3420, %v3428
      %v3431 = vtanh.pop %v3430
      %3433 = vrot.lane.b32.xlu0 %v3431, 64
      %v3434 = vpop.permute.xlu0 %3433
      %v3436 = vmul.f32 %v3419, %v3434
      %v3437 = vsel %vm1362, %v3436, 0.0
      %v3438 = vsel %vm1362, %v3430, 0.0
      %v3440 = vrot.slane %v3437, 7
      %3441 = vrot.lane.b32.xlu0 %v3440, 32
      %v3442 = vpop.permute.xlu0 %3441
      %v3443 = vsel %vm451, %v3442, 0
      %3445 = vmatprep.subr.mxu0 0.0
      %3446 = vmatpush1.msra.mxu0 %v2454
      %3447 = vmatprep.subr.mxu0 0.0
      %3448 = vmatpush1.msra.mxu0 %v2455
      %3449 = vmatprep.subr.mxu0 0.0
      %3450 = vmatpush1.msra.mxu0 %v2456
      %3451 = vmatprep.subr.mxu0 0.0
      %3452 = vmatpush1.msra.mxu0 %v2457
      %3453 = vmatprep.subr.mxu0 0.0
      %3454 = vmatpush1.msra.mxu0 0.0
      %3455 = vmatprep.subr.mxu0 0.0
      %3456 = vmatpush1.msra.mxu0 0.0
      %3457 = vmatprep.subr.mxu0 0.0
      %3458 = vmatpush1.msra.mxu0 0.0
      %3459 = vmatprep.subr.mxu0 0.0
      %3460 = vmatpush1.msra.mxu0 0.0
      %3461 = vmatprep.subr.mxu0 0.0
      %3462 = vmatpush1.msra.mxu0 0.0
      %3463 = vmatprep.subr.mxu0 0.0
      %3464 = vmatpush1.msra.mxu0 0.0
      %3465 = vmatprep.subr.mxu0 0.0
      %3466 = vmatpush1.msra.mxu0 0.0
      %3467 = vmatprep.subr.mxu0 0.0
      %3468 = vmatpush1.msra.mxu0 0.0
      %3469 = vmatprep.subr.mxu0 0.0
      %3470 = vmatpush1.msra.mxu0 0.0
      %3471 = vmatprep.subr.mxu0 0.0
      %3472 = vmatpush1.msra.mxu0 0.0
      %3473 = vmatprep.subr.mxu0 0.0
      %3474 = vmatpush1.msra.mxu0 0.0
      %3475 = vmatprep.subr.mxu0 0.0
      %3476 = vmatpush1.msra.mxu0 0.0
      %3477 = vmatprep.subr.mxu0 0.0
      %3478 = vmatpush1.msra.mxu0 0.0
      %3479 = vmatprep.subr.mxu0 0.0
      %3480 = vmatpush1.msra.mxu0 0.0
      %3481 = vmatprep.subr.mxu0 0.0
      %3482 = vmatpush1.msra.mxu0 0.0
      %3483 = vmatprep.subr.mxu0 0.0
      %3484 = vmatpush1.msra.mxu0 0.0
      %3485 = vmatprep.subr.mxu0 0.0
      %3486 = vmatpush1.msra.mxu0 0.0
      %3487 = vmatprep.subr.mxu0 0.0
      %3488 = vmatpush1.msra.mxu0 0.0
      %3489 = vmatprep.subr.mxu0 0.0
      %3490 = vmatpush1.msra.mxu0 0.0
      %3491 = vmatprep.subr.mxu0 0.0
      %3492 = vmatpush1.msra.mxu0 0.0
      %3493 = vmatprep.subr.mxu0 0.0
      %3494 = vmatpush1.msra.mxu0 0.0
      %3495 = vmatprep.subr.mxu0 0.0
      %3496 = vmatpush1.msra.mxu0 0.0
      %3497 = vmatprep.subr.mxu0 0.0
      %3498 = vmatpush1.msra.mxu0 0.0
      %3499 = vmatprep.subr.mxu0 0.0
      %3500 = vmatpush1.msra.mxu0 0.0
      %3501 = vmatprep.subr.mxu0 0.0
      %3502 = vmatpush1.msra.mxu0 0.0
      %3503 = vmatprep.subr.mxu0 0.0
      %3504 = vmatpush1.msra.mxu0 0.0
      %3505 = vmatprep.subr.mxu0 0.0
      %3506 = vmatpush1.msra.mxu0 0.0
      %3507 = vmatprep.subr.mxu0 0.0
      %3508 = vmatpush1.msra.mxu0 0.0
      %3509 = vmatprep.mubr.f32.mxu0 0.0
      %3510 = vmatmul.mubr.f32.gmra.mrb[0].mxu0 %v3443
      %v3511 = vpop.f32.mrb[0].mxu0
      %v3512 = vadd.f32 0.0, %v3511
      %v3513 = vpop.f32.mrb[0].mxu0
      %3514 = vdwg.mxu0
      %v3516 = vrot.slane %v3512, 2
      %v3518 = vadd.f32 %v2447, %v3516
      %v3519 = vxor.u32 %v3518, 2147483648
      %v3520 = vmul.f32 %v3519, 1.442695
      %v3521 = vpow.pop %v3520
      %v3522 = vadd.f32 %v3521, 1.0
      %v3523 = vrcp.pop %v3522
      %v3524 = vmul.f32 1.0, %v3523
      %v3525 = vtanh.pop %v3518
      %v3526 = vsel %vm200, %v3525, %v3524
      %v3528 = vrot.slane %v3438, 1
      %v3530 = vmul.f32 %v3526, %v3528
      %3532 = vrot.lane.b32.xlu0 %v3526, 64
      %v3533 = vpop.permute.xlu0 %3532
      %v3535 = vmul.f32 %v3526, %v3533
      %3537 = vrot.lane.b32.xlu0 %v3535, 32
      %v3538 = vpop.permute.xlu0 %3537
      %v3540 = vadd.f32 %v3530, %v3538
      %v3541 = vtanh.pop %v3540
      %3543 = vrot.lane.b32.xlu0 %v3541, 64
      %v3544 = vpop.permute.xlu0 %3543
      %v3546 = vmul.f32 %v3526, %v3544
      %v3547 = vrot.slane %v3437, 1
      %v3549 = vsel %vm1246, %v3546, %v3547
      %v3550 = vsel %vm1246, %v3540, %v3528
      %v3552 = vrot.slane %v3549, 6
      %3553 = vrot.lane.b32.xlu0 %v3552, 32
      %v3554 = vpop.permute.xlu0 %3553
      %v3555 = vsel %vm451, %v3554, 0
      %3557 = vmatprep.subr.mxu0 0.0
      %3558 = vmatpush1.msra.mxu0 %v2454
      %3559 = vmatprep.subr.mxu0 0.0
      %3560 = vmatpush1.msra.mxu0 %v2455
      %3561 = vmatprep.subr.mxu0 0.0
      %3562 = vmatpush1.msra.mxu0 %v2456
      %3563 = vmatprep.subr.mxu0 0.0
      %3564 = vmatpush1.msra.mxu0 %v2457
      %3565 = vmatprep.subr.mxu0 0.0
      %3566 = vmatpush1.msra.mxu0 0.0
      %3567 = vmatprep.subr.mxu0 0.0
      %3568 = vmatpush1.msra.mxu0 0.0
      %3569 = vmatprep.subr.mxu0 0.0
      %3570 = vmatpush1.msra.mxu0 0.0
      %3571 = vmatprep.subr.mxu0 0.0
      %3572 = vmatpush1.msra.mxu0 0.0
      %3573 = vmatprep.subr.mxu0 0.0
      %3574 = vmatpush1.msra.mxu0 0.0
      %3575 = vmatprep.subr.mxu0 0.0
      %3576 = vmatpush1.msra.mxu0 0.0
      %3577 = vmatprep.subr.mxu0 0.0
      %3578 = vmatpush1.msra.mxu0 0.0
      %3579 = vmatprep.subr.mxu0 0.0
      %3580 = vmatpush1.msra.mxu0 0.0
      %3581 = vmatprep.subr.mxu0 0.0
      %3582 = vmatpush1.msra.mxu0 0.0
      %3583 = vmatprep.subr.mxu0 0.0
      %3584 = vmatpush1.msra.mxu0 0.0
      %3585 = vmatprep.subr.mxu0 0.0
      %3586 = vmatpush1.msra.mxu0 0.0
      %3587 = vmatprep.subr.mxu0 0.0
      %3588 = vmatpush1.msra.mxu0 0.0
      %3589 = vmatprep.subr.mxu0 0.0
      %3590 = vmatpush1.msra.mxu0 0.0
      %3591 = vmatprep.subr.mxu0 0.0
      %3592 = vmatpush1.msra.mxu0 0.0
      %3593 = vmatprep.subr.mxu0 0.0
      %3594 = vmatpush1.msra.mxu0 0.0
      %3595 = vmatprep.subr.mxu0 0.0
      %3596 = vmatpush1.msra.mxu0 0.0
      %3597 = vmatprep.subr.mxu0 0.0
      %3598 = vmatpush1.msra.mxu0 0.0
      %3599 = vmatprep.subr.mxu0 0.0
      %3600 = vmatpush1.msra.mxu0 0.0
      %3601 = vmatprep.subr.mxu0 0.0
      %3602 = vmatpush1.msra.mxu0 0.0
      %3603 = vmatprep.subr.mxu0 0.0
      %3604 = vmatpush1.msra.mxu0 0.0
      %3605 = vmatprep.subr.mxu0 0.0
      %3606 = vmatpush1.msra.mxu0 0.0
      %3607 = vmatprep.subr.mxu0 0.0
      %3608 = vmatpush1.msra.mxu0 0.0
      %3609 = vmatprep.subr.mxu0 0.0
      %3610 = vmatpush1.msra.mxu0 0.0
      %3611 = vmatprep.subr.mxu0 0.0
      %3612 = vmatpush1.msra.mxu0 0.0
      %3613 = vmatprep.subr.mxu0 0.0
      %3614 = vmatpush1.msra.mxu0 0.0
      %3615 = vmatprep.subr.mxu0 0.0
      %3616 = vmatpush1.msra.mxu0 0.0
      %3617 = vmatprep.subr.mxu0 0.0
      %3618 = vmatpush1.msra.mxu0 0.0
      %3619 = vmatprep.subr.mxu0 0.0
      %3620 = vmatpush1.msra.mxu0 0.0
      %3621 = vmatprep.mubr.f32.mxu0 0.0
      %3622 = vmatmul.mubr.f32.gmra.mrb[0].mxu0 %v3555
      %v3623 = vpop.f32.mrb[0].mxu0
      %v3624 = vadd.f32 0.0, %v3623
      %v3625 = vpop.f32.mrb[0].mxu0
      %3626 = vdwg.mxu0
      %v3628 = vrot.slane %v3624, 3
      %v3630 = vadd.f32 %v2447, %v3628
      %v3631 = vxor.u32 %v3630, 2147483648
      %v3632 = vmul.f32 %v3631, 1.442695
      %v3633 = vpow.pop %v3632
      %v3634 = vadd.f32 %v3633, 1.0
      %v3635 = vrcp.pop %v3634
      %v3636 = vmul.f32 1.0, %v3635
      %v3637 = vtanh.pop %v3630
      %v3638 = vsel %vm200, %v3637, %v3636
      %v3640 = vrot.slane %v3550, 1
      %v3642 = vmul.f32 %v3638, %v3640
      %3644 = vrot.lane.b32.xlu0 %v3638, 64
      %v3645 = vpop.permute.xlu0 %3644
      %v3647 = vmul.f32 %v3638, %v3645
      %3649 = vrot.lane.b32.xlu0 %v3647, 32
      %v3650 = vpop.permute.xlu0 %3649
      %v3652 = vadd.f32 %v3642, %v3650
      %v3653 = vtanh.pop %v3652
      %3655 = vrot.lane.b32.xlu0 %v3653, 64
      %v3656 = vpop.permute.xlu0 %3655
      %v3658 = vmul.f32 %v3638, %v3656
      %v3659 = vrot.slane %v3549, 1
      %v3661 = vsel %vm1130, %v3658, %v3659
      %v3662 = vsel %vm1130, %v3652, %v3640
      %v3664 = vrot.slane %v3661, 5
      %3665 = vrot.lane.b32.xlu0 %v3664, 32
      %v3666 = vpop.permute.xlu0 %3665
      %v3667 = vsel %vm451, %v3666, 0
      %3669 = vmatprep.subr.mxu0 0.0
      %3670 = vmatpush1.msra.mxu0 %v2454
      %3671 = vmatprep.subr.mxu0 0.0
      %3672 = vmatpush1.msra.mxu0 %v2455
      %3673 = vmatprep.subr.mxu0 0.0
      %3674 = vmatpush1.msra.mxu0 %v2456
      %3675 = vmatprep.subr.mxu0 0.0
      %3676 = vmatpush1.msra.mxu0 %v2457
      %3677 = vmatprep.subr.mxu0 0.0
      %3678 = vmatpush1.msra.mxu0 0.0
      %3679 = vmatprep.subr.mxu0 0.0
      %3680 = vmatpush1.msra.mxu0 0.0
      %3681 = vmatprep.subr.mxu0 0.0
      %3682 = vmatpush1.msra.mxu0 0.0
      %3683 = vmatprep.subr.mxu0 0.0
      %3684 = vmatpush1.msra.mxu0 0.0
      %3685 = vmatprep.subr.mxu0 0.0
      %3686 = vmatpush1.msra.mxu0 0.0
      %3687 = vmatprep.subr.mxu0 0.0
      %3688 = vmatpush1.msra.mxu0 0.0
      %3689 = vmatprep.subr.mxu0 0.0
      %3690 = vmatpush1.msra.mxu0 0.0
      %3691 = vmatprep.subr.mxu0 0.0
      %3692 = vmatpush1.msra.mxu0 0.0
      %3693 = vmatprep.subr.mxu0 0.0
      %3694 = vmatpush1.msra.mxu0 0.0
      %3695 = vmatprep.subr.mxu0 0.0
      %3696 = vmatpush1.msra.mxu0 0.0
      %3697 = vmatprep.subr.mxu0 0.0
      %3698 = vmatpush1.msra.mxu0 0.0
      %3699 = vmatprep.subr.mxu0 0.0
      %3700 = vmatpush1.msra.mxu0 0.0
      %3701 = vmatprep.subr.mxu0 0.0
      %3702 = vmatpush1.msra.mxu0 0.0
      %3703 = vmatprep.subr.mxu0 0.0
      %3704 = vmatpush1.msra.mxu0 0.0
      %3705 = vmatprep.subr.mxu0 0.0
      %3706 = vmatpush1.msra.mxu0 0.0
      %3707 = vmatprep.subr.mxu0 0.0
      %3708 = vmatpush1.msra.mxu0 0.0
      %3709 = vmatprep.subr.mxu0 0.0
      %3710 = vmatpush1.msra.mxu0 0.0
      %3711 = vmatprep.subr.mxu0 0.0
      %3712 = vmatpush1.msra.mxu0 0.0
      %3713 = vmatprep.subr.mxu0 0.0
      %3714 = vmatpush1.msra.mxu0 0.0
      %3715 = vmatprep.subr.mxu0 0.0
      %3716 = vmatpush1.msra.mxu0 0.0
      %3717 = vmatprep.subr.mxu0 0.0
      %3718 = vmatpush1.msra.mxu0 0.0
      %3719 = vmatprep.subr.mxu0 0.0
      %3720 = vmatpush1.msra.mxu0 0.0
      %3721 = vmatprep.subr.mxu0 0.0
      %3722 = vmatpush1.msra.mxu0 0.0
      %3723 = vmatprep.subr.mxu0 0.0
      %3724 = vmatpush1.msra.mxu0 0.0
      %3725 = vmatprep.subr.mxu0 0.0
      %3726 = vmatpush1.msra.mxu0 0.0
      %3727 = vmatprep.subr.mxu0 0.0
      %3728 = vmatpush1.msra.mxu0 0.0
      %3729 = vmatprep.subr.mxu0 0.0
      %3730 = vmatpush1.msra.mxu0 0.0
      %3731 = vmatprep.subr.mxu0 0.0
      %3732 = vmatpush1.msra.mxu0 0.0
      %3733 = vmatprep.mubr.f32.mxu0 0.0
      %3734 = vmatmul.mubr.f32.gmra.mrb[0].mxu0 %v3667
      %v3735 = vpop.f32.mrb[0].mxu0
      %v3736 = vadd.f32 0.0, %v3735
      %v3737 = vpop.f32.mrb[0].mxu0
      %3738 = vdwg.mxu0
      %v3740 = vrot.slane %v3736, 4
      %v3742 = vadd.f32 %v2447, %v3740
      %v3743 = vxor.u32 %v3742, 2147483648
      %v3744 = vmul.f32 %v3743, 1.442695
      %v3745 = vpow.pop %v3744
      %v3746 = vadd.f32 %v3745, 1.0
      %v3747 = vrcp.pop %v3746
      %v3748 = vmul.f32 1.0, %v3747
      %v3749 = vtanh.pop %v3742
      %v3750 = vsel %vm200, %v3749, %v3748
      %v3752 = vrot.slane %v3662, 1
      %v3754 = vmul.f32 %v3750, %v3752
      %3756 = vrot.lane.b32.xlu0 %v3750, 64
      %v3757 = vpop.permute.xlu0 %3756
      %v3759 = vmul.f32 %v3750, %v3757
      %3761 = vrot.lane.b32.xlu0 %v3759, 32
      %v3762 = vpop.permute.xlu0 %3761
      %v3764 = vadd.f32 %v3754, %v3762
      %v3765 = vtanh.pop %v3764
      %3767 = vrot.lane.b32.xlu0 %v3765, 64
      %v3768 = vpop.permute.xlu0 %3767
      %v3770 = vmul.f32 %v3750, %v3768
      %v3771 = vrot.slane %v3661, 1
      %v3773 = vsel %vm1014, %v3770, %v3771
      %v3774 = vsel %vm1014, %v3764, %v3752
      %v3776 = vrot.slane %v3773, 4
      %3777 = vrot.lane.b32.xlu0 %v3776, 32
      %v3778 = vpop.permute.xlu0 %3777
      %v3779 = vsel %vm451, %v3778, 0
      %3781 = vmatprep.subr.mxu0 0.0
      %3782 = vmatpush1.msra.mxu0 %v2454
      %3783 = vmatprep.subr.mxu0 0.0
      %3784 = vmatpush1.msra.mxu0 %v2455
      %3785 = vmatprep.subr.mxu0 0.0
      %3786 = vmatpush1.msra.mxu0 %v2456
      %3787 = vmatprep.subr.mxu0 0.0
      %3788 = vmatpush1.msra.mxu0 %v2457
      %3789 = vmatprep.subr.mxu0 0.0
      %3790 = vmatpush1.msra.mxu0 0.0
      %3791 = vmatprep.subr.mxu0 0.0
      %3792 = vmatpush1.msra.mxu0 0.0
      %3793 = vmatprep.subr.mxu0 0.0
      %3794 = vmatpush1.msra.mxu0 0.0
      %3795 = vmatprep.subr.mxu0 0.0
      %3796 = vmatpush1.msra.mxu0 0.0
      %3797 = vmatprep.subr.mxu0 0.0
      %3798 = vmatpush1.msra.mxu0 0.0
      %3799 = vmatprep.subr.mxu0 0.0
      %3800 = vmatpush1.msra.mxu0 0.0
      %3801 = vmatprep.subr.mxu0 0.0
      %3802 = vmatpush1.msra.mxu0 0.0
      %3803 = vmatprep.subr.mxu0 0.0
      %3804 = vmatpush1.msra.mxu0 0.0
      %3805 = vmatprep.subr.mxu0 0.0
      %3806 = vmatpush1.msra.mxu0 0.0
      %3807 = vmatprep.subr.mxu0 0.0
      %3808 = vmatpush1.msra.mxu0 0.0
      %3809 = vmatprep.subr.mxu0 0.0
      %3810 = vmatpush1.msra.mxu0 0.0
      %3811 = vmatprep.subr.mxu0 0.0
      %3812 = vmatpush1.msra.mxu0 0.0
      %3813 = vmatprep.subr.mxu0 0.0
      %3814 = vmatpush1.msra.mxu0 0.0
      %3815 = vmatprep.subr.mxu0 0.0
      %3816 = vmatpush1.msra.mxu0 0.0
      %3817 = vmatprep.subr.mxu0 0.0
      %3818 = vmatpush1.msra.mxu0 0.0
      %3819 = vmatprep.subr.mxu0 0.0
      %3820 = vmatpush1.msra.mxu0 0.0
      %3821 = vmatprep.subr.mxu0 0.0
      %3822 = vmatpush1.msra.mxu0 0.0
      %3823 = vmatprep.subr.mxu0 0.0
      %3824 = vmatpush1.msra.mxu0 0.0
      %3825 = vmatprep.subr.mxu0 0.0
      %3826 = vmatpush1.msra.mxu0 0.0
      %3827 = vmatprep.subr.mxu0 0.0
      %3828 = vmatpush1.msra.mxu0 0.0
      %3829 = vmatprep.subr.mxu0 0.0
      %3830 = vmatpush1.msra.mxu0 0.0
      %3831 = vmatprep.subr.mxu0 0.0
      %3832 = vmatpush1.msra.mxu0 0.0
      %3833 = vmatprep.subr.mxu0 0.0
      %3834 = vmatpush1.msra.mxu0 0.0
      %3835 = vmatprep.subr.mxu0 0.0
      %3836 = vmatpush1.msra.mxu0 0.0
      %3837 = vmatprep.subr.mxu0 0.0
      %3838 = vmatpush1.msra.mxu0 0.0
      %3839 = vmatprep.subr.mxu0 0.0
      %3840 = vmatpush1.msra.mxu0 0.0
      %3841 = vmatprep.subr.mxu0 0.0
      %3842 = vmatpush1.msra.mxu0 0.0
      %3843 = vmatprep.subr.mxu0 0.0
      %3844 = vmatpush1.msra.mxu0 0.0
      %3845 = vmatprep.mubr.f32.mxu0 0.0
      %3846 = vmatmul.mubr.f32.gmra.mrb[0].mxu0 %v3779
      %v3847 = vpop.f32.mrb[0].mxu0
      %v3848 = vadd.f32 0.0, %v3847
      %v3849 = vpop.f32.mrb[0].mxu0
      %3850 = vdwg.mxu0
      %v3852 = vrot.slane %v3848, 5
      %v3854 = vadd.f32 %v2447, %v3852
      %v3855 = vxor.u32 %v3854, 2147483648
      %v3856 = vmul.f32 %v3855, 1.442695
      %v3857 = vpow.pop %v3856
      %v3858 = vadd.f32 %v3857, 1.0
      %v3859 = vrcp.pop %v3858
      %v3860 = vmul.f32 1.0, %v3859
      %v3861 = vtanh.pop %v3854
      %v3862 = vsel %vm200, %v3861, %v3860
      %v3864 = vrot.slane %v3774, 1
      %v3866 = vmul.f32 %v3862, %v3864
      %3868 = vrot.lane.b32.xlu0 %v3862, 64
      %v3869 = vpop.permute.xlu0 %3868
      %v3871 = vmul.f32 %v3862, %v3869
      %3873 = vrot.lane.b32.xlu0 %v3871, 32
      %v3874 = vpop.permute.xlu0 %3873
      %v3876 = vadd.f32 %v3866, %v3874
      %v3877 = vtanh.pop %v3876
      %3879 = vrot.lane.b32.xlu0 %v3877, 64
      %v3880 = vpop.permute.xlu0 %3879
      %v3882 = vmul.f32 %v3862, %v3880
      %v3883 = vrot.slane %v3773, 1
      %v3885 = vsel %vm898, %v3882, %v3883
      %v3886 = vsel %vm898, %v3876, %v3864
      %v3888 = vrot.slane %v3885, 3
      %3889 = vrot.lane.b32.xlu0 %v3888, 32
      %v3890 = vpop.permute.xlu0 %3889
      %v3891 = vsel %vm451, %v3890, 0
      %3893 = vmatprep.subr.mxu0 0.0
      %3894 = vmatpush1.msra.mxu0 %v2454
      %3895 = vmatprep.subr.mxu0 0.0
      %3896 = vmatpush1.msra.mxu0 %v2455
      %3897 = vmatprep.subr.mxu0 0.0
      %3898 = vmatpush1.msra.mxu0 %v2456
      %3899 = vmatprep.subr.mxu0 0.0
      %3900 = vmatpush1.msra.mxu0 %v2457
      %3901 = vmatprep.subr.mxu0 0.0
      %3902 = vmatpush1.msra.mxu0 0.0
      %3903 = vmatprep.subr.mxu0 0.0
      %3904 = vmatpush1.msra.mxu0 0.0
      %3905 = vmatprep.subr.mxu0 0.0
      %3906 = vmatpush1.msra.mxu0 0.0
      %3907 = vmatprep.subr.mxu0 0.0
      %3908 = vmatpush1.msra.mxu0 0.0
      %3909 = vmatprep.subr.mxu0 0.0
      %3910 = vmatpush1.msra.mxu0 0.0
      %3911 = vmatprep.subr.mxu0 0.0
      %3912 = vmatpush1.msra.mxu0 0.0
      %3913 = vmatprep.subr.mxu0 0.0
      %3914 = vmatpush1.msra.mxu0 0.0
      %3915 = vmatprep.subr.mxu0 0.0
      %3916 = vmatpush1.msra.mxu0 0.0
      %3917 = vmatprep.subr.mxu0 0.0
      %3918 = vmatpush1.msra.mxu0 0.0
      %3919 = vmatprep.subr.mxu0 0.0
      %3920 = vmatpush1.msra.mxu0 0.0
      %3921 = vmatprep.subr.mxu0 0.0
      %3922 = vmatpush1.msra.mxu0 0.0
      %3923 = vmatprep.subr.mxu0 0.0
      %3924 = vmatpush1.msra.mxu0 0.0
      %3925 = vmatprep.subr.mxu0 0.0
      %3926 = vmatpush1.msra.mxu0 0.0
      %3927 = vmatprep.subr.mxu0 0.0
      %3928 = vmatpush1.msra.mxu0 0.0
      %3929 = vmatprep.subr.mxu0 0.0
      %3930 = vmatpush1.msra.mxu0 0.0
      %3931 = vmatprep.subr.mxu0 0.0
      %3932 = vmatpush1.msra.mxu0 0.0
      %3933 = vmatprep.subr.mxu0 0.0
      %3934 = vmatpush1.msra.mxu0 0.0
      %3935 = vmatprep.subr.mxu0 0.0
      %3936 = vmatpush1.msra.mxu0 0.0
      %3937 = vmatprep.subr.mxu0 0.0
      %3938 = vmatpush1.msra.mxu0 0.0
      %3939 = vmatprep.subr.mxu0 0.0
      %3940 = vmatpush1.msra.mxu0 0.0
      %3941 = vmatprep.subr.mxu0 0.0
      %3942 = vmatpush1.msra.mxu0 0.0
      %3943 = vmatprep.subr.mxu0 0.0
      %3944 = vmatpush1.msra.mxu0 0.0
      %3945 = vmatprep.subr.mxu0 0.0
      %3946 = vmatpush1.msra.mxu0 0.0
      %3947 = vmatprep.subr.mxu0 0.0
      %3948 = vmatpush1.msra.mxu0 0.0
      %3949 = vmatprep.subr.mxu0 0.0
      %3950 = vmatpush1.msra.mxu0 0.0
      %3951 = vmatprep.subr.mxu0 0.0
      %3952 = vmatpush1.msra.mxu0 0.0
      %3953 = vmatprep.subr.mxu0 0.0
      %3954 = vmatpush1.msra.mxu0 0.0
      %3955 = vmatprep.subr.mxu0 0.0
      %3956 = vmatpush1.msra.mxu0 0.0
      %3957 = vmatprep.mubr.f32.mxu0 0.0
      %3958 = vmatmul.mubr.f32.gmra.mrb[0].mxu0 %v3891
      %v3959 = vpop.f32.mrb[0].mxu0
      %v3960 = vadd.f32 0.0, %v3959
      %v3961 = vpop.f32.mrb[0].mxu0
      %3962 = vdwg.mxu0
      %v3964 = vrot.slane %v3960, 6
      %v3966 = vadd.f32 %v2447, %v3964
      %v3967 = vxor.u32 %v3966, 2147483648
      %v3968 = vmul.f32 %v3967, 1.442695
      %v3969 = vpow.pop %v3968
      %v3970 = vadd.f32 %v3969, 1.0
      %v3971 = vrcp.pop %v3970
      %v3972 = vmul.f32 1.0, %v3971
      %v3973 = vtanh.pop %v3966
      %v3974 = vsel %vm200, %v3973, %v3972
      %v3976 = vrot.slane %v3886, 1
      %v3978 = vmul.f32 %v3974, %v3976
      %3980 = vrot.lane.b32.xlu0 %v3974, 64
      %v3981 = vpop.permute.xlu0 %3980
      %v3983 = vmul.f32 %v3974, %v3981
      %3985 = vrot.lane.b32.xlu0 %v3983, 32
      %v3986 = vpop.permute.xlu0 %3985
      %v3988 = vadd.f32 %v3978, %v3986
      %v3989 = vtanh.pop %v3988
      %3991 = vrot.lane.b32.xlu0 %v3989, 64
      %v3992 = vpop.permute.xlu0 %3991
      %v3994 = vmul.f32 %v3974, %v3992
      %v3995 = vrot.slane %v3885, 1
      %v3997 = vsel %vm782, %v3994, %v3995
      %v3998 = vsel %vm782, %v3988, %v3976
      %v4000 = vrot.slane %v3997, 2
      %4001 = vrot.lane.b32.xlu0 %v4000, 32
      %v4002 = vpop.permute.xlu0 %4001
      %v4003 = vsel %vm451, %v4002, 0
      %4005 = vmatprep.subr.mxu0 0.0
      %4006 = vmatpush1.msra.mxu0 %v2454
      %4007 = vmatprep.subr.mxu0 0.0
      %4008 = vmatpush1.msra.mxu0 %v2455
      %4009 = vmatprep.subr.mxu0 0.0
      %4010 = vmatpush1.msra.mxu0 %v2456
      %4011 = vmatprep.subr.mxu0 0.0
      %4012 = vmatpush1.msra.mxu0 %v2457
      %4013 = vmatprep.subr.mxu0 0.0
      %4014 = vmatpush1.msra.mxu0 0.0
      %4015 = vmatprep.subr.mxu0 0.0
      %4016 = vmatpush1.msra.mxu0 0.0
      %4017 = vmatprep.subr.mxu0 0.0
      %4018 = vmatpush1.msra.mxu0 0.0
      %4019 = vmatprep.subr.mxu0 0.0
      %4020 = vmatpush1.msra.mxu0 0.0
      %4021 = vmatprep.subr.mxu0 0.0
      %4022 = vmatpush1.msra.mxu0 0.0
      %4023 = vmatprep.subr.mxu0 0.0
      %4024 = vmatpush1.msra.mxu0 0.0
      %4025 = vmatprep.subr.mxu0 0.0
      %4026 = vmatpush1.msra.mxu0 0.0
      %4027 = vmatprep.subr.mxu0 0.0
      %4028 = vmatpush1.msra.mxu0 0.0
      %4029 = vmatprep.subr.mxu0 0.0
      %4030 = vmatpush1.msra.mxu0 0.0
      %4031 = vmatprep.subr.mxu0 0.0
      %4032 = vmatpush1.msra.mxu0 0.0
      %4033 = vmatprep.subr.mxu0 0.0
      %4034 = vmatpush1.msra.mxu0 0.0
      %4035 = vmatprep.subr.mxu0 0.0
      %4036 = vmatpush1.msra.mxu0 0.0
      %4037 = vmatprep.subr.mxu0 0.0
      %4038 = vmatpush1.msra.mxu0 0.0
      %4039 = vmatprep.subr.mxu0 0.0
      %4040 = vmatpush1.msra.mxu0 0.0
      %4041 = vmatprep.subr.mxu0 0.0
      %4042 = vmatpush1.msra.mxu0 0.0
      %4043 = vmatprep.subr.mxu0 0.0
      %4044 = vmatpush1.msra.mxu0 0.0
      %4045 = vmatprep.subr.mxu0 0.0
      %4046 = vmatpush1.msra.mxu0 0.0
      %4047 = vmatprep.subr.mxu0 0.0
      %4048 = vmatpush1.msra.mxu0 0.0
      %4049 = vmatprep.subr.mxu0 0.0
      %4050 = vmatpush1.msra.mxu0 0.0
      %4051 = vmatprep.subr.mxu0 0.0
      %4052 = vmatpush1.msra.mxu0 0.0
      %4053 = vmatprep.subr.mxu0 0.0
      %4054 = vmatpush1.msra.mxu0 0.0
      %4055 = vmatprep.subr.mxu0 0.0
      %4056 = vmatpush1.msra.mxu0 0.0
      %4057 = vmatprep.subr.mxu0 0.0
      %4058 = vmatpush1.msra.mxu0 0.0
      %4059 = vmatprep.subr.mxu0 0.0
      %4060 = vmatpush1.msra.mxu0 0.0
      %4061 = vmatprep.subr.mxu0 0.0
      %4062 = vmatpush1.msra.mxu0 0.0
      %4063 = vmatprep.subr.mxu0 0.0
      %4064 = vmatpush1.msra.mxu0 0.0
      %4065 = vmatprep.subr.mxu0 0.0
      %4066 = vmatpush1.msra.mxu0 0.0
      %4067 = vmatprep.subr.mxu0 0.0
      %4068 = vmatpush1.msra.mxu0 0.0
      %4069 = vmatprep.mubr.f32.mxu0 0.0
      %4070 = vmatmul.mubr.f32.gmra.mrb[0].mxu0 %v4003
      %v4071 = vpop.f32.mrb[0].mxu0
      %v4072 = vadd.f32 0.0, %v4071
      %v4073 = vpop.f32.mrb[0].mxu0
      %4074 = vdwg.mxu0
      %v4076 = vrot.slane %v4072, 7
      %v4078 = vadd.f32 %v2447, %v4076
      %v4079 = vxor.u32 %v4078, 2147483648
      %v4080 = vmul.f32 %v4079, 1.442695
      %v4081 = vpow.pop %v4080
      %v4082 = vadd.f32 %v4081, 1.0
      %v4083 = vrcp.pop %v4082
      %v4084 = vmul.f32 1.0, %v4083
      %v4085 = vtanh.pop %v4078
      %v4086 = vsel %vm200, %v4085, %v4084
      %v4088 = vrot.slane %v3998, 1
      %v4090 = vmul.f32 %v4086, %v4088
      %4092 = vrot.lane.b32.xlu0 %v4086, 64
      %v4093 = vpop.permute.xlu0 %4092
      %v4095 = vmul.f32 %v4086, %v4093
      %4097 = vrot.lane.b32.xlu0 %v4095, 32
      %v4098 = vpop.permute.xlu0 %4097
      %v4100 = vadd.f32 %v4090, %v4098
      %v4101 = vtanh.pop %v4100
      %4103 = vrot.lane.b32.xlu0 %v4101, 64
      %v4104 = vpop.permute.xlu0 %4103
      %v4106 = vmul.f32 %v4086, %v4104
      %v4107 = vrot.slane %v3997, 1
      %v4109 = vsel %vm666, %v4106, %v4107
      %v4110 = vsel %vm666, %v4100, %v4088
      %v4112 = vrot.slane %v4109, 1
      %4113 = vrot.lane.b32.xlu0 %v4112, 32
      %v4114 = vpop.permute.xlu0 %4113
      %v4115 = vsel %vm451, %v4114, 0
      %4117 = vmatprep.subr.mxu0 0.0
      %4118 = vmatpush1.msra.mxu0 %v2454
      %4119 = vmatprep.subr.mxu0 0.0
      %4120 = vmatpush1.msra.mxu0 %v2455
      %4121 = vmatprep.subr.mxu0 0.0
      %4122 = vmatpush1.msra.mxu0 %v2456
      %4123 = vmatprep.subr.mxu0 0.0
      %4124 = vmatpush1.msra.mxu0 %v2457
      %4125 = vmatprep.subr.mxu0 0.0
      %4126 = vmatpush1.msra.mxu0 0.0
      %4127 = vmatprep.subr.mxu0 0.0
      %4128 = vmatpush1.msra.mxu0 0.0
      %4129 = vmatprep.subr.mxu0 0.0
      %4130 = vmatpush1.msra.mxu0 0.0
      %4131 = vmatprep.subr.mxu0 0.0
      %4132 = vmatpush1.msra.mxu0 0.0
      %4133 = vmatprep.subr.mxu0 0.0
      %4134 = vmatpush1.msra.mxu0 0.0
      %4135 = vmatprep.subr.mxu0 0.0
      %4136 = vmatpush1.msra.mxu0 0.0
      %4137 = vmatprep.subr.mxu0 0.0
      %4138 = vmatpush1.msra.mxu0 0.0
      %4139 = vmatprep.subr.mxu0 0.0
      %4140 = vmatpush1.msra.mxu0 0.0
      %4141 = vmatprep.subr.mxu0 0.0
      %4142 = vmatpush1.msra.mxu0 0.0
      %4143 = vmatprep.subr.mxu0 0.0
      %4144 = vmatpush1.msra.mxu0 0.0
      %4145 = vmatprep.subr.mxu0 0.0
      %4146 = vmatpush1.msra.mxu0 0.0
      %4147 = vmatprep.subr.mxu0 0.0
      %4148 = vmatpush1.msra.mxu0 0.0
      %4149 = vmatprep.subr.mxu0 0.0
      %4150 = vmatpush1.msra.mxu0 0.0
      %4151 = vmatprep.subr.mxu0 0.0
      %4152 = vmatpush1.msra.mxu0 0.0
      %4153 = vmatprep.subr.mxu0 0.0
      %4154 = vmatpush1.msra.mxu0 0.0
      %4155 = vmatprep.subr.mxu0 0.0
      %4156 = vmatpush1.msra.mxu0 0.0
      %4157 = vmatprep.subr.mxu0 0.0
      %4158 = vmatpush1.msra.mxu0 0.0
      %4159 = vmatprep.subr.mxu0 0.0
      %4160 = vmatpush1.msra.mxu0 0.0
      %4161 = vmatprep.subr.mxu0 0.0
      %4162 = vmatpush1.msra.mxu0 0.0
      %4163 = vmatprep.subr.mxu0 0.0
      %4164 = vmatpush1.msra.mxu0 0.0
      %4165 = vmatprep.subr.mxu0 0.0
      %4166 = vmatpush1.msra.mxu0 0.0
      %4167 = vmatprep.subr.mxu0 0.0
      %4168 = vmatpush1.msra.mxu0 0.0
      %4169 = vmatprep.subr.mxu0 0.0
      %4170 = vmatpush1.msra.mxu0 0.0
      %4171 = vmatprep.subr.mxu0 0.0
      %4172 = vmatpush1.msra.mxu0 0.0
      %4173 = vmatprep.subr.mxu0 0.0
      %4174 = vmatpush1.msra.mxu0 0.0
      %4175 = vmatprep.subr.mxu0 0.0
      %4176 = vmatpush1.msra.mxu0 0.0
      %4177 = vmatprep.subr.mxu0 0.0
      %4178 = vmatpush1.msra.mxu0 0.0
      %4179 = vmatprep.subr.mxu0 0.0
      %4180 = vmatpush1.msra.mxu0 0.0
      %4181 = vmatprep.mubr.f32.mxu0 0.0
      %4182 = vmatmul.mubr.f32.gmra.mrb[0].mxu0 %v4115
      %v4183 = vpop.f32.mrb[0].mxu0
      %v4184 = vadd.f32 0.0, %v4183
      %v4185 = vpop.f32.mrb[0].mxu0
      %4186 = vdwg.mxu0
      %v4187 = vadd.f32 %v2447, %v4184
      %v4188 = vxor.u32 %v4187, 2147483648
      %v4189 = vmul.f32 %v4188, 1.442695
      %v4190 = vpow.pop %v4189
      %v4191 = vadd.f32 %v4190, 1.0
      %v4192 = vrcp.pop %v4191
      %v4193 = vmul.f32 1.0, %v4192
      %v4194 = vtanh.pop %v4187
      %v4195 = vsel %vm200, %v4194, %v4193
      %v4197 = vrot.slane %v4110, 1
      %v4199 = vmul.f32 %v4195, %v4197
      %4201 = vrot.lane.b32.xlu0 %v4195, 64
      %v4202 = vpop.permute.xlu0 %4201
      %v4204 = vmul.f32 %v4195, %v4202
      %4206 = vrot.lane.b32.xlu0 %v4204, 32
      %v4207 = vpop.permute.xlu0 %4206
      %v4209 = vadd.f32 %v4199, %v4207
      %v4210 = vtanh.pop %v4209
      %4212 = vrot.lane.b32.xlu0 %v4210, 64
      %v4213 = vpop.permute.xlu0 %4212
      %v4215 = vmul.f32 %v4195, %v4213
      %v4217 = vsel %vm553, %v4215, %v4112
      %4219 = vrot.lane.b32.xlu0 %v3337, 32
      %v4220 = vpop.permute.xlu0 %4219
      %v4223 = vrot.slane %v4217, 1
      %4224 = vrot.lane.b32.xlu0 %v4223, 64
      %v4225 = vpop.permute.xlu0 %4224
      %v4227 = vsel %vm451, %v4220, %v4225
      %v4228 = vld [vmem:[%s17] sm:$0xff]
      %v4229 = vld [vmem:[%s17 + $0x8] sm:$0xff]
      %v4230 = vld [vmem:[%s17 + $0x10] sm:$0xff]
      %v4231 = vld [vmem:[%s17 + $0x18] sm:$0xff]
      %v4232 = vld [vmem:[%s17 + $0x20] sm:$0xff]
      %v4233 = vld [vmem:[%s17 + $0x28] sm:$0xff]
      %v4234 = vld [vmem:[%s17 + $0x30] sm:$0xff]
      %v4235 = vld [vmem:[%s17 + $0x38] sm:$0xff]
      %v4236 = vld [vmem:[%s18] sm:$0x1]
      %v4238 = vrot.slane %v4227, 7
      %v4239 = vsel %vm2291, %v4238, 0
      %4241 = vmatprep.subr.mxu0 0.0
      %4242 = vmatpush1.msra.mxu0 %v4228
      %4243 = vmatprep.subr.mxu0 0.0
      %4244 = vmatpush1.msra.mxu0 %v4229
      %4245 = vmatprep.subr.mxu0 0.0
      %4246 = vmatpush1.msra.mxu0 %v4230
      %4247 = vmatprep.subr.mxu0 0.0
      %4248 = vmatpush1.msra.mxu0 %v4231
      %4249 = vmatprep.subr.mxu0 0.0
      %4250 = vmatpush1.msra.mxu0 %v4232
      %4251 = vmatprep.subr.mxu0 0.0
      %4252 = vmatpush1.msra.mxu0 %v4233
      %4253 = vmatprep.subr.mxu0 0.0
      %4254 = vmatpush1.msra.mxu0 %v4234
      %4255 = vmatprep.subr.mxu0 0.0
      %4256 = vmatpush1.msra.mxu0 %v4235
      %4257 = vmatprep.subr.mxu0 0.0
      %4258 = vmatpush1.msra.mxu0 0.0
      %4259 = vmatprep.subr.mxu0 0.0
      %4260 = vmatpush1.msra.mxu0 0.0
      %4261 = vmatprep.subr.mxu0 0.0
      %4262 = vmatpush1.msra.mxu0 0.0
      %4263 = vmatprep.subr.mxu0 0.0
      %4264 = vmatpush1.msra.mxu0 0.0
      %4265 = vmatprep.subr.mxu0 0.0
      %4266 = vmatpush1.msra.mxu0 0.0
      %4267 = vmatprep.subr.mxu0 0.0
      %4268 = vmatpush1.msra.mxu0 0.0
      %4269 = vmatprep.subr.mxu0 0.0
      %4270 = vmatpush1.msra.mxu0 0.0
      %4271 = vmatprep.subr.mxu0 0.0
      %4272 = vmatpush1.msra.mxu0 0.0
      %4273 = vmatprep.subr.mxu0 0.0
      %4274 = vmatpush1.msra.mxu0 0.0
      %4275 = vmatprep.subr.mxu0 0.0
      %4276 = vmatpush1.msra.mxu0 0.0
      %4277 = vmatprep.subr.mxu0 0.0
      %4278 = vmatpush1.msra.mxu0 0.0
      %4279 = vmatprep.subr.mxu0 0.0
      %4280 = vmatpush1.msra.mxu0 0.0
      %4281 = vmatprep.subr.mxu0 0.0
      %4282 = vmatpush1.msra.mxu0 0.0
      %4283 = vmatprep.subr.mxu0 0.0
      %4284 = vmatpush1.msra.mxu0 0.0
      %4285 = vmatprep.subr.mxu0 0.0
      %4286 = vmatpush1.msra.mxu0 0.0
      %4287 = vmatprep.subr.mxu0 0.0
      %4288 = vmatpush1.msra.mxu0 0.0
      %4289 = vmatprep.subr.mxu0 0.0
      %4290 = vmatpush1.msra.mxu0 0.0
      %4291 = vmatprep.subr.mxu0 0.0
      %4292 = vmatpush1.msra.mxu0 0.0
      %4293 = vmatprep.subr.mxu0 0.0
      %4294 = vmatpush1.msra.mxu0 0.0
      %4295 = vmatprep.subr.mxu0 0.0
      %4296 = vmatpush1.msra.mxu0 0.0
      %4297 = vmatprep.subr.mxu0 0.0
      %4298 = vmatpush1.msra.mxu0 0.0
      %4299 = vmatprep.subr.mxu0 0.0
      %4300 = vmatpush1.msra.mxu0 0.0
      %4301 = vmatprep.subr.mxu0 0.0
      %4302 = vmatpush1.msra.mxu0 0.0
      %4303 = vmatprep.subr.mxu0 0.0
      %4304 = vmatpush1.msra.mxu0 0.0
      %4305 = vmatprep.mubr.f32.mxu0 0.0
      %4306 = vmatmul.mubr.f32.gmra.mrb[0].mxu0 %v4239
      %v4307 = vpop.f32.mrb[0].mxu0
      %v4308 = vadd.f32 %v4236, %v4307
      %v4309 = vpop.f32.mrb[0].mxu0
      %4310 = vdwg.mxu0
      %v4311 = vtanh.pop %v4308
      %s4312 = scalar_lea.vmem %s19, %s203
      %4313 = vst.msk [vmem:[%s4312] sm:$0x1] %vm215, %v4311
    $region126: #{tree_fn.1} parent=1 // loop_footer
      %s205 = sadd.s32 %s203, 1
    $region127: #{tree_fn.1} parent=1 // loop_footer_branch
      %202 = sbr.rel target = $region123
    $region128: #{tree_fn.1} parent=1 // loop_exit
      _
    // Predicated region
    $region129: #{tree_fn.1} parent=1 // pred_check
      _
    $region130: #{tree_fn.1} parent=1 // pred_check_branch
      %4315 = sbr.rel (0) target = $region132
    $region131: #{tree_fn.1} parent=1 // pred_region
      _
    $region132: #{tree_fn.1} parent=1 // pred_fallthru
      _
    // Predicated region
    $region133: #{tree_fn.1} parent=1 // pred_check
      _
    $region134: #{tree_fn.1} parent=1 // pred_check_branch
      %4317 = sbr.rel (0) target = $region136
    $region135: #{tree_fn.1} parent=1 // pred_region
      _
    $region136: #{tree_fn.1} parent=1 // pred_fallthru
      _
    %4318 = vsyncpa [#allocation5], 1
    %4319 = vsyncpa [#allocation12], 1
    %4320 = vsyncpa [#allocation15], 1
    %4321 = vsyncpa [#allocation18], 1
    %4322 = vsyncpa [#allocation21], 1
    %4323 = vsyncpa [#allocation6], 1
    %4324 = vsyncpa [#allocation8], 1

</llo_original>
